<compile_context>
chip_gen: v7x
topology: tpu7x:2x2x1
jax: 0.10.0
libtpu: 0.0.40
codegen_flags: <defaults>
</compile_context>

<pallas_src>
import functools

import jax
import jax.numpy as jnp
from jax import lax
from jax.experimental import pallas as pl
from jax.experimental.pallas import tpu as pltpu


def _cdiv(a, b):
    return -(-a // b)


def _vmem_limit_bytes():
    """~75% of physical VMEM (v5e/v6e: 128 MiB -> 96 MiB, v7x: 64 MiB -> 48 MiB)."""
    try:
        cap = int(pltpu.get_tpu_info().vmem_capacity_bytes)
    except Exception:
        cap = 64 * 1024 * 1024  # conservative fallback
    return (cap * 3) // 4


def _select_row_tiles(d, itemsize, budget):
    """Largest (outer, inner) row tiles whose double-buffered blocks fit `budget`."""
    tn_out, tn_in = 1024, 256
    while 2 * (tn_out + tn_in) * d * itemsize > budget and (tn_out > 8 or tn_in > 8):
        if tn_out > tn_in or tn_in <= 8:
            tn_out = max(tn_out // 2, 8)
        else:
            tn_in = max(tn_in // 2, 8)
    return tn_out, tn_in


def _score_and_mask(xo_ref, xi_ref, n_out, n_in, tn_out, tn_in,
                    mask_out, mask_in):
    """Score tile outer @ inner.T and (optional) validity mask for ragged tiles."""
    # Contract the feature axis of both operands (no explicit transpose).
    # TODO(synk): if pl.lower_as_mlir shows a per-tile vxpose of the (tn_in, d)
    # operand, feed the inner operand pre-transposed (d-major) from the wrapper.
    s = lax.dot_general(
        xo_ref[...], xi_ref[...],
        dimension_numbers=(((1,), (1,)), ((), ())),
        preferred_element_type=jnp.float32)              # (tn_out, tn_in) f32

    valid = None
    if mask_out:
        rows = (pl.program_id(0) * tn_out
                + lax.broadcasted_iota(jnp.int32, (tn_out, 1), 0))
        valid = rows < n_out
    if mask_in:
        cols = (pl.program_id(1) * tn_in
                + lax.broadcasted_iota(jnp.int32, (1, tn_in), 1))
        vc = cols < n_in
        valid = vc if valid is None else (valid & vc)
    return s, valid


def _minmax_kernel(xo_ref, xi_ref, mn_ref, mx_ref, *,
                   n_out, n_in, tn_out, tn_in, mask_out, mask_in):
    j = pl.program_id(1)
    s, valid = _score_and_mask(xo_ref, xi_ref, n_out, n_in, tn_out, tn_in,
                               mask_out, mask_in)

    @pl.when(j == 0)
    def _init():
        mn_ref[...] = jnp.full(mn_ref.shape, jnp.inf, jnp.float32)
        mx_ref[...] = jnp.full(mx_ref.shape, -jnp.inf, jnp.float32)

    s_mn = s if valid is None else jnp.where(valid, s, jnp.inf)
    s_mx = s if valid is None else jnp.where(valid, s, -jnp.inf)
    mn_ref[...] = jnp.minimum(mn_ref[...], jnp.min(s_mn))
    mx_ref[...] = jnp.maximum(mx_ref[...], jnp.max(s_mx))


def _hist_kernel(stats_ref, xo_ref, xi_ref, cnt_ref, *,
                 sep, lanes, n_out, n_in, tn_out, tn_in, mask_out, mask_in):
    j = pl.program_id(1)
    s, valid = _score_and_mask(xo_ref, xi_ref, n_out, n_in, tn_out, tn_in,
                               mask_out, mask_in)

    @pl.when(j == 0)
    def _init():
        cnt_ref[...] = jnp.zeros(cnt_ref.shape, jnp.float32)

    mn = stats_ref[0]      # global min
    inv = stats_ref[1]     # 1 / interval (0 when max == min)
    bias = stats_ref[2]    # sep-1 when max == min, else 0

    # One-pass binning: idx = min(floor((s - min)*inv + bias), sep-1).
    # No lower clamp: valid scores are >= the global min, so the argument is
    # >= 0 exactly; clamping above makes the last bin right-inclusive like the
    # reference.
    # TODO(synk): PyTorch computes bin edges as host floats via .item(); on
    # exact bin boundaries the floor-based f32 index may differ by one bin.
    # Counts accumulate in f32 (exact only up to ~2^24 per bin).
    idx = jnp.floor((s - mn) * inv + bias)
    idx = jnp.minimum(idx, float(sep - 1))
    if valid is not None:
        idx = jnp.where(valid, idx, -1.0)    # padded entries land in no bin

    # Per bin: one compare + one lane (axis=-1) reduction; one cross-sublane
    # reduction at the end yields the lane-padded (1, lanes) tile counts.
    bin_ids = lax.broadcasted_iota(jnp.int32, (1, lanes), 1)
    partial = jnp.zeros((s.shape[0], lanes), jnp.float32)
    for b in range(sep):                     # sep is small & static
        col = jnp.sum((idx == float(b)).astype(jnp.float32),
                      axis=1, keepdims=True)             # (tn_out, 1)
        partial = partial + col * (bin_ids == b).astype(jnp.float32)
    cnt_ref[...] += jnp.sum(partial, axis=0, keepdims=True).reshape(cnt_ref.shape)


def _finalize_kernel(cnt_ref, w_ref, out_ref, *, sep):
    # Sum per-outer-tile partial counts, then sigmoid -> linear -> sigmoid.
    total = jnp.sum(cnt_ref[...], axis=0)                # (1, lanes)
    hist = total[:, :sep]                                # (1, sep)
    beta = jax.nn.sigmoid(hist)
    # Tiny (hidden, sep) projection on the VPU (broadcast + lane reduce).
    prod = w_ref[...].astype(jnp.float32) * beta         # (hidden, sep)
    out = jnp.sum(prod, axis=1, keepdims=True)           # (hidden, 1)
    out_ref[...] = jax.nn.sigmoid(out)


def gate_mechanism_vgae(current_feature, previous_feature, weight):
    """Forward pass of GATE_Mechanism_VGAE.

    weight: (hidden_dim, separate_number), i.e. nn.Linear(sep, hidden, bias=False).weight.
    Returns a (hidden_dim,) array, matching the PyTorch module's 1-D output.
    """
    # Column truncation when shapes differ (mirrors the PyTorch branch).
    if current_feature.shape != previous_feature.shape:
        min_cols = min(current_feature.shape[1], previous_feature.shape[1])
        current_feature = current_feature[:, :min_cols]
        previous_feature = previous_feature[:, :min_cols]

    hidden_dim, sep = weight.shape
    n1, d = current_feature.shape
    n2 = previous_feature.shape[0]
    lanes = 128 * _cdiv(sep, 128)

    vmem_limit = _vmem_limit_bytes()
    itemsize = jnp.dtype(current_feature.dtype).itemsize
    tn_out_max, tn_in_max = _select_row_tiles(d, itemsize, vmem_limit // 2)

    # hist(S) == hist(S.T), so the operands can be swapped freely; put on the
    # outer (resident) axis whichever assignment minimizes HBM traffic
    # (outer streamed once, inner streamed once per outer tile).
    def traffic(n_o, n_i):
        return n_o + _cdiv(n_o, tn_out_max) * n_i

    if traffic(n2, n1) < traffic(n1, n2):
        xo, xi, n_o, n_i = previous_feature, current_feature, n2, n1
    else:
        xo, xi, n_o, n_i = current_feature, previous_feature, n1, n2

    tn_o = n_o if n_o <= tn_out_max else tn_out_max
    tn_i = n_i if n_i <= tn_in_max else tn_in_max
    gt_o, gt_i = _cdiv(n_o, tn_o), _cdiv(n_i, tn_i)
    mask_o = (n_o % tn_o) != 0
    mask_i = (n_i % tn_i) != 0

    common = dict(n_out=n_o, n_in=n_i, tn_out=tn_o, tn_in=tn_i,
                  mask_out=mask_o, mask_in=mask_i)
    cparams = pltpu.CompilerParams(
        dimension_semantics=("parallel", "arbitrary"),
        vmem_limit_bytes=vmem_limit)
    in_specs = [pl.BlockSpec((tn_o, d), lambda i, j: (i, 0)),
                pl.BlockSpec((tn_i, d), lambda i, j: (j, 0))]

    # --- call 1: per-outer-tile partial min / max ---------------------------
    mn_p, mx_p = pl.pallas_call(
        functools.partial(_minmax_kernel, **common),
        out_shape=(jax.ShapeDtypeStruct((gt_o, 1, 128), jnp.float32),
                   jax.ShapeDtypeStruct((gt_o, 1, 128), jnp.float32)),
        grid=(gt_o, gt_i),
        in_specs=in_specs,
        out_specs=(pl.BlockSpec((1, 1, 128), lambda i, j: (i, 0, 0)),
                   pl.BlockSpec((1, 1, 128), lambda i, j: (i, 0, 0))),
        compiler_params=cparams,
    )(xo, xi)

    gmin = jnp.min(mn_p)
    gmax = jnp.max(mx_p)
    interval = (gmax - gmin) / sep
    pos = interval > 0.0
    inv = jnp.where(pos, 1.0 / jnp.where(pos, interval, 1.0), 0.0)
    bias = jnp.where(pos, 0.0, float(sep - 1))   # max == min -> everything in last bin
    stats = jnp.stack([gmin, inv, bias]).astype(jnp.float32)   # (3,) -> SMEM

    # --- call 2: per-outer-tile partial histogram ---------------------------
    counts = pl.pallas_call(
        functools.partial(_hist_kernel, sep=sep, lanes=lanes, **common),
        out_shape=jax.ShapeDtypeStruct((gt_o, 1, lanes), jnp.float32),
        grid=(gt_o, gt_i),
        in_specs=[pl.BlockSpec(memory_space=pltpu.MemorySpace.SMEM)] + in_specs,
        out_specs=pl.BlockSpec((1, 1, lanes), lambda i, j: (i, 0, 0)),
        compiler_params=cparams,
    )(stats, xo, xi)

    # --- call 3: reduce partials, sigmoid -> linear -> sigmoid --------------
    out = pl.pallas_call(
        functools.partial(_finalize_kernel, sep=sep),
        out_shape=jax.ShapeDtypeStruct((hidden_dim, 1), jnp.float32),
        grid=(1,),
        in_specs=[pl.BlockSpec((gt_o, 1, lanes), lambda i: (0, 0, 0)),
                  pl.BlockSpec((hidden_dim, sep), lambda i: (0, 0))],
        out_specs=pl.BlockSpec((hidden_dim, 1), lambda i: (0, 0)),
    )(counts, weight)
    return out[:, 0]   # (hidden_dim,), matching PyTorch's 1-D output


if __name__ == "__main__":
    separate_number = 8
    hidden_dim = 1
    n_cur, n_prev, feat = 1100, 1300, 32   # small, but exercises ragged edge tiles

    key = jax.random.PRNGKey(0)
    k1, k2, k3 = jax.random.split(key, 3)
    current_feature = jax.random.normal(k1, (n_cur, feat), dtype=jnp.float32)
    previous_feature = jax.random.normal(k2, (n_prev, feat), dtype=jnp.float32)

    # Deterministic Linear weight init (matches nn.Linear's uniform bound).
    bound = 1.0 / (separate_number ** 0.5)
    weight = jax.random.uniform(
        k3, (hidden_dim, separate_number), dtype=jnp.float32,
        minval=-bound, maxval=bound)

    beta = gate_mechanism_vgae(current_feature, previous_feature, weight)
    jax.block_until_ready(beta)
    print("KERNEL_OK")
</pallas_src>

<mosaic_0001>
module attributes {stable_mosaic.version = 11 : i64} {
  func.func @_minmax_kernel(%arg0: i32, %arg1: i32, %arg2: memref<1024x32xf32, #tpu.memory_space<vmem>>, %arg3: memref<256x32xf32, #tpu.memory_space<vmem>>, %arg4: memref<1x1x128xf32, #tpu.memory_space<vmem>>, %arg5: memref<1x1x128xf32, #tpu.memory_space<vmem>>) attributes {dimension_semantics = [#tpu.dimension_semantics<parallel>, #tpu.dimension_semantics<arbitrary>], iteration_bounds = array<i64: 2, 5>, scalar_prefetch = 0 : i64, scratch_operands = 0 : i64, tpu.core_type = #tpu.core_type<tc>, window_params = [{transform_indices = @transform_0, window_bounds = array<i64: 1024, 32>}, {transform_indices = @transform_1, window_bounds = array<i64: 256, 32>}, {transform_indices = @transform_2, window_bounds = array<i64: 1, 1, 128>}, {transform_indices = @transform_3, window_bounds = array<i64: 1, 1, 128>}]} {
    %c0 = arith.constant 0 : index
    %c0_0 = arith.constant 0 : index
    %0 = vector.load %arg2[%c0, %c0_0] : memref<1024x32xf32, #tpu.memory_space<vmem>>, vector<1024x32xf32>
    %c0_1 = arith.constant 0 : index
    %c0_2 = arith.constant 0 : index
    %1 = vector.load %arg3[%c0_1, %c0_2] : memref<256x32xf32, #tpu.memory_space<vmem>>, vector<256x32xf32>
    %cst = arith.constant dense<0.000000e+00> : vector<1024x256xf32>
    %2 = tpu.matmul %0, %1, %cst {dimension_numbers = #tpu.dot_dimension_numbers<[1], [1], [0], [0], [0, 0, 1, 0], [], []>} : vector<1024x32xf32>, vector<256x32xf32>, vector<1024x256xf32> -> vector<1024x256xf32>
    %c1024_i32 = arith.constant 1024 : i32
    %3 = arith.muli %arg0, %c1024_i32 : i32
    %4 = tpu.iota {dimensions = array<i32: 0>} : vector<1024x1xi32>
    %5 = vector.broadcast %3 : i32 to vector<1024x1xi32>
    %6 = arith.addi %5, %4 : vector<1024x1xi32>
    %c1300_i32 = arith.constant 1300 : i32
    %7 = vector.broadcast %c1300_i32 : i32 to vector<1024x1xi32>
    %8 = arith.cmpi slt, %6, %7 : vector<1024x1xi32>
    %c256_i32 = arith.constant 256 : i32
    %9 = arith.muli %arg1, %c256_i32 : i32
    %10 = tpu.iota {dimensions = array<i32: 1>} : vector<1x256xi32>
    %11 = vector.broadcast %9 : i32 to vector<1x256xi32>
    %12 = arith.addi %11, %10 : vector<1x256xi32>
    %c1100_i32 = arith.constant 1100 : i32
    %13 = vector.broadcast %c1100_i32 : i32 to vector<1x256xi32>
    %14 = arith.cmpi slt, %12, %13 : vector<1x256xi32>
    %15 = vector.broadcast %8 : vector<1024x1xi1> to vector<1024x256xi1>
    %16 = vector.broadcast %14 : vector<1x256xi1> to vector<1024x256xi1>
    %17 = arith.andi %15, %16 : vector<1024x256xi1>
    %c0_i32 = arith.constant 0 : i32
    %18 = arith.cmpi eq, %arg1, %c0_i32 : i32
    %19 = arith.extui %18 : i1 to i32
    %c0_i32_3 = arith.constant 0 : i32
    %20 = arith.cmpi ne, %19, %c0_i32_3 : i32
    scf.if %20 {
      %cst_20 = arith.constant 0x7F800000 : f32
      %41 = vector.broadcast %cst_20 : f32 to vector<1x1x128xf32>
      %c0_21 = arith.constant 0 : index
      %c0_22 = arith.constant 0 : index
      %c0_23 = arith.constant 0 : index
      %42 = vector.load %arg4[%c0_21, %c0_22, %c0_23] : memref<1x1x128xf32, #tpu.memory_space<vmem>>, vector<1x1x128xf32>
      tpu.vector_store %arg4[%c0_21, %c0_22, %c0_23], %41 {strides = array<i32>} : memref<1x1x128xf32, #tpu.memory_space<vmem>>, vector<1x1x128xf32>,
      %cst_24 = arith.constant 0xFF800000 : f32
      %43 = vector.broadcast %cst_24 : f32 to vector<1x1x128xf32>
      %c0_25 = arith.constant 0 : index
      %c0_26 = arith.constant 0 : index
      %c0_27 = arith.constant 0 : index
      %44 = vector.load %arg5[%c0_25, %c0_26, %c0_27] : memref<1x1x128xf32, #tpu.memory_space<vmem>>, vector<1x1x128xf32>
      tpu.vector_store %arg5[%c0_25, %c0_26, %c0_27], %43 {strides = array<i32>} : memref<1x1x128xf32, #tpu.memory_space<vmem>>, vector<1x1x128xf32>,
    } else {
    }
    %cst_4 = arith.constant 0x7F800000 : f32
    %21 = vector.broadcast %cst_4 : f32 to vector<1024x256xf32>
    %22 = arith.select %17, %2, %21 : vector<1024x256xi1>, vector<1024x256xf32>
    %cst_5 = arith.constant 0xFF800000 : f32
    %23 = vector.broadcast %cst_5 : f32 to vector<1024x256xf32>
    %24 = arith.select %17, %2, %23 : vector<1024x256xi1>, vector<1024x256xf32>
    %c0_6 = arith.constant 0 : index
    %c0_7 = arith.constant 0 : index
    %c0_8 = arith.constant 0 : index
    %25 = vector.load %arg4[%c0_6, %c0_7, %c0_8] : memref<1x1x128xf32, #tpu.memory_space<vmem>>, vector<1x1x128xf32>
    %26 = vector.shape_cast %22 : vector<1024x256xf32> to vector<1x1024x256xf32>
    %cst_9 = arith.constant dense<0x7F800000> : vector<1xf32>
    %27 = vector.multi_reduction <minimumf>, %26, %cst_9 [1, 2] : vector<1x1024x256xf32> to vector<1xf32>
    %28 = vector.shape_cast %27 : vector<1xf32> to vector<1x1x1xf32>
    %29 = vector.extract %28[0, 0, 0] : f32 from vector<1x1x1xf32>
    %30 = vector.broadcast %29 : f32 to vector<1x1x128xf32>
    %31 = arith.minimumf %25, %30 : vector<1x1x128xf32>
    %c0_10 = arith.constant 0 : index
    %c0_11 = arith.constant 0 : index
    %c0_12 = arith.constant 0 : index
    %32 = vector.load %arg4[%c0_10, %c0_11, %c0_12] : memref<1x1x128xf32, #tpu.memory_space<vmem>>, vector<1x1x128xf32>
    tpu.vector_store %arg4[%c0_10, %c0_11, %c0_12], %31 {strides = array<i32>} : memref<1x1x128xf32, #tpu.memory_space<vmem>>, vector<1x1x128xf32>,
    %c0_13 = arith.constant 0 : index
    %c0_14 = arith.constant 0 : index
    %c0_15 = arith.constant 0 : index
    %33 = vector.load %arg5[%c0_13, %c0_14, %c0_15] : memref<1x1x128xf32, #tpu.memory_space<vmem>>, vector<1x1x128xf32>
    %34 = vector.shape_cast %24 : vector<1024x256xf32> to vector<1x1024x256xf32>
    %cst_16 = arith.constant dense<0xFF800000> : vector<1xf32>
    %35 = vector.multi_reduction <maximumf>, %34, %cst_16 [1, 2] : vector<1x1024x256xf32> to vector<1xf32>
    %36 = vector.shape_cast %35 : vector<1xf32> to vector<1x1x1xf32>
    %37 = vector.extract %36[0, 0, 0] : f32 from vector<1x1x1xf32>
    %38 = vector.broadcast %37 : f32 to vector<1x1x128xf32>
    %39 = arith.maximumf %33, %38 : vector<1x1x128xf32>
    %c0_17 = arith.constant 0 : index
    %c0_18 = arith.constant 0 : index
    %c0_19 = arith.constant 0 : index
    %40 = vector.load %arg5[%c0_17, %c0_18, %c0_19] : memref<1x1x128xf32, #tpu.memory_space<vmem>>, vector<1x1x128xf32>
    tpu.vector_store %arg5[%c0_17, %c0_18, %c0_19], %39 {strides = array<i32>} : memref<1x1x128xf32, #tpu.memory_space<vmem>>, vector<1x1x128xf32>,
    return
  }
  func.func @transform_0(%arg0: i32, %arg1: i32) -> (i32, i32) {
    %c0_i32 = arith.constant 0 : i32
    %c0_i32_0 = arith.constant 0 : i32
    return %arg0, %c0_i32 : i32, i32
  }
  func.func @transform_1(%arg0: i32, %arg1: i32) -> (i32, i32) {
    %c0_i32 = arith.constant 0 : i32
    %c0_i32_0 = arith.constant 0 : i32
    return %arg1, %c0_i32 : i32, i32
  }
  func.func @transform_2(%arg0: i32, %arg1: i32) -> (i32, i32, i32) {
    %c0_i32 = arith.constant 0 : i32
    %c0_i32_0 = arith.constant 0 : i32
    %c0_i32_1 = arith.constant 0 : i32
    return %arg0, %c0_i32, %c0_i32_0 : i32, i32, i32
  }
  func.func @transform_3(%arg0: i32, %arg1: i32) -> (i32, i32, i32) {
    %c0_i32 = arith.constant 0 : i32
    %c0_i32_0 = arith.constant 0 : i32
    %c0_i32_1 = arith.constant 0 : i32
    return %arg0, %c0_i32, %c0_i32_0 : i32, i32, i32
  }
}

</mosaic_0001>

<llo_original>
// kernel: tpu_custom_call.1
$region0: #{tpu_custom_call.1}
  #allocation0 [shape = 'u32[]', space=smem, size = 0x4, offset = 0x4, fixed_abs, tag = 'smem constant byte address 0x4 - core index']
  #allocation1 [shape = 'u32[144,128]{1,0:T(1,128)}', space=vmem, size = 0x12000, scoped, tag = 'internal scratch']
  %s0 = inlined_call_operand.vmem [shape: f32[1300,32], index: 0, kind: input, shape index: {}]
  %s1 = inlined_call_operand.vmem [shape: f32[1100,32], index: 1, kind: input, shape index: {}]
  %s2 = inlined_call_operand.hbm [shape: f32[2,1,128], index: 2, kind: output, shape index: {0}]
  %s3 = inlined_call_operand.hbm [shape: f32[2,1,128], index: 3, kind: output, shape index: {1}]
  %4 = xla_tuple %s2, %s3
  %s5 = sld [smem:[#allocation0]]
  $region53: #{tpu_custom_call.1} parent=0
    _
  %s7 = ssub.s32 1, %s5
  %s8 = scalar_select 0, %s7, %s5
  $region1: #{tpu_custom_call.1} parent=0
    #allocation2 [shape = 'u8[1024]{0}', space=vmem, size = 0x400, scoped, tag = 'output window, operand 0']
    #allocation3 [shape = 's32[2]{0}', space=sflag, size = 0x8, scoped, tag = 'scoped memory for tpu_custom_call.1']
    #allocation4 [shape = 'u8[1024]{0}', space=vmem, size = 0x400, scoped, tag = 'output window, operand 1']
    #allocation5 [shape = 's32[2]{0}', space=sflag, size = 0x8, scoped, tag = 'scoped memory for tpu_custom_call.1']
    %9 = vsyncpa [#allocation3], 0
    %s10 = scalar_lea.sflag [#allocation3], 1
    %11 = vsyncpa %s10, 0
    %12 = vsyncpa [#allocation5], 0
    %s13 = scalar_lea.sflag [#allocation5], 1
    %14 = vsyncpa %s13, 0
    loop: start=0, step=1, limit=12
    $region2: #{tpu_custom_call.1} parent=1 // loop_pre_header
      _
    $region3: #{tpu_custom_call.1} parent=1 // loop_header
      %s16 = sphi 0, %s20
      %p17 = scmp.ge.s32.totalorder %s16, 12
      %s23 = sphi 0, %s35
      %s24 = sphi 0, %s31
      %s25 = sphi 0, %s23
      %s26 = sphi 0, %s24
      %s27 = sphi 0, %s25
      %s28 = sphi 0, %s26
      %s38 = sphi 0, %s40
      %s41 = sphi 0, %s38
      %s42 = sphi 0, %s41
      %s58 = sphi 0, %s42
      %s64 = sphi 0, %s66
      %s67 = sphi 0, %s64
      %s68 = sphi 0, %s67
      %s84 = sphi 0, %s68
      %s90 = sphi 0, %s92
      %s93 = sphi 0, %s90
      %s94 = sphi 0, %s93
      %s110 = sphi 0, %s94
      %s116 = sphi 0, %s118
      %s119 = sphi 0, %s116
      %s120 = sphi 0, %s119
      %s136 = sphi 0, %s120
    $region4: #{tpu_custom_call.1} parent=1 // loop_header_branch
      %19 = sbr.rel (%p17) target = $region8
    $region5: #{tpu_custom_call.1} parent=1 // loop_body
      %s21 = ssub.s32 %s16, 1
      %s22 = ssub.s32 %s16, 2
      %s29 = sadd.s32 1, %s24
      %p30 = scmp.ge.s32.totalorder %s29, 5
      %s31 = scalar_select %p30, 0, %s29
      %s32 = sadd.s32 1, %s23
      %s33 = scalar_select %p30, %s32, %s23
      %p34 = scmp.ge.s32.totalorder %s33, 2
      %s35 = scalar_select %p34, 0, %s33
      %s36 = ssub.s32 %s23, %s35
      %p37 = scmp.eq.s32.totalorder %s36, 0
      %s39 = sadd.s32 %s38, 1
      %s40 = scalar_select %p37, %s38, %s39
      %p43 = pneg %p37
      %p44 = scmp.eq.s32.totalorder %s16, 9
      %p45 = por %p43, %p44
      %p46 = scmp.ne.s32.totalorder %s38, %s41
      %p47 = scmp.eq.s32.totalorder %s16, 0
      %p48 = por %p46, %p47
      %p49 = scmp.ne.s32.totalorder %s38, %s41
      %p50 = scmp.eq.s32.totalorder %s21, 9
      %p51 = por %p49, %p50
      %p52 = scmp.ne.s32.totalorder %s41, %s42
      %p53 = scmp.eq.s32.totalorder %s21, 0
      %p54 = por %p52, %p53
      %p55 = scmp.ne.s32.totalorder %s41, %s42
      %p56 = scmp.eq.s32.totalorder %s22, 9
      %p57 = por %p55, %p56
      %p59 = scmp.ne.s32.totalorder %s42, %s58
      %p60 = scmp.eq.s32.totalorder %s22, 0
      %p61 = por %p59, %p60
      %s62 = ssub.s32 %s24, %s31
      %p63 = scmp.eq.s32.totalorder %s62, 0
      %s65 = sadd.s32 %s64, 1
      %s66 = scalar_select %p63, %s64, %s65
      %p69 = pneg %p63
      %p70 = scmp.eq.s32.totalorder %s16, 9
      %p71 = por %p69, %p70
      %p72 = scmp.ne.s32.totalorder %s64, %s67
      %p73 = scmp.eq.s32.totalorder %s16, 0
      %p74 = por %p72, %p73
      %p75 = scmp.ne.s32.totalorder %s64, %s67
      %p76 = scmp.eq.s32.totalorder %s21, 9
      %p77 = por %p75, %p76
      %p78 = scmp.ne.s32.totalorder %s67, %s68
      %p79 = scmp.eq.s32.totalorder %s21, 0
      %p80 = por %p78, %p79
      %p81 = scmp.ne.s32.totalorder %s67, %s68
      %p82 = scmp.eq.s32.totalorder %s22, 9
      %p83 = por %p81, %p82
      %p85 = scmp.ne.s32.totalorder %s68, %s84
      %p86 = scmp.eq.s32.totalorder %s22, 0
      %p87 = por %p85, %p86
      %s88 = ssub.s32 %s23, %s35
      %p89 = scmp.eq.s32.totalorder %s88, 0
      %s91 = sadd.s32 %s90, 1
      %s92 = scalar_select %p89, %s90, %s91
      %p95 = pneg %p89
      %p96 = scmp.eq.s32.totalorder %s16, 9
      %p97 = por %p95, %p96
      %p98 = scmp.ne.s32.totalorder %s90, %s93
      %p99 = scmp.eq.s32.totalorder %s16, 0
      %p100 = por %p98, %p99
      %p101 = scmp.ne.s32.totalorder %s90, %s93
      %p102 = scmp.eq.s32.totalorder %s21, 9
      %p103 = por %p101, %p102
      %p104 = scmp.ne.s32.totalorder %s93, %s94
      %p105 = scmp.eq.s32.totalorder %s21, 0
      %p106 = por %p104, %p105
      %p107 = scmp.ne.s32.totalorder %s93, %s94
      %p108 = scmp.eq.s32.totalorder %s22, 9
      %p109 = por %p107, %p108
      %p111 = scmp.ne.s32.totalorder %s94, %s110
      %p112 = scmp.eq.s32.totalorder %s22, 0
      %p113 = por %p111, %p112
      %s114 = ssub.s32 %s23, %s35
      %p115 = scmp.eq.s32.totalorder %s114, 0
      %s117 = sadd.s32 %s116, 1
      %s118 = scalar_select %p115, %s116, %s117
      %p121 = pneg %p115
      %p122 = scmp.eq.s32.totalorder %s16, 9
      %p123 = por %p121, %p122
      %p124 = scmp.ne.s32.totalorder %s116, %s119
      %p125 = scmp.eq.s32.totalorder %s16, 0
      %p126 = por %p124, %p125
      %p127 = scmp.ne.s32.totalorder %s116, %s119
      %p128 = scmp.eq.s32.totalorder %s21, 9
      %p129 = por %p127, %p128
      %p130 = scmp.ne.s32.totalorder %s119, %s120
      %p131 = scmp.eq.s32.totalorder %s21, 0
      %p132 = por %p130, %p131
      %p133 = scmp.ne.s32.totalorder %s119, %s120
      %p134 = scmp.eq.s32.totalorder %s22, 9
      %p135 = por %p133, %p134
      %p137 = scmp.ne.s32.totalorder %s120, %s136
      %p138 = scmp.eq.s32.totalorder %s22, 0
      %p139 = por %p137, %p138
      %p140 = scmp.le.s32.totalorder 1, %s16
      %p141 = scmp.lt.s32.totalorder %s16, 11
      %p142 = pnand %p140, %p141
      %p143 = pneg %p142
      // Predicated region
      $region9: #{tpu_custom_call.1} parent=5 // pred_check
        _
      $region10: #{tpu_custom_call.1} parent=5 // pred_check_branch
        %145 = sbr.rel (%p142) target = $region12
      $region11: #{tpu_custom_call.1} parent=5 // pred_region
        %s146 = ssub.s32 %s16, 1
      $region12: #{tpu_custom_call.1} parent=5 // pred_fallthru
        _
      %p147 = scmp.lt.s32.totalorder %s16, 10
      // Predicated region
      $region13: #{tpu_custom_call.1} parent=5 // pred_check
        %p148 = pneg %p147
      $region14: #{tpu_custom_call.1} parent=5 // pred_check_branch
        %150 = sbr.rel (%p148) target = $region16
      $region15: #{tpu_custom_call.1} parent=5 // pred_region
        // Predicated region
        $region17: #{tpu_custom_call.1} parent=15 // pred_check
          %p151 = pneg %p48
        $region18: #{tpu_custom_call.1} parent=15 // pred_check_branch
          %153 = sbr.rel (%p151) target = $region20
        $region19: #{tpu_custom_call.1} parent=15 // pred_region
          %s154 = smul.u32 128, %s23
          %s155 = ssub.s32 163, %s154
          %p156 = scmp.lt.s32.totalorder %s155, 128
          %s157 = scalar_select %p156, %s155, 128
          %s158 = smul.u32 128, %s157
          %p159 = scmp.lt.s32.totalorder %s154, 162
          %s160 = scalar_select %p159, %s154, 162
          %s161 = smul.addr %s160, 8
          %s162 = scalar_lea.vmem %s0, %s161
          %s163 = smul.u32 128, %s23
          %s164 = ssub.s32 163, %s163
          %p165 = scmp.lt.s32.totalorder %s164, 128
          %s166 = scalar_select %p165, %s164, 128
          %s167 = smul.u32 128, %s166
        $region20: #{tpu_custom_call.1} parent=15 // pred_fallthru
          _
        // Predicated region
        $region21: #{tpu_custom_call.1} parent=15 // pred_check
          %p168 = pneg %p74
        $region22: #{tpu_custom_call.1} parent=15 // pred_check_branch
          %170 = sbr.rel (%p168) target = $region24
        $region23: #{tpu_custom_call.1} parent=15 // pred_region
          %s171 = smul.u32 32, %s24
          %s172 = ssub.s32 138, %s171
          %p173 = scmp.lt.s32.totalorder %s172, 32
          %s174 = scalar_select %p173, %s172, 32
          %s175 = smul.u32 128, %s174
          %p176 = scmp.lt.s32.totalorder %s171, 137
          %s177 = scalar_select %p176, %s171, 137
          %s178 = smul.addr %s177, 8
          %s179 = scalar_lea.vmem %s1, %s178
          %s180 = smul.u32 32, %s24
          %s181 = ssub.s32 138, %s180
          %p182 = scmp.lt.s32.totalorder %s181, 32
          %s183 = scalar_select %p182, %s181, 32
          %s184 = smul.u32 128, %s183
        $region24: #{tpu_custom_call.1} parent=15 // pred_fallthru
          _
      $region16: #{tpu_custom_call.1} parent=5 // pred_fallthru
        _
      %p185 = scmp.le.s32.totalorder 1, %s16
      %p186 = scmp.lt.s32.totalorder %s16, 11
      %p187 = pnand %p185, %p186
      %p188 = pneg %p187
      // Predicated region
      $region25: #{tpu_custom_call.1} parent=5 // pred_check
        _
      $region26: #{tpu_custom_call.1} parent=5 // pred_check_branch
        %190 = sbr.rel (%p187) target = $region28
      $region27: #{tpu_custom_call.1} parent=5 // pred_region
        %s191 = ssub.s32 %s16, 1
        %s192 = smul.u32 128, %s25
        %s193 = ssub.s32 163, %s192
        %p194 = scmp.lt.s32.totalorder %s193, 128
        %s195 = scalar_select %p194, %s193, 128
        %s196 = smul.u32 128, %s195
        %p197 = scmp.lt.s32.totalorder %s192, 162
        %s198 = scalar_select %p197, %s192, 162
        %s199 = smul.addr %s198, 8
        %s200 = scalar_lea.vmem %s0, %s199
        %p201 = pneg %p54
        %p202 = pneg %p51
        %s203 = smul.u32 32, %s26
        %s204 = ssub.s32 138, %s203
        %p205 = scmp.lt.s32.totalorder %s204, 32
        %s206 = scalar_select %p205, %s204, 32
        %s207 = smul.u32 128, %s206
        %p208 = scmp.lt.s32.totalorder %s203, 137
        %s209 = scalar_select %p208, %s203, 137
        %s210 = smul.addr %s209, 8
        %s211 = scalar_lea.vmem %s1, %s210
        %p212 = pneg %p80
        %p213 = pneg %p77
        %p214 = pneg %p106
        %p215 = pneg %p103
        %s216 = sand.u32 %s93, 1
        %s217 = scalar_lea.sflag [#allocation3], %s216
        %s218 = sand.u32 %s93, 1
        %s219 = scalar_lea.vmem [#allocation2], %s218
        %p220 = pneg %p132
        %p221 = pneg %p129
        %s222 = sand.u32 %s119, 1
        %s223 = scalar_lea.sflag [#allocation5], %s222
        %s224 = sand.u32 %s119, 1
        %s225 = scalar_lea.vmem [#allocation4], %s224
        %s226 = smul.u32 128, %s25
        %s227 = ssub.s32 163, %s226
        %p228 = scmp.lt.s32.totalorder %s227, 128
        %s229 = scalar_select %p228, %s227, 128
        %s230 = smul.u32 128, %s229
        %p231 = scmp.lt.s32.totalorder %s226, 162
        %s232 = scalar_select %p231, %s226, 162
        %s233 = smul.addr %s232, 8
        %s234 = scalar_lea.vmem %s0, %s233
        %s235 = smul.u32 128, %s25
        %s236 = ssub.s32 163, %s235
        %p237 = scmp.lt.s32.totalorder %s236, 128
        %s238 = scalar_select %p237, %s236, 128
        %s239 = smul.u32 128, %s238
        %s240 = smul.u32 32, %s26
        %s241 = ssub.s32 138, %s240
        %p242 = scmp.lt.s32.totalorder %s241, 32
        %s243 = scalar_select %p242, %s241, 32
        %s244 = smul.u32 128, %s243
        %p245 = scmp.lt.s32.totalorder %s240, 137
        %s246 = scalar_select %p245, %s240, 137
        %s247 = smul.addr %s246, 8
        %s248 = scalar_lea.vmem %s1, %s247
        %s249 = smul.u32 32, %s26
        %s250 = ssub.s32 138, %s249
        %p251 = scmp.lt.s32.totalorder %s250, 32
        %s252 = scalar_select %p251, %s250, 32
        %s253 = smul.u32 128, %s252
        %v254 = vld [vmem:[%s234] sm:$0xff]
        %v255 = vld [vmem:[%s234 + $0x8] sm:$0xff]
        %v256 = vld [vmem:[%s234 + $0x10] sm:$0xff]
        %v257 = vld [vmem:[%s234 + $0x18] sm:$0xff]
        %v258 = vld [vmem:[%s234 + $0x20] sm:$0xff]
        %v259 = vld [vmem:[%s234 + $0x28] sm:$0xff]
        %v260 = vld [vmem:[%s234 + $0x30] sm:$0xff]
        %v261 = vld [vmem:[%s234 + $0x38] sm:$0xff]
        %v262 = vld [vmem:[%s234 + $0x40] sm:$0xff]
        %v263 = vld [vmem:[%s234 + $0x48] sm:$0xff]
        %v264 = vld [vmem:[%s234 + $0x50] sm:$0xff]
        %v265 = vld [vmem:[%s234 + $0x58] sm:$0xff]
        %v266 = vld [vmem:[%s234 + $0x60] sm:$0xff]
        %v267 = vld [vmem:[%s234 + $0x68] sm:$0xff]
        %v268 = vld [vmem:[%s234 + $0x70] sm:$0xff]
        %v269 = vld [vmem:[%s234 + $0x78] sm:$0xff]
        %v270 = vld [vmem:[%s234 + $0x80] sm:$0xff]
        %v271 = vld [vmem:[%s234 + $0x88] sm:$0xff]
        %v272 = vld [vmem:[%s234 + $0x90] sm:$0xff]
        %v273 = vld [vmem:[%s234 + $0x98] sm:$0xff]
        %v274 = vld [vmem:[%s234 + $0xa0] sm:$0xff]
        %v275 = vld [vmem:[%s234 + $0xa8] sm:$0xff]
        %v276 = vld [vmem:[%s234 + $0xb0] sm:$0xff]
        %v277 = vld [vmem:[%s234 + $0xb8] sm:$0xff]
        %v278 = vld [vmem:[%s234 + $0xc0] sm:$0xff]
        %v279 = vld [vmem:[%s234 + $0xc8] sm:$0xff]
        %v280 = vld [vmem:[%s234 + $0xd0] sm:$0xff]
        %v281 = vld [vmem:[%s234 + $0xd8] sm:$0xff]
        %v282 = vld [vmem:[%s234 + $0xe0] sm:$0xff]
        %v283 = vld [vmem:[%s234 + $0xe8] sm:$0xff]
        %v284 = vld [vmem:[%s234 + $0xf0] sm:$0xff]
        %v285 = vld [vmem:[%s234 + $0xf8] sm:$0xff]
        %v286 = vld [vmem:[%s234 + $0x100] sm:$0xff]
        %v287 = vld [vmem:[%s234 + $0x108] sm:$0xff]
        %v288 = vld [vmem:[%s234 + $0x110] sm:$0xff]
        %v289 = vld [vmem:[%s234 + $0x118] sm:$0xff]
        %v290 = vld [vmem:[%s234 + $0x120] sm:$0xff]
        %v291 = vld [vmem:[%s234 + $0x128] sm:$0xff]
        %v292 = vld [vmem:[%s234 + $0x130] sm:$0xff]
        %v293 = vld [vmem:[%s234 + $0x138] sm:$0xff]
        %v294 = vld [vmem:[%s234 + $0x140] sm:$0xff]
        %v295 = vld [vmem:[%s234 + $0x148] sm:$0xff]
        %v296 = vld [vmem:[%s234 + $0x150] sm:$0xff]
        %v297 = vld [vmem:[%s234 + $0x158] sm:$0xff]
        %v298 = vld [vmem:[%s234 + $0x160] sm:$0xff]
        %v299 = vld [vmem:[%s234 + $0x168] sm:$0xff]
        %v300 = vld [vmem:[%s234 + $0x170] sm:$0xff]
        %v301 = vld [vmem:[%s234 + $0x178] sm:$0xff]
        %v302 = vld [vmem:[%s234 + $0x180] sm:$0xff]
        %v303 = vld [vmem:[%s234 + $0x188] sm:$0xff]
        %v304 = vld [vmem:[%s234 + $0x190] sm:$0xff]
        %v305 = vld [vmem:[%s234 + $0x198] sm:$0xff]
        %v306 = vld [vmem:[%s234 + $0x1a0] sm:$0xff]
        %v307 = vld [vmem:[%s234 + $0x1a8] sm:$0xff]
        %v308 = vld [vmem:[%s234 + $0x1b0] sm:$0xff]
        %v309 = vld [vmem:[%s234 + $0x1b8] sm:$0xff]
        %v310 = vld [vmem:[%s234 + $0x1c0] sm:$0xff]
        %v311 = vld [vmem:[%s234 + $0x1c8] sm:$0xff]
        %v312 = vld [vmem:[%s234 + $0x1d0] sm:$0xff]
        %v313 = vld [vmem:[%s234 + $0x1d8] sm:$0xff]
        %v314 = vld [vmem:[%s234 + $0x1e0] sm:$0xff]
        %v315 = vld [vmem:[%s234 + $0x1e8] sm:$0xff]
        %v316 = vld [vmem:[%s234 + $0x1f0] sm:$0xff]
        %v317 = vld [vmem:[%s234 + $0x1f8] sm:$0xff]
        %v318 = vld [vmem:[%s234 + $0x200] sm:$0xff]
        %v319 = vld [vmem:[%s234 + $0x208] sm:$0xff]
        %v320 = vld [vmem:[%s234 + $0x210] sm:$0xff]
        %v321 = vld [vmem:[%s234 + $0x218] sm:$0xff]
        %v322 = vld [vmem:[%s234 + $0x220] sm:$0xff]
        %v323 = vld [vmem:[%s234 + $0x228] sm:$0xff]
        %v324 = vld [vmem:[%s234 + $0x230] sm:$0xff]
        %v325 = vld [vmem:[%s234 + $0x238] sm:$0xff]
        %v326 = vld [vmem:[%s234 + $0x240] sm:$0xff]
        %v327 = vld [vmem:[%s234 + $0x248] sm:$0xff]
        %v328 = vld [vmem:[%s234 + $0x250] sm:$0xff]
        %v329 = vld [vmem:[%s234 + $0x258] sm:$0xff]
        %v330 = vld [vmem:[%s234 + $0x260] sm:$0xff]
        %v331 = vld [vmem:[%s234 + $0x268] sm:$0xff]
        %v332 = vld [vmem:[%s234 + $0x270] sm:$0xff]
        %v333 = vld [vmem:[%s234 + $0x278] sm:$0xff]
        %v334 = vld [vmem:[%s234 + $0x280] sm:$0xff]
        %v335 = vld [vmem:[%s234 + $0x288] sm:$0xff]
        %v336 = vld [vmem:[%s234 + $0x290] sm:$0xff]
        %v337 = vld [vmem:[%s234 + $0x298] sm:$0xff]
        %v338 = vld [vmem:[%s234 + $0x2a0] sm:$0xff]
        %v339 = vld [vmem:[%s234 + $0x2a8] sm:$0xff]
        %v340 = vld [vmem:[%s234 + $0x2b0] sm:$0xff]
        %v341 = vld [vmem:[%s234 + $0x2b8] sm:$0xff]
        %v342 = vld [vmem:[%s234 + $0x2c0] sm:$0xff]
        %v343 = vld [vmem:[%s234 + $0x2c8] sm:$0xff]
        %v344 = vld [vmem:[%s234 + $0x2d0] sm:$0xff]
        %v345 = vld [vmem:[%s234 + $0x2d8] sm:$0xff]
        %v346 = vld [vmem:[%s234 + $0x2e0] sm:$0xff]
        %v347 = vld [vmem:[%s234 + $0x2e8] sm:$0xff]
        %v348 = vld [vmem:[%s234 + $0x2f0] sm:$0xff]
        %v349 = vld [vmem:[%s234 + $0x2f8] sm:$0xff]
        %v350 = vld [vmem:[%s234 + $0x300] sm:$0xff]
        %v351 = vld [vmem:[%s234 + $0x308] sm:$0xff]
        %v352 = vld [vmem:[%s234 + $0x310] sm:$0xff]
        %v353 = vld [vmem:[%s234 + $0x318] sm:$0xff]
        %v354 = vld [vmem:[%s234 + $0x320] sm:$0xff]
        %v355 = vld [vmem:[%s234 + $0x328] sm:$0xff]
        %v356 = vld [vmem:[%s234 + $0x330] sm:$0xff]
        %v357 = vld [vmem:[%s234 + $0x338] sm:$0xff]
        %v358 = vld [vmem:[%s234 + $0x340] sm:$0xff]
        %v359 = vld [vmem:[%s234 + $0x348] sm:$0xff]
        %v360 = vld [vmem:[%s234 + $0x350] sm:$0xff]
        %v361 = vld [vmem:[%s234 + $0x358] sm:$0xff]
        %v362 = vld [vmem:[%s234 + $0x360] sm:$0xff]
        %v363 = vld [vmem:[%s234 + $0x368] sm:$0xff]
        %v364 = vld [vmem:[%s234 + $0x370] sm:$0xff]
        %v365 = vld [vmem:[%s234 + $0x378] sm:$0xff]
        %v366 = vld [vmem:[%s234 + $0x380] sm:$0xff]
        %v367 = vld [vmem:[%s234 + $0x388] sm:$0xff]
        %v368 = vld [vmem:[%s234 + $0x390] sm:$0xff]
        %v369 = vld [vmem:[%s234 + $0x398] sm:$0xff]
        %v370 = vld [vmem:[%s234 + $0x3a0] sm:$0xff]
        %v371 = vld [vmem:[%s234 + $0x3a8] sm:$0xff]
        %v372 = vld [vmem:[%s234 + $0x3b0] sm:$0xff]
        %v373 = vld [vmem:[%s234 + $0x3b8] sm:$0xff]
        %v374 = vld [vmem:[%s234 + $0x3c0] sm:$0xff]
        %v375 = vld [vmem:[%s234 + $0x3c8] sm:$0xff]
        %v376 = vld [vmem:[%s234 + $0x3d0] sm:$0xff]
        %v377 = vld [vmem:[%s234 + $0x3d8] sm:$0xff]
        %v378 = vld [vmem:[%s234 + $0x3e0] sm:$0xff]
        %v379 = vld [vmem:[%s234 + $0x3e8] sm:$0xff]
        %v380 = vld [vmem:[%s234 + $0x3f0] sm:$0xff]
        %v381 = vld [vmem:[%s234 + $0x3f8] sm:$0xff]
        %v382 = vld [vmem:[%s248] sm:$0xff]
        %v383 = vld [vmem:[%s248 + $0x8] sm:$0xff]
        %v384 = vld [vmem:[%s248 + $0x10] sm:$0xff]
        %v385 = vld [vmem:[%s248 + $0x18] sm:$0xff]
        %v386 = vld [vmem:[%s248 + $0x20] sm:$0xff]
        %v387 = vld [vmem:[%s248 + $0x28] sm:$0xff]
        %v388 = vld [vmem:[%s248 + $0x30] sm:$0xff]
        %v389 = vld [vmem:[%s248 + $0x38] sm:$0xff]
        %v390 = vld [vmem:[%s248 + $0x40] sm:$0xff]
        %v391 = vld [vmem:[%s248 + $0x48] sm:$0xff]
        %v392 = vld [vmem:[%s248 + $0x50] sm:$0xff]
        %v393 = vld [vmem:[%s248 + $0x58] sm:$0xff]
        %v394 = vld [vmem:[%s248 + $0x60] sm:$0xff]
        %v395 = vld [vmem:[%s248 + $0x68] sm:$0xff]
        %v396 = vld [vmem:[%s248 + $0x70] sm:$0xff]
        %v397 = vld [vmem:[%s248 + $0x78] sm:$0xff]
        %v398 = vld [vmem:[%s248 + $0x80] sm:$0xff]
        %v399 = vld [vmem:[%s248 + $0x88] sm:$0xff]
        %v400 = vld [vmem:[%s248 + $0x90] sm:$0xff]
        %v401 = vld [vmem:[%s248 + $0x98] sm:$0xff]
        %v402 = vld [vmem:[%s248 + $0xa0] sm:$0xff]
        %v403 = vld [vmem:[%s248 + $0xa8] sm:$0xff]
        %v404 = vld [vmem:[%s248 + $0xb0] sm:$0xff]
        %v405 = vld [vmem:[%s248 + $0xb8] sm:$0xff]
        %v406 = vld [vmem:[%s248 + $0xc0] sm:$0xff]
        %v407 = vld [vmem:[%s248 + $0xc8] sm:$0xff]
        %v408 = vld [vmem:[%s248 + $0xd0] sm:$0xff]
        %v409 = vld [vmem:[%s248 + $0xd8] sm:$0xff]
        %v410 = vld [vmem:[%s248 + $0xe0] sm:$0xff]
        %v411 = vld [vmem:[%s248 + $0xe8] sm:$0xff]
        %v412 = vld [vmem:[%s248 + $0xf0] sm:$0xff]
        %v413 = vld [vmem:[%s248 + $0xf8] sm:$0xff]
        %vm414 = vcmask 261120
        %v416 = vsel %vm414, %v254, 0
        %v419 = vsel %vm414, %v255, 0
        %v422 = vsel %vm414, %v256, 0
        %v425 = vsel %vm414, %v257, 0
        %v428 = vsel %vm414, %v258, 0
        %v431 = vsel %vm414, %v259, 0
        %v434 = vsel %vm414, %v260, 0
        %v437 = vsel %vm414, %v261, 0
        %v440 = vsel %vm414, %v262, 0
        %v443 = vsel %vm414, %v263, 0
        %v446 = vsel %vm414, %v264, 0
        %v449 = vsel %vm414, %v265, 0
        %v452 = vsel %vm414, %v266, 0
        %v455 = vsel %vm414, %v267, 0
        %v458 = vsel %vm414, %v268, 0
        %v461 = vsel %vm414, %v269, 0
        %v464 = vsel %vm414, %v270, 0
        %v467 = vsel %vm414, %v271, 0
        %v470 = vsel %vm414, %v272, 0
        %v473 = vsel %vm414, %v273, 0
        %v476 = vsel %vm414, %v274, 0
        %v479 = vsel %vm414, %v275, 0
        %v482 = vsel %vm414, %v276, 0
        %v485 = vsel %vm414, %v277, 0
        %v488 = vsel %vm414, %v278, 0
        %v491 = vsel %vm414, %v279, 0
        %v494 = vsel %vm414, %v280, 0
        %v497 = vsel %vm414, %v281, 0
        %v500 = vsel %vm414, %v282, 0
        %v503 = vsel %vm414, %v283, 0
        %v506 = vsel %vm414, %v284, 0
        %v509 = vsel %vm414, %v285, 0
        %v512 = vsel %vm414, %v286, 0
        %v515 = vsel %vm414, %v287, 0
        %v518 = vsel %vm414, %v288, 0
        %v521 = vsel %vm414, %v289, 0
        %v524 = vsel %vm414, %v290, 0
        %v527 = vsel %vm414, %v291, 0
        %v530 = vsel %vm414, %v292, 0
        %v533 = vsel %vm414, %v293, 0
        %v536 = vsel %vm414, %v294, 0
        %v539 = vsel %vm414, %v295, 0
        %v542 = vsel %vm414, %v296, 0
        %v545 = vsel %vm414, %v297, 0
        %v548 = vsel %vm414, %v298, 0
        %v551 = vsel %vm414, %v299, 0
        %v554 = vsel %vm414, %v300, 0
        %v557 = vsel %vm414, %v301, 0
        %v560 = vsel %vm414, %v302, 0
        %v563 = vsel %vm414, %v303, 0
        %v566 = vsel %vm414, %v304, 0
        %v569 = vsel %vm414, %v305, 0
        %v572 = vsel %vm414, %v306, 0
        %v575 = vsel %vm414, %v307, 0
        %v578 = vsel %vm414, %v308, 0
        %v581 = vsel %vm414, %v309, 0
        %v584 = vsel %vm414, %v310, 0
        %v587 = vsel %vm414, %v311, 0
        %v590 = vsel %vm414, %v312, 0
        %v593 = vsel %vm414, %v313, 0
        %v596 = vsel %vm414, %v314, 0
        %v599 = vsel %vm414, %v315, 0
        %v602 = vsel %vm414, %v316, 0
        %v605 = vsel %vm414, %v317, 0
        %v608 = vsel %vm414, %v318, 0
        %v611 = vsel %vm414, %v319, 0
        %v614 = vsel %vm414, %v320, 0
        %v617 = vsel %vm414, %v321, 0
        %v620 = vsel %vm414, %v322, 0
        %v623 = vsel %vm414, %v323, 0
        %v626 = vsel %vm414, %v324, 0
        %v629 = vsel %vm414, %v325, 0
        %v632 = vsel %vm414, %v326, 0
        %v635 = vsel %vm414, %v327, 0
        %v638 = vsel %vm414, %v328, 0
        %v641 = vsel %vm414, %v329, 0
        %v644 = vsel %vm414, %v330, 0
        %v647 = vsel %vm414, %v331, 0
        %v650 = vsel %vm414, %v332, 0
        %v653 = vsel %vm414, %v333, 0
        %v656 = vsel %vm414, %v334, 0
        %v659 = vsel %vm414, %v335, 0
        %v662 = vsel %vm414, %v336, 0
        %v665 = vsel %vm414, %v337, 0
        %v668 = vsel %vm414, %v338, 0
        %v671 = vsel %vm414, %v339, 0
        %v674 = vsel %vm414, %v340, 0
        %v677 = vsel %vm414, %v341, 0
        %v680 = vsel %vm414, %v342, 0
        %v683 = vsel %vm414, %v343, 0
        %v686 = vsel %vm414, %v344, 0
        %v689 = vsel %vm414, %v345, 0
        %v692 = vsel %vm414, %v346, 0
        %v695 = vsel %vm414, %v347, 0
        %v698 = vsel %vm414, %v348, 0
        %v701 = vsel %vm414, %v349, 0
        %v704 = vsel %vm414, %v350, 0
        %v707 = vsel %vm414, %v351, 0
        %v710 = vsel %vm414, %v352, 0
        %v713 = vsel %vm414, %v353, 0
        %v716 = vsel %vm414, %v354, 0
        %v719 = vsel %vm414, %v355, 0
        %v722 = vsel %vm414, %v356, 0
        %v725 = vsel %vm414, %v357, 0
        %v728 = vsel %vm414, %v358, 0
        %v731 = vsel %vm414, %v359, 0
        %v734 = vsel %vm414, %v360, 0
        %v737 = vsel %vm414, %v361, 0
        %v740 = vsel %vm414, %v362, 0
        %v743 = vsel %vm414, %v363, 0
        %v746 = vsel %vm414, %v364, 0
        %v749 = vsel %vm414, %v365, 0
        %v752 = vsel %vm414, %v366, 0
        %v755 = vsel %vm414, %v367, 0
        %v758 = vsel %vm414, %v368, 0
        %v761 = vsel %vm414, %v369, 0
        %v764 = vsel %vm414, %v370, 0
        %v767 = vsel %vm414, %v371, 0
        %v770 = vsel %vm414, %v372, 0
        %v773 = vsel %vm414, %v373, 0
        %v776 = vsel %vm414, %v374, 0
        %v779 = vsel %vm414, %v375, 0
        %v782 = vsel %vm414, %v376, 0
        %v785 = vsel %vm414, %v377, 0
        %v788 = vsel %vm414, %v378, 0
        %v791 = vsel %vm414, %v379, 0
        %v794 = vsel %vm414, %v380, 0
        %v797 = vsel %vm414, %v381, 0
        %v800 = vsel %vm414, %v382, 0
        %v803 = vsel %vm414, %v383, 0
        %v806 = vsel %vm414, %v384, 0
        %v809 = vsel %vm414, %v385, 0
        %v812 = vsel %vm414, %v386, 0
        %v815 = vsel %vm414, %v387, 0
        %v818 = vsel %vm414, %v388, 0
        %v821 = vsel %vm414, %v389, 0
        %v824 = vsel %vm414, %v390, 0
        %v827 = vsel %vm414, %v391, 0
        %v830 = vsel %vm414, %v392, 0
        %v833 = vsel %vm414, %v393, 0
        %v836 = vsel %vm414, %v394, 0
        %v839 = vsel %vm414, %v395, 0
        %v842 = vsel %vm414, %v396, 0
        %v845 = vsel %vm414, %v397, 0
        %v848 = vsel %vm414, %v398, 0
        %v851 = vsel %vm414, %v399, 0
        %v854 = vsel %vm414, %v400, 0
        %v857 = vsel %vm414, %v401, 0
        %v860 = vsel %vm414, %v402, 0
        %v863 = vsel %vm414, %v403, 0
        %v866 = vsel %vm414, %v404, 0
        %v869 = vsel %vm414, %v405, 0
        %v872 = vsel %vm414, %v406, 0
        %v875 = vsel %vm414, %v407, 0
        %v878 = vsel %vm414, %v408, 0
        %v881 = vsel %vm414, %v409, 0
        %v884 = vsel %vm414, %v410, 0
        %v887 = vsel %vm414, %v411, 0
        %v890 = vsel %vm414, %v412, 0
        %v893 = vsel %vm414, %v413, 0
        %895 = vmatprep.subr.mxu0 0.0
        %896 = vmatpush1.xpose.msra.mxu0 %v800
        %897 = vmatprep.subr.mxu0 0.0
        %898 = vmatpush1.xpose.msra.mxu0 %v803
        %899 = vmatprep.subr.mxu0 0.0
        %900 = vmatpush1.xpose.msra.mxu0 %v806
        %901 = vmatprep.subr.mxu0 0.0
        %902 = vmatpush1.xpose.msra.mxu0 %v809
        %903 = vmatprep.subr.mxu0 0.0
        %904 = vmatpush1.xpose.msra.mxu0 %v812
        %905 = vmatprep.subr.mxu0 0.0
        %906 = vmatpush1.xpose.msra.mxu0 %v815
        %907 = vmatprep.subr.mxu0 0.0
        %908 = vmatpush1.xpose.msra.mxu0 %v818
        %909 = vmatprep.subr.mxu0 0.0
        %910 = vmatpush1.xpose.msra.mxu0 %v821
        %911 = vmatprep.subr.mxu0 0.0
        %912 = vmatpush1.xpose.msra.mxu0 %v824
        %913 = vmatprep.subr.mxu0 0.0
        %914 = vmatpush1.xpose.msra.mxu0 %v827
        %915 = vmatprep.subr.mxu0 0.0
        %916 = vmatpush1.xpose.msra.mxu0 %v830
        %917 = vmatprep.subr.mxu0 0.0
        %918 = vmatpush1.xpose.msra.mxu0 %v833
        %919 = vmatprep.subr.mxu0 0.0
        %920 = vmatpush1.xpose.msra.mxu0 %v836
        %921 = vmatprep.subr.mxu0 0.0
        %922 = vmatpush1.xpose.msra.mxu0 %v839
        %923 = vmatprep.subr.mxu0 0.0
        %924 = vmatpush1.xpose.msra.mxu0 %v842
        %925 = vmatprep.subr.mxu0 0.0
        %926 = vmatpush1.xpose.msra.mxu0 %v845
        %927 = vmatprep.subr.mxu0 0.0
        %928 = vmatpush1.xpose.msra.mxu0 %v848
        %929 = vmatprep.subr.mxu0 0.0
        %930 = vmatpush1.xpose.msra.mxu0 %v851
        %931 = vmatprep.subr.mxu0 0.0
        %932 = vmatpush1.xpose.msra.mxu0 %v854
        %933 = vmatprep.subr.mxu0 0.0
        %934 = vmatpush1.xpose.msra.mxu0 %v857
        %935 = vmatprep.subr.mxu0 0.0
        %936 = vmatpush1.xpose.msra.mxu0 %v860
        %937 = vmatprep.subr.mxu0 0.0
        %938 = vmatpush1.xpose.msra.mxu0 %v863
        %939 = vmatprep.subr.mxu0 0.0
        %940 = vmatpush1.xpose.msra.mxu0 %v866
        %941 = vmatprep.subr.mxu0 0.0
        %942 = vmatpush1.xpose.msra.mxu0 %v869
        %943 = vmatprep.subr.mxu0 0.0
        %944 = vmatpush1.xpose.msra.mxu0 %v872
        %945 = vmatprep.subr.mxu0 0.0
        %946 = vmatpush1.xpose.msra.mxu0 %v875
        %947 = vmatprep.subr.mxu0 0.0
        %948 = vmatpush1.xpose.msra.mxu0 %v878
        %949 = vmatprep.subr.mxu0 0.0
        %950 = vmatpush1.xpose.msra.mxu0 %v881
        %951 = vmatprep.subr.mxu0 0.0
        %952 = vmatpush1.xpose.msra.mxu0 %v884
        %953 = vmatprep.subr.mxu0 0.0
        %954 = vmatpush1.xpose.msra.mxu0 %v887
        %955 = vmatprep.subr.mxu0 0.0
        %956 = vmatpush1.xpose.msra.mxu0 %v890
        %957 = vmatprep.subr.mxu0 0.0
        %958 = vmatpush1.xpose.msra.mxu0 %v893
        %959 = vmatprep.mubr.f32.mxu0 0.0
        %960 = vmatmul.mubr.f32.gmra.mrb[0].mxu0 %v416
        %v961 = vpop.f32.mrb[0].mxu0
        %v962 = vadd.f32 0.0, %v961
        %v963 = vpop.f32.mrb[0].mxu0
        %v964 = vadd.f32 0.0, %v963
        %965 = vmatprep.mubr.f32.mxu0 0.0
        %966 = vmatmul.mubr.f32.gmra.mrb[0].mxu0 %v419
        %v967 = vpop.f32.mrb[0].mxu0
        %v968 = vadd.f32 0.0, %v967
        %v969 = vpop.f32.mrb[0].mxu0
        %v970 = vadd.f32 0.0, %v969
        %971 = vmatprep.mubr.f32.mxu0 0.0
        %972 = vmatmul.mubr.f32.gmra.mrb[0].mxu0 %v422
        %v973 = vpop.f32.mrb[0].mxu0
        %v974 = vadd.f32 0.0, %v973
        %v975 = vpop.f32.mrb[0].mxu0
        %v976 = vadd.f32 0.0, %v975
        %977 = vmatprep.mubr.f32.mxu0 0.0
        %978 = vmatmul.mubr.f32.gmra.mrb[0].mxu0 %v425
        %v979 = vpop.f32.mrb[0].mxu0
        %v980 = vadd.f32 0.0, %v979
        %v981 = vpop.f32.mrb[0].mxu0
        %v982 = vadd.f32 0.0, %v981
        %983 = vmatprep.mubr.f32.mxu0 0.0
        %984 = vmatmul.mubr.f32.gmra.mrb[0].mxu0 %v428
        %v985 = vpop.f32.mrb[0].mxu0
        %v986 = vadd.f32 0.0, %v985
        %v987 = vpop.f32.mrb[0].mxu0
        %v988 = vadd.f32 0.0, %v987
        %989 = vmatprep.mubr.f32.mxu0 0.0
        %990 = vmatmul.mubr.f32.gmra.mrb[0].mxu0 %v431
        %v991 = vpop.f32.mrb[0].mxu0
        %v992 = vadd.f32 0.0, %v991
        %v993 = vpop.f32.mrb[0].mxu0
        %v994 = vadd.f32 0.0, %v993
        %995 = vmatprep.mubr.f32.mxu0 0.0
        %996 = vmatmul.mubr.f32.gmra.mrb[0].mxu0 %v434
        %v997 = vpop.f32.mrb[0].mxu0
        %v998 = vadd.f32 0.0, %v997
        %v999 = vpop.f32.mrb[0].mxu0
        %v1000 = vadd.f32 0.0, %v999
        %1001 = vmatprep.mubr.f32.mxu0 0.0
        %1002 = vmatmul.mubr.f32.gmra.mrb[0].mxu0 %v437
        %v1003 = vpop.f32.mrb[0].mxu0
        %v1004 = vadd.f32 0.0, %v1003
        %v1005 = vpop.f32.mrb[0].mxu0
        %v1006 = vadd.f32 0.0, %v1005
        %1007 = vmatprep.mubr.f32.mxu0 0.0
        %1008 = vmatmul.mubr.f32.gmra.mrb[0].mxu0 %v440
        %v1009 = vpop.f32.mrb[0].mxu0
        %v1010 = vadd.f32 0.0, %v1009
        %v1011 = vpop.f32.mrb[0].mxu0
        %v1012 = vadd.f32 0.0, %v1011
        %1013 = vmatprep.mubr.f32.mxu0 0.0
        %1014 = vmatmul.mubr.f32.gmra.mrb[0].mxu0 %v443
        %v1015 = vpop.f32.mrb[0].mxu0
        %v1016 = vadd.f32 0.0, %v1015
        %v1017 = vpop.f32.mrb[0].mxu0
        %v1018 = vadd.f32 0.0, %v1017
        %1019 = vmatprep.mubr.f32.mxu0 0.0
        %1020 = vmatmul.mubr.f32.gmra.mrb[0].mxu0 %v446
        %v1021 = vpop.f32.mrb[0].mxu0
        %v1022 = vadd.f32 0.0, %v1021
        %v1023 = vpop.f32.mrb[0].mxu0
        %v1024 = vadd.f32 0.0, %v1023
        %1025 = vmatprep.mubr.f32.mxu0 0.0
        %1026 = vmatmul.mubr.f32.gmra.mrb[0].mxu0 %v449
        %v1027 = vpop.f32.mrb[0].mxu0
        %v1028 = vadd.f32 0.0, %v1027
        %v1029 = vpop.f32.mrb[0].mxu0
        %v1030 = vadd.f32 0.0, %v1029
        %1031 = vmatprep.mubr.f32.mxu0 0.0
        %1032 = vmatmul.mubr.f32.gmra.mrb[0].mxu0 %v452
        %v1033 = vpop.f32.mrb[0].mxu0
        %v1034 = vadd.f32 0.0, %v1033
        %v1035 = vpop.f32.mrb[0].mxu0
        %v1036 = vadd.f32 0.0, %v1035
        %1037 = vmatprep.mubr.f32.mxu0 0.0
        %1038 = vmatmul.mubr.f32.gmra.mrb[0].mxu0 %v455
        %v1039 = vpop.f32.mrb[0].mxu0
        %v1040 = vadd.f32 0.0, %v1039
        %v1041 = vpop.f32.mrb[0].mxu0
        %v1042 = vadd.f32 0.0, %v1041
        %1043 = vmatprep.mubr.f32.mxu0 0.0
        %1044 = vmatmul.mubr.f32.gmra.mrb[0].mxu0 %v458
        %v1045 = vpop.f32.mrb[0].mxu0
        %v1046 = vadd.f32 0.0, %v1045
        %v1047 = vpop.f32.mrb[0].mxu0
        %v1048 = vadd.f32 0.0, %v1047
        %1049 = vmatprep.mubr.f32.mxu0 0.0
        %1050 = vmatmul.mubr.f32.gmra.mrb[0].mxu0 %v461
        %v1051 = vpop.f32.mrb[0].mxu0
        %v1052 = vadd.f32 0.0, %v1051
        %v1053 = vpop.f32.mrb[0].mxu0
        %v1054 = vadd.f32 0.0, %v1053
        %1055 = vmatprep.mubr.f32.mxu0 0.0
        %1056 = vmatmul.mubr.f32.gmra.mrb[0].mxu0 %v464
        %v1057 = vpop.f32.mrb[0].mxu0
        %v1058 = vadd.f32 0.0, %v1057
        %v1059 = vpop.f32.mrb[0].mxu0
        %v1060 = vadd.f32 0.0, %v1059
        %1061 = vmatprep.mubr.f32.mxu0 0.0
        %1062 = vmatmul.mubr.f32.gmra.mrb[0].mxu0 %v467
        %v1063 = vpop.f32.mrb[0].mxu0
        %v1064 = vadd.f32 0.0, %v1063
        %v1065 = vpop.f32.mrb[0].mxu0
        %v1066 = vadd.f32 0.0, %v1065
        %1067 = vmatprep.mubr.f32.mxu0 0.0
        %1068 = vmatmul.mubr.f32.gmra.mrb[0].mxu0 %v470
        %v1069 = vpop.f32.mrb[0].mxu0
        %v1070 = vadd.f32 0.0, %v1069
        %v1071 = vpop.f32.mrb[0].mxu0
        %v1072 = vadd.f32 0.0, %v1071
        %1073 = vmatprep.mubr.f32.mxu0 0.0
        %1074 = vmatmul.mubr.f32.gmra.mrb[0].mxu0 %v473
        %v1075 = vpop.f32.mrb[0].mxu0
        %v1076 = vadd.f32 0.0, %v1075
        %v1077 = vpop.f32.mrb[0].mxu0
        %v1078 = vadd.f32 0.0, %v1077
        %1079 = vmatprep.mubr.f32.mxu0 0.0
        %1080 = vmatmul.mubr.f32.gmra.mrb[0].mxu0 %v476
        %v1081 = vpop.f32.mrb[0].mxu0
        %v1082 = vadd.f32 0.0, %v1081
        %v1083 = vpop.f32.mrb[0].mxu0
        %v1084 = vadd.f32 0.0, %v1083
        %1085 = vmatprep.mubr.f32.mxu0 0.0
        %1086 = vmatmul.mubr.f32.gmra.mrb[0].mxu0 %v479
        %v1087 = vpop.f32.mrb[0].mxu0
        %v1088 = vadd.f32 0.0, %v1087
        %v1089 = vpop.f32.mrb[0].mxu0
        %v1090 = vadd.f32 0.0, %v1089
        %1091 = vmatprep.mubr.f32.mxu0 0.0
        %1092 = vmatmul.mubr.f32.gmra.mrb[0].mxu0 %v482
        %v1093 = vpop.f32.mrb[0].mxu0
        %v1094 = vadd.f32 0.0, %v1093
        %v1095 = vpop.f32.mrb[0].mxu0
        %v1096 = vadd.f32 0.0, %v1095
        %1097 = vmatprep.mubr.f32.mxu0 0.0
        %1098 = vmatmul.mubr.f32.gmra.mrb[0].mxu0 %v485
        %v1099 = vpop.f32.mrb[0].mxu0
        %v1100 = vadd.f32 0.0, %v1099
        %v1101 = vpop.f32.mrb[0].mxu0
        %v1102 = vadd.f32 0.0, %v1101
        %1103 = vmatprep.mubr.f32.mxu0 0.0
        %1104 = vmatmul.mubr.f32.gmra.mrb[0].mxu0 %v488
        %v1105 = vpop.f32.mrb[0].mxu0
        %v1106 = vadd.f32 0.0, %v1105
        %v1107 = vpop.f32.mrb[0].mxu0
        %v1108 = vadd.f32 0.0, %v1107
        %1109 = vmatprep.mubr.f32.mxu0 0.0
        %1110 = vmatmul.mubr.f32.gmra.mrb[0].mxu0 %v491
        %v1111 = vpop.f32.mrb[0].mxu0
        %v1112 = vadd.f32 0.0, %v1111
        %v1113 = vpop.f32.mrb[0].mxu0
        %v1114 = vadd.f32 0.0, %v1113
        %1115 = vmatprep.mubr.f32.mxu0 0.0
        %1116 = vmatmul.mubr.f32.gmra.mrb[0].mxu0 %v494
        %v1117 = vpop.f32.mrb[0].mxu0
        %v1118 = vadd.f32 0.0, %v1117
        %v1119 = vpop.f32.mrb[0].mxu0
        %v1120 = vadd.f32 0.0, %v1119
        %1121 = vmatprep.mubr.f32.mxu0 0.0
        %1122 = vmatmul.mubr.f32.gmra.mrb[0].mxu0 %v497
        %v1123 = vpop.f32.mrb[0].mxu0
        %v1124 = vadd.f32 0.0, %v1123
        %v1125 = vpop.f32.mrb[0].mxu0
        %v1126 = vadd.f32 0.0, %v1125
        %1127 = vmatprep.mubr.f32.mxu0 0.0
        %1128 = vmatmul.mubr.f32.gmra.mrb[0].mxu0 %v500
        %v1129 = vpop.f32.mrb[0].mxu0
        %v1130 = vadd.f32 0.0, %v1129
        %v1131 = vpop.f32.mrb[0].mxu0
        %v1132 = vadd.f32 0.0, %v1131
        %1133 = vmatprep.mubr.f32.mxu0 0.0
        %1134 = vmatmul.mubr.f32.gmra.mrb[0].mxu0 %v503
        %v1135 = vpop.f32.mrb[0].mxu0
        %v1136 = vadd.f32 0.0, %v1135
        %v1137 = vpop.f32.mrb[0].mxu0
        %v1138 = vadd.f32 0.0, %v1137
        %1139 = vmatprep.mubr.f32.mxu0 0.0
        %1140 = vmatmul.mubr.f32.gmra.mrb[0].mxu0 %v506
        %v1141 = vpop.f32.mrb[0].mxu0
        %v1142 = vadd.f32 0.0, %v1141
        %v1143 = vpop.f32.mrb[0].mxu0
        %v1144 = vadd.f32 0.0, %v1143
        %1145 = vmatprep.mubr.f32.mxu0 0.0
        %1146 = vmatmul.mubr.f32.gmra.mrb[0].mxu0 %v509
        %v1147 = vpop.f32.mrb[0].mxu0
        %v1148 = vadd.f32 0.0, %v1147
        %v1149 = vpop.f32.mrb[0].mxu0
        %v1150 = vadd.f32 0.0, %v1149
        %1151 = vmatprep.mubr.f32.mxu0 0.0
        %1152 = vmatmul.mubr.f32.gmra.mrb[0].mxu0 %v512
        %v1153 = vpop.f32.mrb[0].mxu0
        %v1154 = vadd.f32 0.0, %v1153
        %v1155 = vpop.f32.mrb[0].mxu0
        %v1156 = vadd.f32 0.0, %v1155
        %1157 = vmatprep.mubr.f32.mxu0 0.0
        %1158 = vmatmul.mubr.f32.gmra.mrb[0].mxu0 %v515
        %v1159 = vpop.f32.mrb[0].mxu0
        %v1160 = vadd.f32 0.0, %v1159
        %v1161 = vpop.f32.mrb[0].mxu0
        %v1162 = vadd.f32 0.0, %v1161
        %1163 = vmatprep.mubr.f32.mxu0 0.0
        %1164 = vmatmul.mubr.f32.gmra.mrb[0].mxu0 %v518
        %v1165 = vpop.f32.mrb[0].mxu0
        %v1166 = vadd.f32 0.0, %v1165
        %v1167 = vpop.f32.mrb[0].mxu0
        %v1168 = vadd.f32 0.0, %v1167
        %1169 = vmatprep.mubr.f32.mxu0 0.0
        %1170 = vmatmul.mubr.f32.gmra.mrb[0].mxu0 %v521
        %v1171 = vpop.f32.mrb[0].mxu0
        %v1172 = vadd.f32 0.0, %v1171
        %v1173 = vpop.f32.mrb[0].mxu0
        %v1174 = vadd.f32 0.0, %v1173
        %1175 = vmatprep.mubr.f32.mxu0 0.0
        %1176 = vmatmul.mubr.f32.gmra.mrb[0].mxu0 %v524
        %v1177 = vpop.f32.mrb[0].mxu0
        %v1178 = vadd.f32 0.0, %v1177
        %v1179 = vpop.f32.mrb[0].mxu0
        %v1180 = vadd.f32 0.0, %v1179
        %1181 = vmatprep.mubr.f32.mxu0 0.0
        %1182 = vmatmul.mubr.f32.gmra.mrb[0].mxu0 %v527
        %v1183 = vpop.f32.mrb[0].mxu0
        %v1184 = vadd.f32 0.0, %v1183
        %v1185 = vpop.f32.mrb[0].mxu0
        %v1186 = vadd.f32 0.0, %v1185
        %1187 = vmatprep.mubr.f32.mxu0 0.0
        %1188 = vmatmul.mubr.f32.gmra.mrb[0].mxu0 %v530
        %v1189 = vpop.f32.mrb[0].mxu0
        %v1190 = vadd.f32 0.0, %v1189
        %v1191 = vpop.f32.mrb[0].mxu0
        %v1192 = vadd.f32 0.0, %v1191
        %1193 = vmatprep.mubr.f32.mxu0 0.0
        %1194 = vmatmul.mubr.f32.gmra.mrb[0].mxu0 %v533
        %v1195 = vpop.f32.mrb[0].mxu0
        %v1196 = vadd.f32 0.0, %v1195
        %v1197 = vpop.f32.mrb[0].mxu0
        %v1198 = vadd.f32 0.0, %v1197
        %1199 = vmatprep.mubr.f32.mxu0 0.0
        %1200 = vmatmul.mubr.f32.gmra.mrb[0].mxu0 %v536
        %v1201 = vpop.f32.mrb[0].mxu0
        %v1202 = vadd.f32 0.0, %v1201
        %v1203 = vpop.f32.mrb[0].mxu0
        %v1204 = vadd.f32 0.0, %v1203
        %1205 = vmatprep.mubr.f32.mxu0 0.0
        %1206 = vmatmul.mubr.f32.gmra.mrb[0].mxu0 %v539
        %v1207 = vpop.f32.mrb[0].mxu0
        %v1208 = vadd.f32 0.0, %v1207
        %v1209 = vpop.f32.mrb[0].mxu0
        %v1210 = vadd.f32 0.0, %v1209
        %1211 = vmatprep.mubr.f32.mxu0 0.0
        %1212 = vmatmul.mubr.f32.gmra.mrb[0].mxu0 %v542
        %v1213 = vpop.f32.mrb[0].mxu0
        %v1214 = vadd.f32 0.0, %v1213
        %v1215 = vpop.f32.mrb[0].mxu0
        %v1216 = vadd.f32 0.0, %v1215
        %1217 = vmatprep.mubr.f32.mxu0 0.0
        %1218 = vmatmul.mubr.f32.gmra.mrb[0].mxu0 %v545
        %v1219 = vpop.f32.mrb[0].mxu0
        %v1220 = vadd.f32 0.0, %v1219
        %v1221 = vpop.f32.mrb[0].mxu0
        %v1222 = vadd.f32 0.0, %v1221
        %1223 = vmatprep.mubr.f32.mxu0 0.0
        %1224 = vmatmul.mubr.f32.gmra.mrb[0].mxu0 %v548
        %v1225 = vpop.f32.mrb[0].mxu0
        %v1226 = vadd.f32 0.0, %v1225
        %v1227 = vpop.f32.mrb[0].mxu0
        %v1228 = vadd.f32 0.0, %v1227
        %1229 = vmatprep.mubr.f32.mxu0 0.0
        %1230 = vmatmul.mubr.f32.gmra.mrb[0].mxu0 %v551
        %v1231 = vpop.f32.mrb[0].mxu0
        %v1232 = vadd.f32 0.0, %v1231
        %v1233 = vpop.f32.mrb[0].mxu0
        %v1234 = vadd.f32 0.0, %v1233
        %1235 = vmatprep.mubr.f32.mxu0 0.0
        %1236 = vmatmul.mubr.f32.gmra.mrb[0].mxu0 %v554
        %v1237 = vpop.f32.mrb[0].mxu0
        %v1238 = vadd.f32 0.0, %v1237
        %v1239 = vpop.f32.mrb[0].mxu0
        %v1240 = vadd.f32 0.0, %v1239
        %1241 = vmatprep.mubr.f32.mxu0 0.0
        %1242 = vmatmul.mubr.f32.gmra.mrb[0].mxu0 %v557
        %v1243 = vpop.f32.mrb[0].mxu0
        %v1244 = vadd.f32 0.0, %v1243
        %v1245 = vpop.f32.mrb[0].mxu0
        %v1246 = vadd.f32 0.0, %v1245
        %1247 = vmatprep.mubr.f32.mxu0 0.0
        %1248 = vmatmul.mubr.f32.gmra.mrb[0].mxu0 %v560
        %v1249 = vpop.f32.mrb[0].mxu0
        %v1250 = vadd.f32 0.0, %v1249
        %v1251 = vpop.f32.mrb[0].mxu0
        %v1252 = vadd.f32 0.0, %v1251
        %1253 = vmatprep.mubr.f32.mxu0 0.0
        %1254 = vmatmul.mubr.f32.gmra.mrb[0].mxu0 %v563
        %v1255 = vpop.f32.mrb[0].mxu0
        %v1256 = vadd.f32 0.0, %v1255
        %v1257 = vpop.f32.mrb[0].mxu0
        %v1258 = vadd.f32 0.0, %v1257
        %1259 = vmatprep.mubr.f32.mxu0 0.0
        %1260 = vmatmul.mubr.f32.gmra.mrb[0].mxu0 %v566
        %v1261 = vpop.f32.mrb[0].mxu0
        %v1262 = vadd.f32 0.0, %v1261
        %v1263 = vpop.f32.mrb[0].mxu0
        %v1264 = vadd.f32 0.0, %v1263
        %1265 = vmatprep.mubr.f32.mxu0 0.0
        %1266 = vmatmul.mubr.f32.gmra.mrb[0].mxu0 %v569
        %v1267 = vpop.f32.mrb[0].mxu0
        %v1268 = vadd.f32 0.0, %v1267
        %v1269 = vpop.f32.mrb[0].mxu0
        %v1270 = vadd.f32 0.0, %v1269
        %1271 = vmatprep.mubr.f32.mxu0 0.0
        %1272 = vmatmul.mubr.f32.gmra.mrb[0].mxu0 %v572
        %v1273 = vpop.f32.mrb[0].mxu0
        %v1274 = vadd.f32 0.0, %v1273
        %v1275 = vpop.f32.mrb[0].mxu0
        %v1276 = vadd.f32 0.0, %v1275
        %1277 = vmatprep.mubr.f32.mxu0 0.0
        %1278 = vmatmul.mubr.f32.gmra.mrb[0].mxu0 %v575
        %v1279 = vpop.f32.mrb[0].mxu0
        %v1280 = vadd.f32 0.0, %v1279
        %v1281 = vpop.f32.mrb[0].mxu0
        %v1282 = vadd.f32 0.0, %v1281
        %1283 = vmatprep.mubr.f32.mxu0 0.0
        %1284 = vmatmul.mubr.f32.gmra.mrb[0].mxu0 %v578
        %v1285 = vpop.f32.mrb[0].mxu0
        %v1286 = vadd.f32 0.0, %v1285
        %v1287 = vpop.f32.mrb[0].mxu0
        %v1288 = vadd.f32 0.0, %v1287
        %1289 = vmatprep.mubr.f32.mxu0 0.0
        %1290 = vmatmul.mubr.f32.gmra.mrb[0].mxu0 %v581
        %v1291 = vpop.f32.mrb[0].mxu0
        %v1292 = vadd.f32 0.0, %v1291
        %v1293 = vpop.f32.mrb[0].mxu0
        %v1294 = vadd.f32 0.0, %v1293
        %1295 = vmatprep.mubr.f32.mxu0 0.0
        %1296 = vmatmul.mubr.f32.gmra.mrb[0].mxu0 %v584
        %v1297 = vpop.f32.mrb[0].mxu0
        %v1298 = vadd.f32 0.0, %v1297
        %v1299 = vpop.f32.mrb[0].mxu0
        %v1300 = vadd.f32 0.0, %v1299
        %1301 = vmatprep.mubr.f32.mxu0 0.0
        %1302 = vmatmul.mubr.f32.gmra.mrb[0].mxu0 %v587
        %v1303 = vpop.f32.mrb[0].mxu0
        %v1304 = vadd.f32 0.0, %v1303
        %v1305 = vpop.f32.mrb[0].mxu0
        %v1306 = vadd.f32 0.0, %v1305
        %1307 = vmatprep.mubr.f32.mxu0 0.0
        %1308 = vmatmul.mubr.f32.gmra.mrb[0].mxu0 %v590
        %v1309 = vpop.f32.mrb[0].mxu0
        %v1310 = vadd.f32 0.0, %v1309
        %v1311 = vpop.f32.mrb[0].mxu0
        %v1312 = vadd.f32 0.0, %v1311
        %1313 = vmatprep.mubr.f32.mxu0 0.0
        %1314 = vmatmul.mubr.f32.gmra.mrb[0].mxu0 %v593
        %v1315 = vpop.f32.mrb[0].mxu0
        %v1316 = vadd.f32 0.0, %v1315
        %v1317 = vpop.f32.mrb[0].mxu0
        %v1318 = vadd.f32 0.0, %v1317
        %1319 = vmatprep.mubr.f32.mxu0 0.0
        %1320 = vmatmul.mubr.f32.gmra.mrb[0].mxu0 %v596
        %v1321 = vpop.f32.mrb[0].mxu0
        %v1322 = vadd.f32 0.0, %v1321
        %v1323 = vpop.f32.mrb[0].mxu0
        %v1324 = vadd.f32 0.0, %v1323
        %1325 = vmatprep.mubr.f32.mxu0 0.0
        %1326 = vmatmul.mubr.f32.gmra.mrb[0].mxu0 %v599
        %v1327 = vpop.f32.mrb[0].mxu0
        %v1328 = vadd.f32 0.0, %v1327
        %v1329 = vpop.f32.mrb[0].mxu0
        %v1330 = vadd.f32 0.0, %v1329
        %1331 = vmatprep.mubr.f32.mxu0 0.0
        %1332 = vmatmul.mubr.f32.gmra.mrb[0].mxu0 %v602
        %v1333 = vpop.f32.mrb[0].mxu0
        %v1334 = vadd.f32 0.0, %v1333
        %v1335 = vpop.f32.mrb[0].mxu0
        %v1336 = vadd.f32 0.0, %v1335
        %1337 = vmatprep.mubr.f32.mxu0 0.0
        %1338 = vmatmul.mubr.f32.gmra.mrb[0].mxu0 %v605
        %v1339 = vpop.f32.mrb[0].mxu0
        %v1340 = vadd.f32 0.0, %v1339
        %v1341 = vpop.f32.mrb[0].mxu0
        %v1342 = vadd.f32 0.0, %v1341
        %1343 = vmatprep.mubr.f32.mxu0 0.0
        %1344 = vmatmul.mubr.f32.gmra.mrb[0].mxu0 %v608
        %v1345 = vpop.f32.mrb[0].mxu0
        %v1346 = vadd.f32 0.0, %v1345
        %v1347 = vpop.f32.mrb[0].mxu0
        %v1348 = vadd.f32 0.0, %v1347
        %1349 = vmatprep.mubr.f32.mxu0 0.0
        %1350 = vmatmul.mubr.f32.gmra.mrb[0].mxu0 %v611
        %v1351 = vpop.f32.mrb[0].mxu0
        %v1352 = vadd.f32 0.0, %v1351
        %v1353 = vpop.f32.mrb[0].mxu0
        %v1354 = vadd.f32 0.0, %v1353
        %1355 = vmatprep.mubr.f32.mxu0 0.0
        %1356 = vmatmul.mubr.f32.gmra.mrb[0].mxu0 %v614
        %v1357 = vpop.f32.mrb[0].mxu0
        %v1358 = vadd.f32 0.0, %v1357
        %v1359 = vpop.f32.mrb[0].mxu0
        %v1360 = vadd.f32 0.0, %v1359
        %1361 = vmatprep.mubr.f32.mxu0 0.0
        %1362 = vmatmul.mubr.f32.gmra.mrb[0].mxu0 %v617
        %v1363 = vpop.f32.mrb[0].mxu0
        %v1364 = vadd.f32 0.0, %v1363
        %v1365 = vpop.f32.mrb[0].mxu0
        %v1366 = vadd.f32 0.0, %v1365
        %1367 = vmatprep.mubr.f32.mxu0 0.0
        %1368 = vmatmul.mubr.f32.gmra.mrb[0].mxu0 %v620
        %v1369 = vpop.f32.mrb[0].mxu0
        %v1370 = vadd.f32 0.0, %v1369
        %v1371 = vpop.f32.mrb[0].mxu0
        %v1372 = vadd.f32 0.0, %v1371
        %1373 = vmatprep.mubr.f32.mxu0 0.0
        %1374 = vmatmul.mubr.f32.gmra.mrb[0].mxu0 %v623
        %v1375 = vpop.f32.mrb[0].mxu0
        %v1376 = vadd.f32 0.0, %v1375
        %v1377 = vpop.f32.mrb[0].mxu0
        %v1378 = vadd.f32 0.0, %v1377
        %1379 = vmatprep.mubr.f32.mxu0 0.0
        %1380 = vmatmul.mubr.f32.gmra.mrb[0].mxu0 %v626
        %v1381 = vpop.f32.mrb[0].mxu0
        %v1382 = vadd.f32 0.0, %v1381
        %v1383 = vpop.f32.mrb[0].mxu0
        %v1384 = vadd.f32 0.0, %v1383
        %1385 = vmatprep.mubr.f32.mxu0 0.0
        %1386 = vmatmul.mubr.f32.gmra.mrb[0].mxu0 %v629
        %v1387 = vpop.f32.mrb[0].mxu0
        %v1388 = vadd.f32 0.0, %v1387
        %v1389 = vpop.f32.mrb[0].mxu0
        %v1390 = vadd.f32 0.0, %v1389
        %1391 = vmatprep.mubr.f32.mxu0 0.0
        %1392 = vmatmul.mubr.f32.gmra.mrb[0].mxu0 %v632
        %v1393 = vpop.f32.mrb[0].mxu0
        %v1394 = vadd.f32 0.0, %v1393
        %v1395 = vpop.f32.mrb[0].mxu0
        %v1396 = vadd.f32 0.0, %v1395
        %1397 = vmatprep.mubr.f32.mxu0 0.0
        %1398 = vmatmul.mubr.f32.gmra.mrb[0].mxu0 %v635
        %v1399 = vpop.f32.mrb[0].mxu0
        %v1400 = vadd.f32 0.0, %v1399
        %v1401 = vpop.f32.mrb[0].mxu0
        %v1402 = vadd.f32 0.0, %v1401
        %1403 = vmatprep.mubr.f32.mxu0 0.0
        %1404 = vmatmul.mubr.f32.gmra.mrb[0].mxu0 %v638
        %v1405 = vpop.f32.mrb[0].mxu0
        %v1406 = vadd.f32 0.0, %v1405
        %v1407 = vpop.f32.mrb[0].mxu0
        %v1408 = vadd.f32 0.0, %v1407
        %1409 = vmatprep.mubr.f32.mxu0 0.0
        %1410 = vmatmul.mubr.f32.gmra.mrb[0].mxu0 %v641
        %v1411 = vpop.f32.mrb[0].mxu0
        %v1412 = vadd.f32 0.0, %v1411
        %v1413 = vpop.f32.mrb[0].mxu0
        %v1414 = vadd.f32 0.0, %v1413
        %1415 = vmatprep.mubr.f32.mxu0 0.0
        %1416 = vmatmul.mubr.f32.gmra.mrb[0].mxu0 %v644
        %v1417 = vpop.f32.mrb[0].mxu0
        %v1418 = vadd.f32 0.0, %v1417
        %v1419 = vpop.f32.mrb[0].mxu0
        %v1420 = vadd.f32 0.0, %v1419
        %1421 = vmatprep.mubr.f32.mxu0 0.0
        %1422 = vmatmul.mubr.f32.gmra.mrb[0].mxu0 %v647
        %v1423 = vpop.f32.mrb[0].mxu0
        %v1424 = vadd.f32 0.0, %v1423
        %v1425 = vpop.f32.mrb[0].mxu0
        %v1426 = vadd.f32 0.0, %v1425
        %1427 = vmatprep.mubr.f32.mxu0 0.0
        %1428 = vmatmul.mubr.f32.gmra.mrb[0].mxu0 %v650
        %v1429 = vpop.f32.mrb[0].mxu0
        %v1430 = vadd.f32 0.0, %v1429
        %v1431 = vpop.f32.mrb[0].mxu0
        %v1432 = vadd.f32 0.0, %v1431
        %1433 = vmatprep.mubr.f32.mxu0 0.0
        %1434 = vmatmul.mubr.f32.gmra.mrb[0].mxu0 %v653
        %v1435 = vpop.f32.mrb[0].mxu0
        %v1436 = vadd.f32 0.0, %v1435
        %v1437 = vpop.f32.mrb[0].mxu0
        %v1438 = vadd.f32 0.0, %v1437
        %1439 = vmatprep.mubr.f32.mxu0 0.0
        %1440 = vmatmul.mubr.f32.gmra.mrb[0].mxu0 %v656
        %v1441 = vpop.f32.mrb[0].mxu0
        %v1442 = vadd.f32 0.0, %v1441
        %v1443 = vpop.f32.mrb[0].mxu0
        %v1444 = vadd.f32 0.0, %v1443
        %1445 = vmatprep.mubr.f32.mxu0 0.0
        %1446 = vmatmul.mubr.f32.gmra.mrb[0].mxu0 %v659
        %v1447 = vpop.f32.mrb[0].mxu0
        %v1448 = vadd.f32 0.0, %v1447
        %v1449 = vpop.f32.mrb[0].mxu0
        %v1450 = vadd.f32 0.0, %v1449
        %1451 = vmatprep.mubr.f32.mxu0 0.0
        %1452 = vmatmul.mubr.f32.gmra.mrb[0].mxu0 %v662
        %v1453 = vpop.f32.mrb[0].mxu0
        %v1454 = vadd.f32 0.0, %v1453
        %v1455 = vpop.f32.mrb[0].mxu0
        %v1456 = vadd.f32 0.0, %v1455
        %1457 = vmatprep.mubr.f32.mxu0 0.0
        %1458 = vmatmul.mubr.f32.gmra.mrb[0].mxu0 %v665
        %v1459 = vpop.f32.mrb[0].mxu0
        %v1460 = vadd.f32 0.0, %v1459
        %v1461 = vpop.f32.mrb[0].mxu0
        %v1462 = vadd.f32 0.0, %v1461
        %1463 = vmatprep.mubr.f32.mxu0 0.0
        %1464 = vmatmul.mubr.f32.gmra.mrb[0].mxu0 %v668
        %v1465 = vpop.f32.mrb[0].mxu0
        %v1466 = vadd.f32 0.0, %v1465
        %v1467 = vpop.f32.mrb[0].mxu0
        %v1468 = vadd.f32 0.0, %v1467
        %1469 = vmatprep.mubr.f32.mxu0 0.0
        %1470 = vmatmul.mubr.f32.gmra.mrb[0].mxu0 %v671
        %v1471 = vpop.f32.mrb[0].mxu0
        %v1472 = vadd.f32 0.0, %v1471
        %v1473 = vpop.f32.mrb[0].mxu0
        %v1474 = vadd.f32 0.0, %v1473
        %1475 = vmatprep.mubr.f32.mxu0 0.0
        %1476 = vmatmul.mubr.f32.gmra.mrb[0].mxu0 %v674
        %v1477 = vpop.f32.mrb[0].mxu0
        %v1478 = vadd.f32 0.0, %v1477
        %v1479 = vpop.f32.mrb[0].mxu0
        %v1480 = vadd.f32 0.0, %v1479
        %1481 = vmatprep.mubr.f32.mxu0 0.0
        %1482 = vmatmul.mubr.f32.gmra.mrb[0].mxu0 %v677
        %v1483 = vpop.f32.mrb[0].mxu0
        %v1484 = vadd.f32 0.0, %v1483
        %v1485 = vpop.f32.mrb[0].mxu0
        %v1486 = vadd.f32 0.0, %v1485
        %1487 = vmatprep.mubr.f32.mxu0 0.0
        %1488 = vmatmul.mubr.f32.gmra.mrb[0].mxu0 %v680
        %v1489 = vpop.f32.mrb[0].mxu0
        %v1490 = vadd.f32 0.0, %v1489
        %v1491 = vpop.f32.mrb[0].mxu0
        %v1492 = vadd.f32 0.0, %v1491
        %1493 = vmatprep.mubr.f32.mxu0 0.0
        %1494 = vmatmul.mubr.f32.gmra.mrb[0].mxu0 %v683
        %v1495 = vpop.f32.mrb[0].mxu0
        %v1496 = vadd.f32 0.0, %v1495
        %v1497 = vpop.f32.mrb[0].mxu0
        %v1498 = vadd.f32 0.0, %v1497
        %1499 = vmatprep.mubr.f32.mxu0 0.0
        %1500 = vmatmul.mubr.f32.gmra.mrb[0].mxu0 %v686
        %v1501 = vpop.f32.mrb[0].mxu0
        %v1502 = vadd.f32 0.0, %v1501
        %v1503 = vpop.f32.mrb[0].mxu0
        %v1504 = vadd.f32 0.0, %v1503
        %1505 = vmatprep.mubr.f32.mxu0 0.0
        %1506 = vmatmul.mubr.f32.gmra.mrb[0].mxu0 %v689
        %v1507 = vpop.f32.mrb[0].mxu0
        %v1508 = vadd.f32 0.0, %v1507
        %v1509 = vpop.f32.mrb[0].mxu0
        %v1510 = vadd.f32 0.0, %v1509
        %1511 = vmatprep.mubr.f32.mxu0 0.0
        %1512 = vmatmul.mubr.f32.gmra.mrb[0].mxu0 %v692
        %v1513 = vpop.f32.mrb[0].mxu0
        %v1514 = vadd.f32 0.0, %v1513
        %v1515 = vpop.f32.mrb[0].mxu0
        %v1516 = vadd.f32 0.0, %v1515
        %1517 = vmatprep.mubr.f32.mxu0 0.0
        %1518 = vmatmul.mubr.f32.gmra.mrb[0].mxu0 %v695
        %v1519 = vpop.f32.mrb[0].mxu0
        %v1520 = vadd.f32 0.0, %v1519
        %v1521 = vpop.f32.mrb[0].mxu0
        %v1522 = vadd.f32 0.0, %v1521
        %1523 = vmatprep.mubr.f32.mxu0 0.0
        %1524 = vmatmul.mubr.f32.gmra.mrb[0].mxu0 %v698
        %v1525 = vpop.f32.mrb[0].mxu0
        %v1526 = vadd.f32 0.0, %v1525
        %v1527 = vpop.f32.mrb[0].mxu0
        %v1528 = vadd.f32 0.0, %v1527
        %1529 = vmatprep.mubr.f32.mxu0 0.0
        %1530 = vmatmul.mubr.f32.gmra.mrb[0].mxu0 %v701
        %v1531 = vpop.f32.mrb[0].mxu0
        %v1532 = vadd.f32 0.0, %v1531
        %v1533 = vpop.f32.mrb[0].mxu0
        %v1534 = vadd.f32 0.0, %v1533
        %1535 = vmatprep.mubr.f32.mxu0 0.0
        %1536 = vmatmul.mubr.f32.gmra.mrb[0].mxu0 %v704
        %v1537 = vpop.f32.mrb[0].mxu0
        %v1538 = vadd.f32 0.0, %v1537
        %v1539 = vpop.f32.mrb[0].mxu0
        %v1540 = vadd.f32 0.0, %v1539
        %1541 = vmatprep.mubr.f32.mxu0 0.0
        %1542 = vmatmul.mubr.f32.gmra.mrb[0].mxu0 %v707
        %v1543 = vpop.f32.mrb[0].mxu0
        %v1544 = vadd.f32 0.0, %v1543
        %v1545 = vpop.f32.mrb[0].mxu0
        %v1546 = vadd.f32 0.0, %v1545
        %1547 = vmatprep.mubr.f32.mxu0 0.0
        %1548 = vmatmul.mubr.f32.gmra.mrb[0].mxu0 %v710
        %v1549 = vpop.f32.mrb[0].mxu0
        %v1550 = vadd.f32 0.0, %v1549
        %v1551 = vpop.f32.mrb[0].mxu0
        %v1552 = vadd.f32 0.0, %v1551
        %1553 = vmatprep.mubr.f32.mxu0 0.0
        %1554 = vmatmul.mubr.f32.gmra.mrb[0].mxu0 %v713
        %v1555 = vpop.f32.mrb[0].mxu0
        %v1556 = vadd.f32 0.0, %v1555
        %v1557 = vpop.f32.mrb[0].mxu0
        %v1558 = vadd.f32 0.0, %v1557
        %1559 = vmatprep.mubr.f32.mxu0 0.0
        %1560 = vmatmul.mubr.f32.gmra.mrb[0].mxu0 %v716
        %v1561 = vpop.f32.mrb[0].mxu0
        %v1562 = vadd.f32 0.0, %v1561
        %v1563 = vpop.f32.mrb[0].mxu0
        %v1564 = vadd.f32 0.0, %v1563
        %1565 = vmatprep.mubr.f32.mxu0 0.0
        %1566 = vmatmul.mubr.f32.gmra.mrb[0].mxu0 %v719
        %v1567 = vpop.f32.mrb[0].mxu0
        %v1568 = vadd.f32 0.0, %v1567
        %v1569 = vpop.f32.mrb[0].mxu0
        %v1570 = vadd.f32 0.0, %v1569
        %1571 = vmatprep.mubr.f32.mxu0 0.0
        %1572 = vmatmul.mubr.f32.gmra.mrb[0].mxu0 %v722
        %v1573 = vpop.f32.mrb[0].mxu0
        %v1574 = vadd.f32 0.0, %v1573
        %v1575 = vpop.f32.mrb[0].mxu0
        %v1576 = vadd.f32 0.0, %v1575
        %1577 = vmatprep.mubr.f32.mxu0 0.0
        %1578 = vmatmul.mubr.f32.gmra.mrb[0].mxu0 %v725
        %v1579 = vpop.f32.mrb[0].mxu0
        %v1580 = vadd.f32 0.0, %v1579
        %v1581 = vpop.f32.mrb[0].mxu0
        %v1582 = vadd.f32 0.0, %v1581
        %1583 = vmatprep.mubr.f32.mxu0 0.0
        %1584 = vmatmul.mubr.f32.gmra.mrb[0].mxu0 %v728
        %v1585 = vpop.f32.mrb[0].mxu0
        %v1586 = vadd.f32 0.0, %v1585
        %v1587 = vpop.f32.mrb[0].mxu0
        %v1588 = vadd.f32 0.0, %v1587
        %1589 = vmatprep.mubr.f32.mxu0 0.0
        %1590 = vmatmul.mubr.f32.gmra.mrb[0].mxu0 %v731
        %v1591 = vpop.f32.mrb[0].mxu0
        %v1592 = vadd.f32 0.0, %v1591
        %v1593 = vpop.f32.mrb[0].mxu0
        %v1594 = vadd.f32 0.0, %v1593
        %1595 = vmatprep.mubr.f32.mxu0 0.0
        %1596 = vmatmul.mubr.f32.gmra.mrb[0].mxu0 %v734
        %v1597 = vpop.f32.mrb[0].mxu0
        %v1598 = vadd.f32 0.0, %v1597
        %v1599 = vpop.f32.mrb[0].mxu0
        %v1600 = vadd.f32 0.0, %v1599
        %1601 = vmatprep.mubr.f32.mxu0 0.0
        %1602 = vmatmul.mubr.f32.gmra.mrb[0].mxu0 %v737
        %v1603 = vpop.f32.mrb[0].mxu0
        %v1604 = vadd.f32 0.0, %v1603
        %v1605 = vpop.f32.mrb[0].mxu0
        %v1606 = vadd.f32 0.0, %v1605
        %1607 = vmatprep.mubr.f32.mxu0 0.0
        %1608 = vmatmul.mubr.f32.gmra.mrb[0].mxu0 %v740
        %v1609 = vpop.f32.mrb[0].mxu0
        %v1610 = vadd.f32 0.0, %v1609
        %v1611 = vpop.f32.mrb[0].mxu0
        %v1612 = vadd.f32 0.0, %v1611
        %1613 = vmatprep.mubr.f32.mxu0 0.0
        %1614 = vmatmul.mubr.f32.gmra.mrb[0].mxu0 %v743
        %v1615 = vpop.f32.mrb[0].mxu0
        %v1616 = vadd.f32 0.0, %v1615
        %v1617 = vpop.f32.mrb[0].mxu0
        %v1618 = vadd.f32 0.0, %v1617
        %1619 = vmatprep.mubr.f32.mxu0 0.0
        %1620 = vmatmul.mubr.f32.gmra.mrb[0].mxu0 %v746
        %v1621 = vpop.f32.mrb[0].mxu0
        %v1622 = vadd.f32 0.0, %v1621
        %v1623 = vpop.f32.mrb[0].mxu0
        %v1624 = vadd.f32 0.0, %v1623
        %1625 = vmatprep.mubr.f32.mxu0 0.0
        %1626 = vmatmul.mubr.f32.gmra.mrb[0].mxu0 %v749
        %v1627 = vpop.f32.mrb[0].mxu0
        %v1628 = vadd.f32 0.0, %v1627
        %v1629 = vpop.f32.mrb[0].mxu0
        %v1630 = vadd.f32 0.0, %v1629
        %1631 = vmatprep.mubr.f32.mxu0 0.0
        %1632 = vmatmul.mubr.f32.gmra.mrb[0].mxu0 %v752
        %v1633 = vpop.f32.mrb[0].mxu0
        %v1634 = vadd.f32 0.0, %v1633
        %v1635 = vpop.f32.mrb[0].mxu0
        %v1636 = vadd.f32 0.0, %v1635
        %1637 = vmatprep.mubr.f32.mxu0 0.0
        %1638 = vmatmul.mubr.f32.gmra.mrb[0].mxu0 %v755
        %v1639 = vpop.f32.mrb[0].mxu0
        %v1640 = vadd.f32 0.0, %v1639
        %v1641 = vpop.f32.mrb[0].mxu0
        %v1642 = vadd.f32 0.0, %v1641
        %1643 = vmatprep.mubr.f32.mxu0 0.0
        %1644 = vmatmul.mubr.f32.gmra.mrb[0].mxu0 %v758
        %v1645 = vpop.f32.mrb[0].mxu0
        %v1646 = vadd.f32 0.0, %v1645
        %v1647 = vpop.f32.mrb[0].mxu0
        %v1648 = vadd.f32 0.0, %v1647
        %1649 = vmatprep.mubr.f32.mxu0 0.0
        %1650 = vmatmul.mubr.f32.gmra.mrb[0].mxu0 %v761
        %v1651 = vpop.f32.mrb[0].mxu0
        %v1652 = vadd.f32 0.0, %v1651
        %v1653 = vpop.f32.mrb[0].mxu0
        %v1654 = vadd.f32 0.0, %v1653
        %1655 = vmatprep.mubr.f32.mxu0 0.0
        %1656 = vmatmul.mubr.f32.gmra.mrb[0].mxu0 %v764
        %v1657 = vpop.f32.mrb[0].mxu0
        %v1658 = vadd.f32 0.0, %v1657
        %v1659 = vpop.f32.mrb[0].mxu0
        %v1660 = vadd.f32 0.0, %v1659
        %1661 = vmatprep.mubr.f32.mxu0 0.0
        %1662 = vmatmul.mubr.f32.gmra.mrb[0].mxu0 %v767
        %v1663 = vpop.f32.mrb[0].mxu0
        %v1664 = vadd.f32 0.0, %v1663
        %v1665 = vpop.f32.mrb[0].mxu0
        %v1666 = vadd.f32 0.0, %v1665
        %1667 = vmatprep.mubr.f32.mxu0 0.0
        %1668 = vmatmul.mubr.f32.gmra.mrb[0].mxu0 %v770
        %v1669 = vpop.f32.mrb[0].mxu0
        %v1670 = vadd.f32 0.0, %v1669
        %v1671 = vpop.f32.mrb[0].mxu0
        %v1672 = vadd.f32 0.0, %v1671
        %1673 = vmatprep.mubr.f32.mxu0 0.0
        %1674 = vmatmul.mubr.f32.gmra.mrb[0].mxu0 %v773
        %v1675 = vpop.f32.mrb[0].mxu0
        %v1676 = vadd.f32 0.0, %v1675
        %v1677 = vpop.f32.mrb[0].mxu0
        %v1678 = vadd.f32 0.0, %v1677
        %1679 = vmatprep.mubr.f32.mxu0 0.0
        %1680 = vmatmul.mubr.f32.gmra.mrb[0].mxu0 %v776
        %v1681 = vpop.f32.mrb[0].mxu0
        %v1682 = vadd.f32 0.0, %v1681
        %v1683 = vpop.f32.mrb[0].mxu0
        %v1684 = vadd.f32 0.0, %v1683
        %1685 = vmatprep.mubr.f32.mxu0 0.0
        %1686 = vmatmul.mubr.f32.gmra.mrb[0].mxu0 %v779
        %v1687 = vpop.f32.mrb[0].mxu0
        %v1688 = vadd.f32 0.0, %v1687
        %v1689 = vpop.f32.mrb[0].mxu0
        %v1690 = vadd.f32 0.0, %v1689
        %1691 = vmatprep.mubr.f32.mxu0 0.0
        %1692 = vmatmul.mubr.f32.gmra.mrb[0].mxu0 %v782
        %v1693 = vpop.f32.mrb[0].mxu0
        %v1694 = vadd.f32 0.0, %v1693
        %v1695 = vpop.f32.mrb[0].mxu0
        %v1696 = vadd.f32 0.0, %v1695
        %1697 = vmatprep.mubr.f32.mxu0 0.0
        %1698 = vmatmul.mubr.f32.gmra.mrb[0].mxu0 %v785
        %v1699 = vpop.f32.mrb[0].mxu0
        %v1700 = vadd.f32 0.0, %v1699
        %v1701 = vpop.f32.mrb[0].mxu0
        %v1702 = vadd.f32 0.0, %v1701
        %1703 = vmatprep.mubr.f32.mxu0 0.0
        %1704 = vmatmul.mubr.f32.gmra.mrb[0].mxu0 %v788
        %v1705 = vpop.f32.mrb[0].mxu0
        %v1706 = vadd.f32 0.0, %v1705
        %v1707 = vpop.f32.mrb[0].mxu0
        %v1708 = vadd.f32 0.0, %v1707
        %1709 = vmatprep.mubr.f32.mxu0 0.0
        %1710 = vmatmul.mubr.f32.gmra.mrb[0].mxu0 %v791
        %v1711 = vpop.f32.mrb[0].mxu0
        %v1712 = vadd.f32 0.0, %v1711
        %v1713 = vpop.f32.mrb[0].mxu0
        %v1714 = vadd.f32 0.0, %v1713
        %1715 = vmatprep.mubr.f32.mxu0 0.0
        %1716 = vmatmul.mubr.f32.gmra.mrb[0].mxu0 %v794
        %v1717 = vpop.f32.mrb[0].mxu0
        %v1718 = vadd.f32 0.0, %v1717
        %v1719 = vpop.f32.mrb[0].mxu0
        %v1720 = vadd.f32 0.0, %v1719
        %1721 = vmatprep.mubr.f32.mxu0 0.0
        %1722 = vmatmul.mubr.f32.gmra.mrb[0].mxu0 %v797
        %v1723 = vpop.f32.mrb[0].mxu0
        %v1724 = vadd.f32 0.0, %v1723
        %v1725 = vpop.f32.mrb[0].mxu0
        %v1726 = vadd.f32 0.0, %v1725
        %1727 = vdwg.mxu0
        %s1728 = smul.u32 %s25, 1024
        %v1729 = vlaneseq
        %v1730 = vshrl.u32 %v1729, 7
        %v1731 = vadd.s32 %v1730, 8
        %v1732 = vadd.s32 %v1730, 16
        %v1733 = vadd.s32 %v1730, 24
        %v1734 = vadd.s32 %v1730, 32
        %v1735 = vadd.s32 %v1730, 40
        %v1736 = vadd.s32 %v1730, 48
        %v1737 = vadd.s32 %v1730, 56
        %v1738 = vadd.s32 %v1730, 64
        %v1739 = vadd.s32 %v1730, 72
        %v1740 = vadd.s32 %v1730, 80
        %v1741 = vadd.s32 %v1730, 88
        %v1742 = vadd.s32 %v1730, 96
        %v1743 = vadd.s32 %v1730, 104
        %v1744 = vadd.s32 %v1730, 112
        %v1745 = vadd.s32 %v1730, 120
        %v1746 = vadd.s32 %v1730, 128
        %v1747 = vadd.s32 %v1730, 136
        %v1748 = vadd.s32 %v1730, 144
        %v1749 = vadd.s32 %v1730, 152
        %v1750 = vadd.s32 %v1730, 160
        %v1751 = vadd.s32 %v1730, 168
        %v1752 = vadd.s32 %v1730, 176
        %v1753 = vadd.s32 %v1730, 184
        %v1754 = vadd.s32 %v1730, 192
        %v1755 = vadd.s32 %v1730, 200
        %v1756 = vadd.s32 %v1730, 208
        %v1757 = vadd.s32 %v1730, 216
        %v1758 = vadd.s32 %v1730, 224
        %v1759 = vadd.s32 %v1730, 232
        %v1760 = vadd.s32 %v1730, 240
        %v1761 = vadd.s32 %v1730, 248
        %v1762 = vadd.s32 %v1730, 256
        %v1763 = vadd.s32 %v1730, 264
        %v1764 = vadd.s32 %v1730, 272
        %v1765 = vadd.s32 %v1730, 280
        %v1766 = vadd.s32 %v1730, 288
        %v1767 = vadd.s32 %v1730, 296
        %v1768 = vadd.s32 %v1730, 304
        %v1769 = vadd.s32 %v1730, 312
        %v1770 = vadd.s32 %v1730, 320
        %v1771 = vadd.s32 %v1730, 328
        %v1772 = vadd.s32 %v1730, 336
        %v1773 = vadd.s32 %v1730, 344
        %v1774 = vadd.s32 %v1730, 352
        %v1775 = vadd.s32 %v1730, 360
        %v1776 = vadd.s32 %v1730, 368
        %v1777 = vadd.s32 %v1730, 376
        %v1778 = vadd.s32 %v1730, 384
        %v1779 = vadd.s32 %v1730, 392
        %v1780 = vadd.s32 %v1730, 400
        %v1781 = vadd.s32 %v1730, 408
        %v1782 = vadd.s32 %v1730, 416
        %v1783 = vadd.s32 %v1730, 424
        %v1784 = vadd.s32 %v1730, 432
        %v1785 = vadd.s32 %v1730, 440
        %v1786 = vadd.s32 %v1730, 448
        %v1787 = vadd.s32 %v1730, 456
        %v1788 = vadd.s32 %v1730, 464
        %v1789 = vadd.s32 %v1730, 472
        %v1790 = vadd.s32 %v1730, 480
        %v1791 = vadd.s32 %v1730, 488
        %v1792 = vadd.s32 %v1730, 496
        %v1793 = vadd.s32 %v1730, 504
        %v1794 = vadd.s32 %v1730, 512
        %v1795 = vadd.s32 %v1730, 520
        %v1796 = vadd.s32 %v1730, 528
        %v1797 = vadd.s32 %v1730, 536
        %v1798 = vadd.s32 %v1730, 544
        %v1799 = vadd.s32 %v1730, 552
        %v1800 = vadd.s32 %v1730, 560
        %v1801 = vadd.s32 %v1730, 568
        %v1802 = vadd.s32 %v1730, 576
        %v1803 = vadd.s32 %v1730, 584
        %v1804 = vadd.s32 %v1730, 592
        %v1805 = vadd.s32 %v1730, 600
        %v1806 = vadd.s32 %v1730, 608
        %v1807 = vadd.s32 %v1730, 616
        %v1808 = vadd.s32 %v1730, 624
        %v1809 = vadd.s32 %v1730, 632
        %v1810 = vadd.s32 %v1730, 640
        %v1811 = vadd.s32 %v1730, 648
        %v1812 = vadd.s32 %v1730, 656
        %v1813 = vadd.s32 %v1730, 664
        %v1814 = vadd.s32 %v1730, 672
        %v1815 = vadd.s32 %v1730, 680
        %v1816 = vadd.s32 %v1730, 688
        %v1817 = vadd.s32 %v1730, 696
        %v1818 = vadd.s32 %v1730, 704
        %v1819 = vadd.s32 %v1730, 712
        %v1820 = vadd.s32 %v1730, 720
        %v1821 = vadd.s32 %v1730, 728
        %v1822 = vadd.s32 %v1730, 736
        %v1823 = vadd.s32 %v1730, 744
        %v1824 = vadd.s32 %v1730, 752
        %v1825 = vadd.s32 %v1730, 760
        %v1826 = vadd.s32 %v1730, 768
        %v1827 = vadd.s32 %v1730, 776
        %v1828 = vadd.s32 %v1730, 784
        %v1829 = vadd.s32 %v1730, 792
        %v1830 = vadd.s32 %v1730, 800
        %v1831 = vadd.s32 %v1730, 808
        %v1832 = vadd.s32 %v1730, 816
        %v1833 = vadd.s32 %v1730, 824
        %v1834 = vadd.s32 %v1730, 832
        %v1835 = vadd.s32 %v1730, 840
        %v1836 = vadd.s32 %v1730, 848
        %v1837 = vadd.s32 %v1730, 856
        %v1838 = vadd.s32 %v1730, 864
        %v1839 = vadd.s32 %v1730, 872
        %v1840 = vadd.s32 %v1730, 880
        %v1841 = vadd.s32 %v1730, 888
        %v1842 = vadd.s32 %v1730, 896
        %v1843 = vadd.s32 %v1730, 904
        %v1844 = vadd.s32 %v1730, 912
        %v1845 = vadd.s32 %v1730, 920
        %v1846 = vadd.s32 %v1730, 928
        %v1847 = vadd.s32 %v1730, 936
        %v1848 = vadd.s32 %v1730, 944
        %v1849 = vadd.s32 %v1730, 952
        %v1850 = vadd.s32 %v1730, 960
        %v1851 = vadd.s32 %v1730, 968
        %v1852 = vadd.s32 %v1730, 976
        %v1853 = vadd.s32 %v1730, 984
        %v1854 = vadd.s32 %v1730, 992
        %v1855 = vadd.s32 %v1730, 1000
        %v1856 = vadd.s32 %v1730, 1008
        %v1857 = vadd.s32 %v1730, 1016
        %v1858 = vstv %s1728
        %v1859 = vadd.s32 %v1858, %v1730
        %v1860 = vadd.s32 %v1858, %v1731
        %v1861 = vadd.s32 %v1858, %v1732
        %v1862 = vadd.s32 %v1858, %v1733
        %v1863 = vadd.s32 %v1858, %v1734
        %v1864 = vadd.s32 %v1858, %v1735
        %v1865 = vadd.s32 %v1858, %v1736
        %v1866 = vadd.s32 %v1858, %v1737
        %v1867 = vadd.s32 %v1858, %v1738
        %v1868 = vadd.s32 %v1858, %v1739
        %v1869 = vadd.s32 %v1858, %v1740
        %v1870 = vadd.s32 %v1858, %v1741
        %v1871 = vadd.s32 %v1858, %v1742
        %v1872 = vadd.s32 %v1858, %v1743
        %v1873 = vadd.s32 %v1858, %v1744
        %v1874 = vadd.s32 %v1858, %v1745
        %v1875 = vadd.s32 %v1858, %v1746
        %v1876 = vadd.s32 %v1858, %v1747
        %v1877 = vadd.s32 %v1858, %v1748
        %v1878 = vadd.s32 %v1858, %v1749
        %v1879 = vadd.s32 %v1858, %v1750
        %v1880 = vadd.s32 %v1858, %v1751
        %v1881 = vadd.s32 %v1858, %v1752
        %v1882 = vadd.s32 %v1858, %v1753
        %v1883 = vadd.s32 %v1858, %v1754
        %v1884 = vadd.s32 %v1858, %v1755
        %v1885 = vadd.s32 %v1858, %v1756
        %v1886 = vadd.s32 %v1858, %v1757
        %v1887 = vadd.s32 %v1858, %v1758
        %v1888 = vadd.s32 %v1858, %v1759
        %v1889 = vadd.s32 %v1858, %v1760
        %v1890 = vadd.s32 %v1858, %v1761
        %v1891 = vadd.s32 %v1858, %v1762
        %v1892 = vadd.s32 %v1858, %v1763
        %v1893 = vadd.s32 %v1858, %v1764
        %v1894 = vadd.s32 %v1858, %v1765
        %v1895 = vadd.s32 %v1858, %v1766
        %v1896 = vadd.s32 %v1858, %v1767
        %v1897 = vadd.s32 %v1858, %v1768
        %v1898 = vadd.s32 %v1858, %v1769
        %v1899 = vadd.s32 %v1858, %v1770
        %v1900 = vadd.s32 %v1858, %v1771
        %v1901 = vadd.s32 %v1858, %v1772
        %v1902 = vadd.s32 %v1858, %v1773
        %v1903 = vadd.s32 %v1858, %v1774
        %v1904 = vadd.s32 %v1858, %v1775
        %v1905 = vadd.s32 %v1858, %v1776
        %v1906 = vadd.s32 %v1858, %v1777
        %v1907 = vadd.s32 %v1858, %v1778
        %v1908 = vadd.s32 %v1858, %v1779
        %v1909 = vadd.s32 %v1858, %v1780
        %v1910 = vadd.s32 %v1858, %v1781
        %v1911 = vadd.s32 %v1858, %v1782
        %v1912 = vadd.s32 %v1858, %v1783
        %v1913 = vadd.s32 %v1858, %v1784
        %v1914 = vadd.s32 %v1858, %v1785
        %v1915 = vadd.s32 %v1858, %v1786
        %v1916 = vadd.s32 %v1858, %v1787
        %v1917 = vadd.s32 %v1858, %v1788
        %v1918 = vadd.s32 %v1858, %v1789
        %v1919 = vadd.s32 %v1858, %v1790
        %v1920 = vadd.s32 %v1858, %v1791
        %v1921 = vadd.s32 %v1858, %v1792
        %v1922 = vadd.s32 %v1858, %v1793
        %v1923 = vadd.s32 %v1858, %v1794
        %v1924 = vadd.s32 %v1858, %v1795
        %v1925 = vadd.s32 %v1858, %v1796
        %v1926 = vadd.s32 %v1858, %v1797
        %v1927 = vadd.s32 %v1858, %v1798
        %v1928 = vadd.s32 %v1858, %v1799
        %v1929 = vadd.s32 %v1858, %v1800
        %v1930 = vadd.s32 %v1858, %v1801
        %v1931 = vadd.s32 %v1858, %v1802
        %v1932 = vadd.s32 %v1858, %v1803
        %v1933 = vadd.s32 %v1858, %v1804
        %v1934 = vadd.s32 %v1858, %v1805
        %v1935 = vadd.s32 %v1858, %v1806
        %v1936 = vadd.s32 %v1858, %v1807
        %v1937 = vadd.s32 %v1858, %v1808
        %v1938 = vadd.s32 %v1858, %v1809
        %v1939 = vadd.s32 %v1858, %v1810
        %v1940 = vadd.s32 %v1858, %v1811
        %v1941 = vadd.s32 %v1858, %v1812
        %v1942 = vadd.s32 %v1858, %v1813
        %v1943 = vadd.s32 %v1858, %v1814
        %v1944 = vadd.s32 %v1858, %v1815
        %v1945 = vadd.s32 %v1858, %v1816
        %v1946 = vadd.s32 %v1858, %v1817
        %v1947 = vadd.s32 %v1858, %v1818
        %v1948 = vadd.s32 %v1858, %v1819
        %v1949 = vadd.s32 %v1858, %v1820
        %v1950 = vadd.s32 %v1858, %v1821
        %v1951 = vadd.s32 %v1858, %v1822
        %v1952 = vadd.s32 %v1858, %v1823
        %v1953 = vadd.s32 %v1858, %v1824
        %v1954 = vadd.s32 %v1858, %v1825
        %v1955 = vadd.s32 %v1858, %v1826
        %v1956 = vadd.s32 %v1858, %v1827
        %v1957 = vadd.s32 %v1858, %v1828
        %v1958 = vadd.s32 %v1858, %v1829
        %v1959 = vadd.s32 %v1858, %v1830
        %v1960 = vadd.s32 %v1858, %v1831
        %v1961 = vadd.s32 %v1858, %v1832
        %v1962 = vadd.s32 %v1858, %v1833
        %v1963 = vadd.s32 %v1858, %v1834
        %v1964 = vadd.s32 %v1858, %v1835
        %v1965 = vadd.s32 %v1858, %v1836
        %v1966 = vadd.s32 %v1858, %v1837
        %v1967 = vadd.s32 %v1858, %v1838
        %v1968 = vadd.s32 %v1858, %v1839
        %v1969 = vadd.s32 %v1858, %v1840
        %v1970 = vadd.s32 %v1858, %v1841
        %v1971 = vadd.s32 %v1858, %v1842
        %v1972 = vadd.s32 %v1858, %v1843
        %v1973 = vadd.s32 %v1858, %v1844
        %v1974 = vadd.s32 %v1858, %v1845
        %v1975 = vadd.s32 %v1858, %v1846
        %v1976 = vadd.s32 %v1858, %v1847
        %v1977 = vadd.s32 %v1858, %v1848
        %v1978 = vadd.s32 %v1858, %v1849
        %v1979 = vadd.s32 %v1858, %v1850
        %v1980 = vadd.s32 %v1858, %v1851
        %v1981 = vadd.s32 %v1858, %v1852
        %v1982 = vadd.s32 %v1858, %v1853
        %v1983 = vadd.s32 %v1858, %v1854
        %v1984 = vadd.s32 %v1858, %v1855
        %v1985 = vadd.s32 %v1858, %v1856
        %v1986 = vadd.s32 %v1858, %v1857
        %vm1987 = vcmp.lt.s32.totalorder %v1859, 1300
        %vm1988 = vcmp.lt.s32.totalorder %v1860, 1300
        %vm1989 = vcmp.lt.s32.totalorder %v1861, 1300
        %vm1990 = vcmp.lt.s32.totalorder %v1862, 1300
        %vm1991 = vcmp.lt.s32.totalorder %v1863, 1300
        %vm1992 = vcmp.lt.s32.totalorder %v1864, 1300
        %vm1993 = vcmp.lt.s32.totalorder %v1865, 1300
        %vm1994 = vcmp.lt.s32.totalorder %v1866, 1300
        %vm1995 = vcmp.lt.s32.totalorder %v1867, 1300
        %vm1996 = vcmp.lt.s32.totalorder %v1868, 1300
        %vm1997 = vcmp.lt.s32.totalorder %v1869, 1300
        %vm1998 = vcmp.lt.s32.totalorder %v1870, 1300
        %vm1999 = vcmp.lt.s32.totalorder %v1871, 1300
        %vm2000 = vcmp.lt.s32.totalorder %v1872, 1300
        %vm2001 = vcmp.lt.s32.totalorder %v1873, 1300
        %vm2002 = vcmp.lt.s32.totalorder %v1874, 1300
        %vm2003 = vcmp.lt.s32.totalorder %v1875, 1300
        %vm2004 = vcmp.lt.s32.totalorder %v1876, 1300
        %vm2005 = vcmp.lt.s32.totalorder %v1877, 1300
        %vm2006 = vcmp.lt.s32.totalorder %v1878, 1300
        %vm2007 = vcmp.lt.s32.totalorder %v1879, 1300
        %vm2008 = vcmp.lt.s32.totalorder %v1880, 1300
        %vm2009 = vcmp.lt.s32.totalorder %v1881, 1300
        %vm2010 = vcmp.lt.s32.totalorder %v1882, 1300
        %vm2011 = vcmp.lt.s32.totalorder %v1883, 1300
        %vm2012 = vcmp.lt.s32.totalorder %v1884, 1300
        %vm2013 = vcmp.lt.s32.totalorder %v1885, 1300
        %vm2014 = vcmp.lt.s32.totalorder %v1886, 1300
        %vm2015 = vcmp.lt.s32.totalorder %v1887, 1300
        %vm2016 = vcmp.lt.s32.totalorder %v1888, 1300
        %vm2017 = vcmp.lt.s32.totalorder %v1889, 1300
        %vm2018 = vcmp.lt.s32.totalorder %v1890, 1300
        %vm2019 = vcmp.lt.s32.totalorder %v1891, 1300
        %vm2020 = vcmp.lt.s32.totalorder %v1892, 1300
        %vm2021 = vcmp.lt.s32.totalorder %v1893, 1300
        %vm2022 = vcmp.lt.s32.totalorder %v1894, 1300
        %vm2023 = vcmp.lt.s32.totalorder %v1895, 1300
        %vm2024 = vcmp.lt.s32.totalorder %v1896, 1300
        %vm2025 = vcmp.lt.s32.totalorder %v1897, 1300
        %vm2026 = vcmp.lt.s32.totalorder %v1898, 1300
        %vm2027 = vcmp.lt.s32.totalorder %v1899, 1300
        %vm2028 = vcmp.lt.s32.totalorder %v1900, 1300
        %vm2029 = vcmp.lt.s32.totalorder %v1901, 1300
        %vm2030 = vcmp.lt.s32.totalorder %v1902, 1300
        %vm2031 = vcmp.lt.s32.totalorder %v1903, 1300
        %vm2032 = vcmp.lt.s32.totalorder %v1904, 1300
        %vm2033 = vcmp.lt.s32.totalorder %v1905, 1300
        %vm2034 = vcmp.lt.s32.totalorder %v1906, 1300
        %vm2035 = vcmp.lt.s32.totalorder %v1907, 1300
        %vm2036 = vcmp.lt.s32.totalorder %v1908, 1300
        %vm2037 = vcmp.lt.s32.totalorder %v1909, 1300
        %vm2038 = vcmp.lt.s32.totalorder %v1910, 1300
        %vm2039 = vcmp.lt.s32.totalorder %v1911, 1300
        %vm2040 = vcmp.lt.s32.totalorder %v1912, 1300
        %vm2041 = vcmp.lt.s32.totalorder %v1913, 1300
        %vm2042 = vcmp.lt.s32.totalorder %v1914, 1300
        %vm2043 = vcmp.lt.s32.totalorder %v1915, 1300
        %vm2044 = vcmp.lt.s32.totalorder %v1916, 1300
        %vm2045 = vcmp.lt.s32.totalorder %v1917, 1300
        %vm2046 = vcmp.lt.s32.totalorder %v1918, 1300
        %vm2047 = vcmp.lt.s32.totalorder %v1919, 1300
        %vm2048 = vcmp.lt.s32.totalorder %v1920, 1300
        %vm2049 = vcmp.lt.s32.totalorder %v1921, 1300
        %vm2050 = vcmp.lt.s32.totalorder %v1922, 1300
        %vm2051 = vcmp.lt.s32.totalorder %v1923, 1300
        %vm2052 = vcmp.lt.s32.totalorder %v1924, 1300
        %vm2053 = vcmp.lt.s32.totalorder %v1925, 1300
        %vm2054 = vcmp.lt.s32.totalorder %v1926, 1300
        %vm2055 = vcmp.lt.s32.totalorder %v1927, 1300
        %vm2056 = vcmp.lt.s32.totalorder %v1928, 1300
        %vm2057 = vcmp.lt.s32.totalorder %v1929, 1300
        %vm2058 = vcmp.lt.s32.totalorder %v1930, 1300
        %vm2059 = vcmp.lt.s32.totalorder %v1931, 1300
        %vm2060 = vcmp.lt.s32.totalorder %v1932, 1300
        %vm2061 = vcmp.lt.s32.totalorder %v1933, 1300
        %vm2062 = vcmp.lt.s32.totalorder %v1934, 1300
        %vm2063 = vcmp.lt.s32.totalorder %v1935, 1300
        %vm2064 = vcmp.lt.s32.totalorder %v1936, 1300
        %vm2065 = vcmp.lt.s32.totalorder %v1937, 1300
        %vm2066 = vcmp.lt.s32.totalorder %v1938, 1300
        %vm2067 = vcmp.lt.s32.totalorder %v1939, 1300
        %vm2068 = vcmp.lt.s32.totalorder %v1940, 1300
        %vm2069 = vcmp.lt.s32.totalorder %v1941, 1300
        %vm2070 = vcmp.lt.s32.totalorder %v1942, 1300
        %vm2071 = vcmp.lt.s32.totalorder %v1943, 1300
        %vm2072 = vcmp.lt.s32.totalorder %v1944, 1300
        %vm2073 = vcmp.lt.s32.totalorder %v1945, 1300
        %vm2074 = vcmp.lt.s32.totalorder %v1946, 1300
        %vm2075 = vcmp.lt.s32.totalorder %v1947, 1300
        %vm2076 = vcmp.lt.s32.totalorder %v1948, 1300
        %vm2077 = vcmp.lt.s32.totalorder %v1949, 1300
        %vm2078 = vcmp.lt.s32.totalorder %v1950, 1300
        %vm2079 = vcmp.lt.s32.totalorder %v1951, 1300
        %vm2080 = vcmp.lt.s32.totalorder %v1952, 1300
        %vm2081 = vcmp.lt.s32.totalorder %v1953, 1300
        %vm2082 = vcmp.lt.s32.totalorder %v1954, 1300
        %vm2083 = vcmp.lt.s32.totalorder %v1955, 1300
        %vm2084 = vcmp.lt.s32.totalorder %v1956, 1300
        %vm2085 = vcmp.lt.s32.totalorder %v1957, 1300
        %vm2086 = vcmp.lt.s32.totalorder %v1958, 1300
        %vm2087 = vcmp.lt.s32.totalorder %v1959, 1300
        %vm2088 = vcmp.lt.s32.totalorder %v1960, 1300
        %vm2089 = vcmp.lt.s32.totalorder %v1961, 1300
        %vm2090 = vcmp.lt.s32.totalorder %v1962, 1300
        %vm2091 = vcmp.lt.s32.totalorder %v1963, 1300
        %vm2092 = vcmp.lt.s32.totalorder %v1964, 1300
        %vm2093 = vcmp.lt.s32.totalorder %v1965, 1300
        %vm2094 = vcmp.lt.s32.totalorder %v1966, 1300
        %vm2095 = vcmp.lt.s32.totalorder %v1967, 1300
        %vm2096 = vcmp.lt.s32.totalorder %v1968, 1300
        %vm2097 = vcmp.lt.s32.totalorder %v1969, 1300
        %vm2098 = vcmp.lt.s32.totalorder %v1970, 1300
        %vm2099 = vcmp.lt.s32.totalorder %v1971, 1300
        %vm2100 = vcmp.lt.s32.totalorder %v1972, 1300
        %vm2101 = vcmp.lt.s32.totalorder %v1973, 1300
        %vm2102 = vcmp.lt.s32.totalorder %v1974, 1300
        %vm2103 = vcmp.lt.s32.totalorder %v1975, 1300
        %vm2104 = vcmp.lt.s32.totalorder %v1976, 1300
        %vm2105 = vcmp.lt.s32.totalorder %v1977, 1300
        %vm2106 = vcmp.lt.s32.totalorder %v1978, 1300
        %vm2107 = vcmp.lt.s32.totalorder %v1979, 1300
        %vm2108 = vcmp.lt.s32.totalorder %v1980, 1300
        %vm2109 = vcmp.lt.s32.totalorder %v1981, 1300
        %vm2110 = vcmp.lt.s32.totalorder %v1982, 1300
        %vm2111 = vcmp.lt.s32.totalorder %v1983, 1300
        %vm2112 = vcmp.lt.s32.totalorder %v1984, 1300
        %vm2113 = vcmp.lt.s32.totalorder %v1985, 1300
        %vm2114 = vcmp.lt.s32.totalorder %v1986, 1300
        %s2115 = smul.u32 %s26, 256
        %v2116 = vlaneseq
        %v2117 = vand.u32 %v2116, 127
        %v2118 = vadd.s32 %v2117, 128
        %v2119 = vstv %s2115
        %v2120 = vadd.s32 %v2119, %v2117
        %v2121 = vadd.s32 %v2119, %v2118
        %vm2122 = vcmp.lt.s32.totalorder %v2120, 1100
        %vm2123 = vcmp.lt.s32.totalorder %v2121, 1100
        %v2124 = vsel %vm1987, 1, 0
        %v2125 = vsel %vm1988, 1, 0
        %v2126 = vsel %vm1989, 1, 0
        %v2127 = vsel %vm1990, 1, 0
        %v2128 = vsel %vm1991, 1, 0
        %v2129 = vsel %vm1992, 1, 0
        %v2130 = vsel %vm1993, 1, 0
        %v2131 = vsel %vm1994, 1, 0
        %v2132 = vsel %vm1995, 1, 0
        %v2133 = vsel %vm1996, 1, 0
        %v2134 = vsel %vm1997, 1, 0
        %v2135 = vsel %vm1998, 1, 0
        %v2136 = vsel %vm1999, 1, 0
        %v2137 = vsel %vm2000, 1, 0
        %v2138 = vsel %vm2001, 1, 0
        %v2139 = vsel %vm2002, 1, 0
        %v2140 = vsel %vm2003, 1, 0
        %v2141 = vsel %vm2004, 1, 0
        %v2142 = vsel %vm2005, 1, 0
        %v2143 = vsel %vm2006, 1, 0
        %v2144 = vsel %vm2007, 1, 0
        %v2145 = vsel %vm2008, 1, 0
        %v2146 = vsel %vm2009, 1, 0
        %v2147 = vsel %vm2010, 1, 0
        %v2148 = vsel %vm2011, 1, 0
        %v2149 = vsel %vm2012, 1, 0
        %v2150 = vsel %vm2013, 1, 0
        %v2151 = vsel %vm2014, 1, 0
        %v2152 = vsel %vm2015, 1, 0
        %v2153 = vsel %vm2016, 1, 0
        %v2154 = vsel %vm2017, 1, 0
        %v2155 = vsel %vm2018, 1, 0
        %v2156 = vsel %vm2019, 1, 0
        %v2157 = vsel %vm2020, 1, 0
        %v2158 = vsel %vm2021, 1, 0
        %v2159 = vsel %vm2022, 1, 0
        %v2160 = vsel %vm2023, 1, 0
        %v2161 = vsel %vm2024, 1, 0
        %v2162 = vsel %vm2025, 1, 0
        %v2163 = vsel %vm2026, 1, 0
        %v2164 = vsel %vm2027, 1, 0
        %v2165 = vsel %vm2028, 1, 0
        %v2166 = vsel %vm2029, 1, 0
        %v2167 = vsel %vm2030, 1, 0
        %v2168 = vsel %vm2031, 1, 0
        %v2169 = vsel %vm2032, 1, 0
        %v2170 = vsel %vm2033, 1, 0
        %v2171 = vsel %vm2034, 1, 0
        %v2172 = vsel %vm2035, 1, 0
        %v2173 = vsel %vm2036, 1, 0
        %v2174 = vsel %vm2037, 1, 0
        %v2175 = vsel %vm2038, 1, 0
        %v2176 = vsel %vm2039, 1, 0
        %v2177 = vsel %vm2040, 1, 0
        %v2178 = vsel %vm2041, 1, 0
        %v2179 = vsel %vm2042, 1, 0
        %v2180 = vsel %vm2043, 1, 0
        %v2181 = vsel %vm2044, 1, 0
        %v2182 = vsel %vm2045, 1, 0
        %v2183 = vsel %vm2046, 1, 0
        %v2184 = vsel %vm2047, 1, 0
        %v2185 = vsel %vm2048, 1, 0
        %v2186 = vsel %vm2049, 1, 0
        %v2187 = vsel %vm2050, 1, 0
        %v2188 = vsel %vm2051, 1, 0
        %v2189 = vsel %vm2052, 1, 0
        %v2190 = vsel %vm2053, 1, 0
        %v2191 = vsel %vm2054, 1, 0
        %v2192 = vsel %vm2055, 1, 0
        %v2193 = vsel %vm2056, 1, 0
        %v2194 = vsel %vm2057, 1, 0
        %v2195 = vsel %vm2058, 1, 0
        %v2196 = vsel %vm2059, 1, 0
        %v2197 = vsel %vm2060, 1, 0
        %v2198 = vsel %vm2061, 1, 0
        %v2199 = vsel %vm2062, 1, 0
        %v2200 = vsel %vm2063, 1, 0
        %v2201 = vsel %vm2064, 1, 0
        %v2202 = vsel %vm2065, 1, 0
        %v2203 = vsel %vm2066, 1, 0
        %v2204 = vsel %vm2067, 1, 0
        %v2205 = vsel %vm2068, 1, 0
        %v2206 = vsel %vm2069, 1, 0
        %v2207 = vsel %vm2070, 1, 0
        %v2208 = vsel %vm2071, 1, 0
        %v2209 = vsel %vm2072, 1, 0
        %v2210 = vsel %vm2073, 1, 0
        %v2211 = vsel %vm2074, 1, 0
        %v2212 = vsel %vm2075, 1, 0
        %v2213 = vsel %vm2076, 1, 0
        %v2214 = vsel %vm2077, 1, 0
        %v2215 = vsel %vm2078, 1, 0
        %v2216 = vsel %vm2079, 1, 0
        %v2217 = vsel %vm2080, 1, 0
        %v2218 = vsel %vm2081, 1, 0
        %v2219 = vsel %vm2082, 1, 0
        %v2220 = vsel %vm2083, 1, 0
        %v2221 = vsel %vm2084, 1, 0
        %v2222 = vsel %vm2085, 1, 0
        %v2223 = vsel %vm2086, 1, 0
        %v2224 = vsel %vm2087, 1, 0
        %v2225 = vsel %vm2088, 1, 0
        %v2226 = vsel %vm2089, 1, 0
        %v2227 = vsel %vm2090, 1, 0
        %v2228 = vsel %vm2091, 1, 0
        %v2229 = vsel %vm2092, 1, 0
        %v2230 = vsel %vm2093, 1, 0
        %v2231 = vsel %vm2094, 1, 0
        %v2232 = vsel %vm2095, 1, 0
        %v2233 = vsel %vm2096, 1, 0
        %v2234 = vsel %vm2097, 1, 0
        %v2235 = vsel %vm2098, 1, 0
        %v2236 = vsel %vm2099, 1, 0
        %v2237 = vsel %vm2100, 1, 0
        %v2238 = vsel %vm2101, 1, 0
        %v2239 = vsel %vm2102, 1, 0
        %v2240 = vsel %vm2103, 1, 0
        %v2241 = vsel %vm2104, 1, 0
        %v2242 = vsel %vm2105, 1, 0
        %v2243 = vsel %vm2106, 1, 0
        %v2244 = vsel %vm2107, 1, 0
        %v2245 = vsel %vm2108, 1, 0
        %v2246 = vsel %vm2109, 1, 0
        %v2247 = vsel %vm2110, 1, 0
        %v2248 = vsel %vm2111, 1, 0
        %v2249 = vsel %vm2112, 1, 0
        %v2250 = vsel %vm2113, 1, 0
        %v2251 = vsel %vm2114, 1, 0
        %vm2252 = vcmp.eq.s32.totalorder %v2124, 1
        %vm2253 = vcmp.eq.s32.totalorder %v2125, 1
        %vm2254 = vcmp.eq.s32.totalorder %v2126, 1
        %vm2255 = vcmp.eq.s32.totalorder %v2127, 1
        %vm2256 = vcmp.eq.s32.totalorder %v2128, 1
        %vm2257 = vcmp.eq.s32.totalorder %v2129, 1
        %vm2258 = vcmp.eq.s32.totalorder %v2130, 1
        %vm2259 = vcmp.eq.s32.totalorder %v2131, 1
        %vm2260 = vcmp.eq.s32.totalorder %v2132, 1
        %vm2261 = vcmp.eq.s32.totalorder %v2133, 1
        %vm2262 = vcmp.eq.s32.totalorder %v2134, 1
        %vm2263 = vcmp.eq.s32.totalorder %v2135, 1
        %vm2264 = vcmp.eq.s32.totalorder %v2136, 1
        %vm2265 = vcmp.eq.s32.totalorder %v2137, 1
        %vm2266 = vcmp.eq.s32.totalorder %v2138, 1
        %vm2267 = vcmp.eq.s32.totalorder %v2139, 1
        %vm2268 = vcmp.eq.s32.totalorder %v2140, 1
        %vm2269 = vcmp.eq.s32.totalorder %v2141, 1
        %vm2270 = vcmp.eq.s32.totalorder %v2142, 1
        %vm2271 = vcmp.eq.s32.totalorder %v2143, 1
        %vm2272 = vcmp.eq.s32.totalorder %v2144, 1
        %vm2273 = vcmp.eq.s32.totalorder %v2145, 1
        %vm2274 = vcmp.eq.s32.totalorder %v2146, 1
        %vm2275 = vcmp.eq.s32.totalorder %v2147, 1
        %vm2276 = vcmp.eq.s32.totalorder %v2148, 1
        %vm2277 = vcmp.eq.s32.totalorder %v2149, 1
        %vm2278 = vcmp.eq.s32.totalorder %v2150, 1
        %vm2279 = vcmp.eq.s32.totalorder %v2151, 1
        %vm2280 = vcmp.eq.s32.totalorder %v2152, 1
        %vm2281 = vcmp.eq.s32.totalorder %v2153, 1
        %vm2282 = vcmp.eq.s32.totalorder %v2154, 1
        %vm2283 = vcmp.eq.s32.totalorder %v2155, 1
        %vm2284 = vcmp.eq.s32.totalorder %v2156, 1
        %vm2285 = vcmp.eq.s32.totalorder %v2157, 1
        %vm2286 = vcmp.eq.s32.totalorder %v2158, 1
        %vm2287 = vcmp.eq.s32.totalorder %v2159, 1
        %vm2288 = vcmp.eq.s32.totalorder %v2160, 1
        %vm2289 = vcmp.eq.s32.totalorder %v2161, 1
        %vm2290 = vcmp.eq.s32.totalorder %v2162, 1
        %vm2291 = vcmp.eq.s32.totalorder %v2163, 1
        %vm2292 = vcmp.eq.s32.totalorder %v2164, 1
        %vm2293 = vcmp.eq.s32.totalorder %v2165, 1
        %vm2294 = vcmp.eq.s32.totalorder %v2166, 1
        %vm2295 = vcmp.eq.s32.totalorder %v2167, 1
        %vm2296 = vcmp.eq.s32.totalorder %v2168, 1
        %vm2297 = vcmp.eq.s32.totalorder %v2169, 1
        %vm2298 = vcmp.eq.s32.totalorder %v2170, 1
        %vm2299 = vcmp.eq.s32.totalorder %v2171, 1
        %vm2300 = vcmp.eq.s32.totalorder %v2172, 1
        %vm2301 = vcmp.eq.s32.totalorder %v2173, 1
        %vm2302 = vcmp.eq.s32.totalorder %v2174, 1
        %vm2303 = vcmp.eq.s32.totalorder %v2175, 1
        %vm2304 = vcmp.eq.s32.totalorder %v2176, 1
        %vm2305 = vcmp.eq.s32.totalorder %v2177, 1
        %vm2306 = vcmp.eq.s32.totalorder %v2178, 1
        %vm2307 = vcmp.eq.s32.totalorder %v2179, 1
        %vm2308 = vcmp.eq.s32.totalorder %v2180, 1
        %vm2309 = vcmp.eq.s32.totalorder %v2181, 1
        %vm2310 = vcmp.eq.s32.totalorder %v2182, 1
        %vm2311 = vcmp.eq.s32.totalorder %v2183, 1
        %vm2312 = vcmp.eq.s32.totalorder %v2184, 1
        %vm2313 = vcmp.eq.s32.totalorder %v2185, 1
        %vm2314 = vcmp.eq.s32.totalorder %v2186, 1
        %vm2315 = vcmp.eq.s32.totalorder %v2187, 1
        %vm2316 = vcmp.eq.s32.totalorder %v2188, 1
        %vm2317 = vcmp.eq.s32.totalorder %v2189, 1
        %vm2318 = vcmp.eq.s32.totalorder %v2190, 1
        %vm2319 = vcmp.eq.s32.totalorder %v2191, 1
        %vm2320 = vcmp.eq.s32.totalorder %v2192, 1
        %vm2321 = vcmp.eq.s32.totalorder %v2193, 1
        %vm2322 = vcmp.eq.s32.totalorder %v2194, 1
        %vm2323 = vcmp.eq.s32.totalorder %v2195, 1
        %vm2324 = vcmp.eq.s32.totalorder %v2196, 1
        %vm2325 = vcmp.eq.s32.totalorder %v2197, 1
        %vm2326 = vcmp.eq.s32.totalorder %v2198, 1
        %vm2327 = vcmp.eq.s32.totalorder %v2199, 1
        %vm2328 = vcmp.eq.s32.totalorder %v2200, 1
        %vm2329 = vcmp.eq.s32.totalorder %v2201, 1
        %vm2330 = vcmp.eq.s32.totalorder %v2202, 1
        %vm2331 = vcmp.eq.s32.totalorder %v2203, 1
        %vm2332 = vcmp.eq.s32.totalorder %v2204, 1
        %vm2333 = vcmp.eq.s32.totalorder %v2205, 1
        %vm2334 = vcmp.eq.s32.totalorder %v2206, 1
        %vm2335 = vcmp.eq.s32.totalorder %v2207, 1
        %vm2336 = vcmp.eq.s32.totalorder %v2208, 1
        %vm2337 = vcmp.eq.s32.totalorder %v2209, 1
        %vm2338 = vcmp.eq.s32.totalorder %v2210, 1
        %vm2339 = vcmp.eq.s32.totalorder %v2211, 1
        %vm2340 = vcmp.eq.s32.totalorder %v2212, 1
        %vm2341 = vcmp.eq.s32.totalorder %v2213, 1
        %vm2342 = vcmp.eq.s32.totalorder %v2214, 1
        %vm2343 = vcmp.eq.s32.totalorder %v2215, 1
        %vm2344 = vcmp.eq.s32.totalorder %v2216, 1
        %vm2345 = vcmp.eq.s32.totalorder %v2217, 1
        %vm2346 = vcmp.eq.s32.totalorder %v2218, 1
        %vm2347 = vcmp.eq.s32.totalorder %v2219, 1
        %vm2348 = vcmp.eq.s32.totalorder %v2220, 1
        %vm2349 = vcmp.eq.s32.totalorder %v2221, 1
        %vm2350 = vcmp.eq.s32.totalorder %v2222, 1
        %vm2351 = vcmp.eq.s32.totalorder %v2223, 1
        %vm2352 = vcmp.eq.s32.totalorder %v2224, 1
        %vm2353 = vcmp.eq.s32.totalorder %v2225, 1
        %vm2354 = vcmp.eq.s32.totalorder %v2226, 1
        %vm2355 = vcmp.eq.s32.totalorder %v2227, 1
        %vm2356 = vcmp.eq.s32.totalorder %v2228, 1
        %vm2357 = vcmp.eq.s32.totalorder %v2229, 1
        %vm2358 = vcmp.eq.s32.totalorder %v2230, 1
        %vm2359 = vcmp.eq.s32.totalorder %v2231, 1
        %vm2360 = vcmp.eq.s32.totalorder %v2232, 1
        %vm2361 = vcmp.eq.s32.totalorder %v2233, 1
        %vm2362 = vcmp.eq.s32.totalorder %v2234, 1
        %vm2363 = vcmp.eq.s32.totalorder %v2235, 1
        %vm2364 = vcmp.eq.s32.totalorder %v2236, 1
        %vm2365 = vcmp.eq.s32.totalorder %v2237, 1
        %vm2366 = vcmp.eq.s32.totalorder %v2238, 1
        %vm2367 = vcmp.eq.s32.totalorder %v2239, 1
        %vm2368 = vcmp.eq.s32.totalorder %v2240, 1
        %vm2369 = vcmp.eq.s32.totalorder %v2241, 1
        %vm2370 = vcmp.eq.s32.totalorder %v2242, 1
        %vm2371 = vcmp.eq.s32.totalorder %v2243, 1
        %vm2372 = vcmp.eq.s32.totalorder %v2244, 1
        %vm2373 = vcmp.eq.s32.totalorder %v2245, 1
        %vm2374 = vcmp.eq.s32.totalorder %v2246, 1
        %vm2375 = vcmp.eq.s32.totalorder %v2247, 1
        %vm2376 = vcmp.eq.s32.totalorder %v2248, 1
        %vm2377 = vcmp.eq.s32.totalorder %v2249, 1
        %vm2378 = vcmp.eq.s32.totalorder %v2250, 1
        %vm2379 = vcmp.eq.s32.totalorder %v2251, 1
        %v2380 = vsel %vm2122, 1, 0
        %v2381 = vsel %vm2123, 1, 0
        %vm2382 = vcmp.eq.s32.totalorder %v2380, 1
        %vm2383 = vcmp.eq.s32.totalorder %v2381, 1
        %vm2384 = vmand %vm2252, %vm2382
        %vm2385 = vmand %vm2252, %vm2383
        %vm2386 = vmand %vm2253, %vm2382
        %vm2387 = vmand %vm2253, %vm2383
        %vm2388 = vmand %vm2254, %vm2382
        %vm2389 = vmand %vm2254, %vm2383
        %vm2390 = vmand %vm2255, %vm2382
        %vm2391 = vmand %vm2255, %vm2383
        %vm2392 = vmand %vm2256, %vm2382
        %vm2393 = vmand %vm2256, %vm2383
        %vm2394 = vmand %vm2257, %vm2382
        %vm2395 = vmand %vm2257, %vm2383
        %vm2396 = vmand %vm2258, %vm2382
        %vm2397 = vmand %vm2258, %vm2383
        %vm2398 = vmand %vm2259, %vm2382
        %vm2399 = vmand %vm2259, %vm2383
        %vm2400 = vmand %vm2260, %vm2382
        %vm2401 = vmand %vm2260, %vm2383
        %vm2402 = vmand %vm2261, %vm2382
        %vm2403 = vmand %vm2261, %vm2383
        %vm2404 = vmand %vm2262, %vm2382
        %vm2405 = vmand %vm2262, %vm2383
        %vm2406 = vmand %vm2263, %vm2382
        %vm2407 = vmand %vm2263, %vm2383
        %vm2408 = vmand %vm2264, %vm2382
        %vm2409 = vmand %vm2264, %vm2383
        %vm2410 = vmand %vm2265, %vm2382
        %vm2411 = vmand %vm2265, %vm2383
        %vm2412 = vmand %vm2266, %vm2382
        %vm2413 = vmand %vm2266, %vm2383
        %vm2414 = vmand %vm2267, %vm2382
        %vm2415 = vmand %vm2267, %vm2383
        %vm2416 = vmand %vm2268, %vm2382
        %vm2417 = vmand %vm2268, %vm2383
        %vm2418 = vmand %vm2269, %vm2382
        %vm2419 = vmand %vm2269, %vm2383
        %vm2420 = vmand %vm2270, %vm2382
        %vm2421 = vmand %vm2270, %vm2383
        %vm2422 = vmand %vm2271, %vm2382
        %vm2423 = vmand %vm2271, %vm2383
        %vm2424 = vmand %vm2272, %vm2382
        %vm2425 = vmand %vm2272, %vm2383
        %vm2426 = vmand %vm2273, %vm2382
        %vm2427 = vmand %vm2273, %vm2383
        %vm2428 = vmand %vm2274, %vm2382
        %vm2429 = vmand %vm2274, %vm2383
        %vm2430 = vmand %vm2275, %vm2382
        %vm2431 = vmand %vm2275, %vm2383
        %vm2432 = vmand %vm2276, %vm2382
        %vm2433 = vmand %vm2276, %vm2383
        %vm2434 = vmand %vm2277, %vm2382
        %vm2435 = vmand %vm2277, %vm2383
        %vm2436 = vmand %vm2278, %vm2382
        %vm2437 = vmand %vm2278, %vm2383
        %vm2438 = vmand %vm2279, %vm2382
        %vm2439 = vmand %vm2279, %vm2383
        %vm2440 = vmand %vm2280, %vm2382
        %vm2441 = vmand %vm2280, %vm2383
        %vm2442 = vmand %vm2281, %vm2382
        %vm2443 = vmand %vm2281, %vm2383
        %vm2444 = vmand %vm2282, %vm2382
        %vm2445 = vmand %vm2282, %vm2383
        %vm2446 = vmand %vm2283, %vm2382
        %vm2447 = vmand %vm2283, %vm2383
        %vm2448 = vmand %vm2284, %vm2382
        %vm2449 = vmand %vm2284, %vm2383
        %vm2450 = vmand %vm2285, %vm2382
        %vm2451 = vmand %vm2285, %vm2383
        %vm2452 = vmand %vm2286, %vm2382
        %vm2453 = vmand %vm2286, %vm2383
        %vm2454 = vmand %vm2287, %vm2382
        %vm2455 = vmand %vm2287, %vm2383
        %vm2456 = vmand %vm2288, %vm2382
        %vm2457 = vmand %vm2288, %vm2383
        %vm2458 = vmand %vm2289, %vm2382
        %vm2459 = vmand %vm2289, %vm2383
        %vm2460 = vmand %vm2290, %vm2382
        %vm2461 = vmand %vm2290, %vm2383
        %vm2462 = vmand %vm2291, %vm2382
        %vm2463 = vmand %vm2291, %vm2383
        %vm2464 = vmand %vm2292, %vm2382
        %vm2465 = vmand %vm2292, %vm2383
        %vm2466 = vmand %vm2293, %vm2382
        %vm2467 = vmand %vm2293, %vm2383
        %vm2468 = vmand %vm2294, %vm2382
        %vm2469 = vmand %vm2294, %vm2383
        %vm2470 = vmand %vm2295, %vm2382
        %vm2471 = vmand %vm2295, %vm2383
        %vm2472 = vmand %vm2296, %vm2382
        %vm2473 = vmand %vm2296, %vm2383
        %vm2474 = vmand %vm2297, %vm2382
        %vm2475 = vmand %vm2297, %vm2383
        %vm2476 = vmand %vm2298, %vm2382
        %vm2477 = vmand %vm2298, %vm2383
        %vm2478 = vmand %vm2299, %vm2382
        %vm2479 = vmand %vm2299, %vm2383
        %vm2480 = vmand %vm2300, %vm2382
        %vm2481 = vmand %vm2300, %vm2383
        %vm2482 = vmand %vm2301, %vm2382
        %vm2483 = vmand %vm2301, %vm2383
        %vm2484 = vmand %vm2302, %vm2382
        %vm2485 = vmand %vm2302, %vm2383
        %vm2486 = vmand %vm2303, %vm2382
        %vm2487 = vmand %vm2303, %vm2383
        %vm2488 = vmand %vm2304, %vm2382
        %vm2489 = vmand %vm2304, %vm2383
        %vm2490 = vmand %vm2305, %vm2382
        %vm2491 = vmand %vm2305, %vm2383
        %vm2492 = vmand %vm2306, %vm2382
        %vm2493 = vmand %vm2306, %vm2383
        %vm2494 = vmand %vm2307, %vm2382
        %vm2495 = vmand %vm2307, %vm2383
        %vm2496 = vmand %vm2308, %vm2382
        %vm2497 = vmand %vm2308, %vm2383
        %vm2498 = vmand %vm2309, %vm2382
        %vm2499 = vmand %vm2309, %vm2383
        %vm2500 = vmand %vm2310, %vm2382
        %vm2501 = vmand %vm2310, %vm2383
        %vm2502 = vmand %vm2311, %vm2382
        %vm2503 = vmand %vm2311, %vm2383
        %vm2504 = vmand %vm2312, %vm2382
        %vm2505 = vmand %vm2312, %vm2383
        %vm2506 = vmand %vm2313, %vm2382
        %vm2507 = vmand %vm2313, %vm2383
        %vm2508 = vmand %vm2314, %vm2382
        %vm2509 = vmand %vm2314, %vm2383
        %vm2510 = vmand %vm2315, %vm2382
        %vm2511 = vmand %vm2315, %vm2383
        %vm2512 = vmand %vm2316, %vm2382
        %vm2513 = vmand %vm2316, %vm2383
        %vm2514 = vmand %vm2317, %vm2382
        %vm2515 = vmand %vm2317, %vm2383
        %vm2516 = vmand %vm2318, %vm2382
        %vm2517 = vmand %vm2318, %vm2383
        %vm2518 = vmand %vm2319, %vm2382
        %vm2519 = vmand %vm2319, %vm2383
        %vm2520 = vmand %vm2320, %vm2382
        %vm2521 = vmand %vm2320, %vm2383
        %vm2522 = vmand %vm2321, %vm2382
        %vm2523 = vmand %vm2321, %vm2383
        %vm2524 = vmand %vm2322, %vm2382
        %vm2525 = vmand %vm2322, %vm2383
        %vm2526 = vmand %vm2323, %vm2382
        %vm2527 = vmand %vm2323, %vm2383
        %vm2528 = vmand %vm2324, %vm2382
        %vm2529 = vmand %vm2324, %vm2383
        %vm2530 = vmand %vm2325, %vm2382
        %vm2531 = vmand %vm2325, %vm2383
        %vm2532 = vmand %vm2326, %vm2382
        %vm2533 = vmand %vm2326, %vm2383
        %vm2534 = vmand %vm2327, %vm2382
        %vm2535 = vmand %vm2327, %vm2383
        %vm2536 = vmand %vm2328, %vm2382
        %vm2537 = vmand %vm2328, %vm2383
        %vm2538 = vmand %vm2329, %vm2382
        %vm2539 = vmand %vm2329, %vm2383
        %vm2540 = vmand %vm2330, %vm2382
        %vm2541 = vmand %vm2330, %vm2383
        %vm2542 = vmand %vm2331, %vm2382
        %vm2543 = vmand %vm2331, %vm2383
        %vm2544 = vmand %vm2332, %vm2382
        %vm2545 = vmand %vm2332, %vm2383
        %vm2546 = vmand %vm2333, %vm2382
        %vm2547 = vmand %vm2333, %vm2383
        %vm2548 = vmand %vm2334, %vm2382
        %vm2549 = vmand %vm2334, %vm2383
        %vm2550 = vmand %vm2335, %vm2382
        %vm2551 = vmand %vm2335, %vm2383
        %vm2552 = vmand %vm2336, %vm2382
        %vm2553 = vmand %vm2336, %vm2383
        %vm2554 = vmand %vm2337, %vm2382
        %vm2555 = vmand %vm2337, %vm2383
        %vm2556 = vmand %vm2338, %vm2382
        %vm2557 = vmand %vm2338, %vm2383
        %vm2558 = vmand %vm2339, %vm2382
        %vm2559 = vmand %vm2339, %vm2383
        %vm2560 = vmand %vm2340, %vm2382
        %vm2561 = vmand %vm2340, %vm2383
        %vm2562 = vmand %vm2341, %vm2382
        %vm2563 = vmand %vm2341, %vm2383
        %vm2564 = vmand %vm2342, %vm2382
        %vm2565 = vmand %vm2342, %vm2383
        %vm2566 = vmand %vm2343, %vm2382
        %vm2567 = vmand %vm2343, %vm2383
        %vm2568 = vmand %vm2344, %vm2382
        %vm2569 = vmand %vm2344, %vm2383
        %vm2570 = vmand %vm2345, %vm2382
        %vm2571 = vmand %vm2345, %vm2383
        %vm2572 = vmand %vm2346, %vm2382
        %vm2573 = vmand %vm2346, %vm2383
        %vm2574 = vmand %vm2347, %vm2382
        %vm2575 = vmand %vm2347, %vm2383
        %vm2576 = vmand %vm2348, %vm2382
        %vm2577 = vmand %vm2348, %vm2383
        %vm2578 = vmand %vm2349, %vm2382
        %vm2579 = vmand %vm2349, %vm2383
        %vm2580 = vmand %vm2350, %vm2382
        %vm2581 = vmand %vm2350, %vm2383
        %vm2582 = vmand %vm2351, %vm2382
        %vm2583 = vmand %vm2351, %vm2383
        %vm2584 = vmand %vm2352, %vm2382
        %vm2585 = vmand %vm2352, %vm2383
        %vm2586 = vmand %vm2353, %vm2382
        %vm2587 = vmand %vm2353, %vm2383
        %vm2588 = vmand %vm2354, %vm2382
        %vm2589 = vmand %vm2354, %vm2383
        %vm2590 = vmand %vm2355, %vm2382
        %vm2591 = vmand %vm2355, %vm2383
        %vm2592 = vmand %vm2356, %vm2382
        %vm2593 = vmand %vm2356, %vm2383
        %vm2594 = vmand %vm2357, %vm2382
        %vm2595 = vmand %vm2357, %vm2383
        %vm2596 = vmand %vm2358, %vm2382
        %vm2597 = vmand %vm2358, %vm2383
        %vm2598 = vmand %vm2359, %vm2382
        %vm2599 = vmand %vm2359, %vm2383
        %vm2600 = vmand %vm2360, %vm2382
        %vm2601 = vmand %vm2360, %vm2383
        %vm2602 = vmand %vm2361, %vm2382
        %vm2603 = vmand %vm2361, %vm2383
        %vm2604 = vmand %vm2362, %vm2382
        %vm2605 = vmand %vm2362, %vm2383
        %vm2606 = vmand %vm2363, %vm2382
        %vm2607 = vmand %vm2363, %vm2383
        %vm2608 = vmand %vm2364, %vm2382
        %vm2609 = vmand %vm2364, %vm2383
        %vm2610 = vmand %vm2365, %vm2382
        %vm2611 = vmand %vm2365, %vm2383
        %vm2612 = vmand %vm2366, %vm2382
        %vm2613 = vmand %vm2366, %vm2383
        %vm2614 = vmand %vm2367, %vm2382
        %vm2615 = vmand %vm2367, %vm2383
        %vm2616 = vmand %vm2368, %vm2382
        %vm2617 = vmand %vm2368, %vm2383
        %vm2618 = vmand %vm2369, %vm2382
        %vm2619 = vmand %vm2369, %vm2383
        %vm2620 = vmand %vm2370, %vm2382
        %vm2621 = vmand %vm2370, %vm2383
        %vm2622 = vmand %vm2371, %vm2382
        %vm2623 = vmand %vm2371, %vm2383
        %vm2624 = vmand %vm2372, %vm2382
        %vm2625 = vmand %vm2372, %vm2383
        %vm2626 = vmand %vm2373, %vm2382
        %vm2627 = vmand %vm2373, %vm2383
        %vm2628 = vmand %vm2374, %vm2382
        %vm2629 = vmand %vm2374, %vm2383
        %vm2630 = vmand %vm2375, %vm2382
        %vm2631 = vmand %vm2375, %vm2383
        %vm2632 = vmand %vm2376, %vm2382
        %vm2633 = vmand %vm2376, %vm2383
        %vm2634 = vmand %vm2377, %vm2382
        %vm2635 = vmand %vm2377, %vm2383
        %vm2636 = vmand %vm2378, %vm2382
        %vm2637 = vmand %vm2378, %vm2383
        %vm2638 = vmand %vm2379, %vm2382
        %vm2639 = vmand %vm2379, %vm2383
        %p2640 = scmp.eq.s32.totalorder %s26, 0
        // Predicated region
        $region29: #{tpu_custom_call.1} parent=27 // pred_check
          %p2641 = pneg %p2640
        $region30: #{tpu_custom_call.1} parent=27 // pred_check_branch
          %2643 = sbr.rel (%p2641) target = $region32
        $region31: #{tpu_custom_call.1} parent=27 // pred_region
          %2644 = vst [vmem:[%s219] sm:$0x1] inf
          %2645 = vst [vmem:[%s225] sm:$0x1] -inf
        $region32: #{tpu_custom_call.1} parent=27 // pred_fallthru
          _
        %v2646 = vsel %vm2384, %v962, inf
        %v2647 = vsel %vm2385, %v964, inf
        %v2648 = vsel %vm2386, %v968, inf
        %v2649 = vsel %vm2387, %v970, inf
        %v2650 = vsel %vm2388, %v974, inf
        %v2651 = vsel %vm2389, %v976, inf
        %v2652 = vsel %vm2390, %v980, inf
        %v2653 = vsel %vm2391, %v982, inf
        %v2654 = vsel %vm2392, %v986, inf
        %v2655 = vsel %vm2393, %v988, inf
        %v2656 = vsel %vm2394, %v992, inf
        %v2657 = vsel %vm2395, %v994, inf
        %v2658 = vsel %vm2396, %v998, inf
        %v2659 = vsel %vm2397, %v1000, inf
        %v2660 = vsel %vm2398, %v1004, inf
        %v2661 = vsel %vm2399, %v1006, inf
        %v2662 = vsel %vm2400, %v1010, inf
        %v2663 = vsel %vm2401, %v1012, inf
        %v2664 = vsel %vm2402, %v1016, inf
        %v2665 = vsel %vm2403, %v1018, inf
        %v2666 = vsel %vm2404, %v1022, inf
        %v2667 = vsel %vm2405, %v1024, inf
        %v2668 = vsel %vm2406, %v1028, inf
        %v2669 = vsel %vm2407, %v1030, inf
        %v2670 = vsel %vm2408, %v1034, inf
        %v2671 = vsel %vm2409, %v1036, inf
        %v2672 = vsel %vm2410, %v1040, inf
        %v2673 = vsel %vm2411, %v1042, inf
        %v2674 = vsel %vm2412, %v1046, inf
        %v2675 = vsel %vm2413, %v1048, inf
        %v2676 = vsel %vm2414, %v1052, inf
        %v2677 = vsel %vm2415, %v1054, inf
        %v2678 = vsel %vm2416, %v1058, inf
        %v2679 = vsel %vm2417, %v1060, inf
        %v2680 = vsel %vm2418, %v1064, inf
        %v2681 = vsel %vm2419, %v1066, inf
        %v2682 = vsel %vm2420, %v1070, inf
        %v2683 = vsel %vm2421, %v1072, inf
        %v2684 = vsel %vm2422, %v1076, inf
        %v2685 = vsel %vm2423, %v1078, inf
        %v2686 = vsel %vm2424, %v1082, inf
        %v2687 = vsel %vm2425, %v1084, inf
        %v2688 = vsel %vm2426, %v1088, inf
        %v2689 = vsel %vm2427, %v1090, inf
        %v2690 = vsel %vm2428, %v1094, inf
        %v2691 = vsel %vm2429, %v1096, inf
        %v2692 = vsel %vm2430, %v1100, inf
        %v2693 = vsel %vm2431, %v1102, inf
        %v2694 = vsel %vm2432, %v1106, inf
        %v2695 = vsel %vm2433, %v1108, inf
        %v2696 = vsel %vm2434, %v1112, inf
        %v2697 = vsel %vm2435, %v1114, inf
        %v2698 = vsel %vm2436, %v1118, inf
        %v2699 = vsel %vm2437, %v1120, inf
        %v2700 = vsel %vm2438, %v1124, inf
        %v2701 = vsel %vm2439, %v1126, inf
        %v2702 = vsel %vm2440, %v1130, inf
        %v2703 = vsel %vm2441, %v1132, inf
        %v2704 = vsel %vm2442, %v1136, inf
        %v2705 = vsel %vm2443, %v1138, inf
        %v2706 = vsel %vm2444, %v1142, inf
        %v2707 = vsel %vm2445, %v1144, inf
        %v2708 = vsel %vm2446, %v1148, inf
        %v2709 = vsel %vm2447, %v1150, inf
        %v2710 = vsel %vm2448, %v1154, inf
        %v2711 = vsel %vm2449, %v1156, inf
        %v2712 = vsel %vm2450, %v1160, inf
        %v2713 = vsel %vm2451, %v1162, inf
        %v2714 = vsel %vm2452, %v1166, inf
        %v2715 = vsel %vm2453, %v1168, inf
        %v2716 = vsel %vm2454, %v1172, inf
        %v2717 = vsel %vm2455, %v1174, inf
        %v2718 = vsel %vm2456, %v1178, inf
        %v2719 = vsel %vm2457, %v1180, inf
        %v2720 = vsel %vm2458, %v1184, inf
        %v2721 = vsel %vm2459, %v1186, inf
        %v2722 = vsel %vm2460, %v1190, inf
        %v2723 = vsel %vm2461, %v1192, inf
        %v2724 = vsel %vm2462, %v1196, inf
        %v2725 = vsel %vm2463, %v1198, inf
        %v2726 = vsel %vm2464, %v1202, inf
        %v2727 = vsel %vm2465, %v1204, inf
        %v2728 = vsel %vm2466, %v1208, inf
        %v2729 = vsel %vm2467, %v1210, inf
        %v2730 = vsel %vm2468, %v1214, inf
        %v2731 = vsel %vm2469, %v1216, inf
        %v2732 = vsel %vm2470, %v1220, inf
        %v2733 = vsel %vm2471, %v1222, inf
        %v2734 = vsel %vm2472, %v1226, inf
        %v2735 = vsel %vm2473, %v1228, inf
        %v2736 = vsel %vm2474, %v1232, inf
        %v2737 = vsel %vm2475, %v1234, inf
        %v2738 = vsel %vm2476, %v1238, inf
        %v2739 = vsel %vm2477, %v1240, inf
        %v2740 = vsel %vm2478, %v1244, inf
        %v2741 = vsel %vm2479, %v1246, inf
        %v2742 = vsel %vm2480, %v1250, inf
        %v2743 = vsel %vm2481, %v1252, inf
        %v2744 = vsel %vm2482, %v1256, inf
        %v2745 = vsel %vm2483, %v1258, inf
        %v2746 = vsel %vm2484, %v1262, inf
        %v2747 = vsel %vm2485, %v1264, inf
        %v2748 = vsel %vm2486, %v1268, inf
        %v2749 = vsel %vm2487, %v1270, inf
        %v2750 = vsel %vm2488, %v1274, inf
        %v2751 = vsel %vm2489, %v1276, inf
        %v2752 = vsel %vm2490, %v1280, inf
        %v2753 = vsel %vm2491, %v1282, inf
        %v2754 = vsel %vm2492, %v1286, inf
        %v2755 = vsel %vm2493, %v1288, inf
        %v2756 = vsel %vm2494, %v1292, inf
        %v2757 = vsel %vm2495, %v1294, inf
        %v2758 = vsel %vm2496, %v1298, inf
        %v2759 = vsel %vm2497, %v1300, inf
        %v2760 = vsel %vm2498, %v1304, inf
        %v2761 = vsel %vm2499, %v1306, inf
        %v2762 = vsel %vm2500, %v1310, inf
        %v2763 = vsel %vm2501, %v1312, inf
        %v2764 = vsel %vm2502, %v1316, inf
        %v2765 = vsel %vm2503, %v1318, inf
        %v2766 = vsel %vm2504, %v1322, inf
        %v2767 = vsel %vm2505, %v1324, inf
        %v2768 = vsel %vm2506, %v1328, inf
        %v2769 = vsel %vm2507, %v1330, inf
        %v2770 = vsel %vm2508, %v1334, inf
        %v2771 = vsel %vm2509, %v1336, inf
        %v2772 = vsel %vm2510, %v1340, inf
        %v2773 = vsel %vm2511, %v1342, inf
        %v2774 = vsel %vm2512, %v1346, inf
        %v2775 = vsel %vm2513, %v1348, inf
        %v2776 = vsel %vm2514, %v1352, inf
        %v2777 = vsel %vm2515, %v1354, inf
        %v2778 = vsel %vm2516, %v1358, inf
        %v2779 = vsel %vm2517, %v1360, inf
        %v2780 = vsel %vm2518, %v1364, inf
        %v2781 = vsel %vm2519, %v1366, inf
        %v2782 = vsel %vm2520, %v1370, inf
        %v2783 = vsel %vm2521, %v1372, inf
        %v2784 = vsel %vm2522, %v1376, inf
        %v2785 = vsel %vm2523, %v1378, inf
        %v2786 = vsel %vm2524, %v1382, inf
        %v2787 = vsel %vm2525, %v1384, inf
        %v2788 = vsel %vm2526, %v1388, inf
        %v2789 = vsel %vm2527, %v1390, inf
        %v2790 = vsel %vm2528, %v1394, inf
        %v2791 = vsel %vm2529, %v1396, inf
        %v2792 = vsel %vm2530, %v1400, inf
        %v2793 = vsel %vm2531, %v1402, inf
        %v2794 = vsel %vm2532, %v1406, inf
        %v2795 = vsel %vm2533, %v1408, inf
        %v2796 = vsel %vm2534, %v1412, inf
        %v2797 = vsel %vm2535, %v1414, inf
        %v2798 = vsel %vm2536, %v1418, inf
        %v2799 = vsel %vm2537, %v1420, inf
        %v2800 = vsel %vm2538, %v1424, inf
        %v2801 = vsel %vm2539, %v1426, inf
        %v2802 = vsel %vm2540, %v1430, inf
        %v2803 = vsel %vm2541, %v1432, inf
        %v2804 = vsel %vm2542, %v1436, inf
        %v2805 = vsel %vm2543, %v1438, inf
        %v2806 = vsel %vm2544, %v1442, inf
        %v2807 = vsel %vm2545, %v1444, inf
        %v2808 = vsel %vm2546, %v1448, inf
        %v2809 = vsel %vm2547, %v1450, inf
        %v2810 = vsel %vm2548, %v1454, inf
        %v2811 = vsel %vm2549, %v1456, inf
        %v2812 = vsel %vm2550, %v1460, inf
        %v2813 = vsel %vm2551, %v1462, inf
        %v2814 = vsel %vm2552, %v1466, inf
        %v2815 = vsel %vm2553, %v1468, inf
        %v2816 = vsel %vm2554, %v1472, inf
        %v2817 = vsel %vm2555, %v1474, inf
        %v2818 = vsel %vm2556, %v1478, inf
        %v2819 = vsel %vm2557, %v1480, inf
        %v2820 = vsel %vm2558, %v1484, inf
        %v2821 = vsel %vm2559, %v1486, inf
        %v2822 = vsel %vm2560, %v1490, inf
        %v2823 = vsel %vm2561, %v1492, inf
        %v2824 = vsel %vm2562, %v1496, inf
        %v2825 = vsel %vm2563, %v1498, inf
        %v2826 = vsel %vm2564, %v1502, inf
        %v2827 = vsel %vm2565, %v1504, inf
        %v2828 = vsel %vm2566, %v1508, inf
        %v2829 = vsel %vm2567, %v1510, inf
        %v2830 = vsel %vm2568, %v1514, inf
        %v2831 = vsel %vm2569, %v1516, inf
        %v2832 = vsel %vm2570, %v1520, inf
        %v2833 = vsel %vm2571, %v1522, inf
        %v2834 = vsel %vm2572, %v1526, inf
        %v2835 = vsel %vm2573, %v1528, inf
        %v2836 = vsel %vm2574, %v1532, inf
        %v2837 = vsel %vm2575, %v1534, inf
        %v2838 = vsel %vm2576, %v1538, inf
        %v2839 = vsel %vm2577, %v1540, inf
        %v2840 = vsel %vm2578, %v1544, inf
        %v2841 = vsel %vm2579, %v1546, inf
        %v2842 = vsel %vm2580, %v1550, inf
        %v2843 = vsel %vm2581, %v1552, inf
        %v2844 = vsel %vm2582, %v1556, inf
        %v2845 = vsel %vm2583, %v1558, inf
        %v2846 = vsel %vm2584, %v1562, inf
        %v2847 = vsel %vm2585, %v1564, inf
        %v2848 = vsel %vm2586, %v1568, inf
        %v2849 = vsel %vm2587, %v1570, inf
        %v2850 = vsel %vm2588, %v1574, inf
        %v2851 = vsel %vm2589, %v1576, inf
        %v2852 = vsel %vm2590, %v1580, inf
        %v2853 = vsel %vm2591, %v1582, inf
        %v2854 = vsel %vm2592, %v1586, inf
        %v2855 = vsel %vm2593, %v1588, inf
        %v2856 = vsel %vm2594, %v1592, inf
        %v2857 = vsel %vm2595, %v1594, inf
        %v2858 = vsel %vm2596, %v1598, inf
        %v2859 = vsel %vm2597, %v1600, inf
        %v2860 = vsel %vm2598, %v1604, inf
        %v2861 = vsel %vm2599, %v1606, inf
        %v2862 = vsel %vm2600, %v1610, inf
        %v2863 = vsel %vm2601, %v1612, inf
        %v2864 = vsel %vm2602, %v1616, inf
        %v2865 = vsel %vm2603, %v1618, inf
        %v2866 = vsel %vm2604, %v1622, inf
        %v2867 = vsel %vm2605, %v1624, inf
        %v2868 = vsel %vm2606, %v1628, inf
        %v2869 = vsel %vm2607, %v1630, inf
        %v2870 = vsel %vm2608, %v1634, inf
        %v2871 = vsel %vm2609, %v1636, inf
        %v2872 = vsel %vm2610, %v1640, inf
        %v2873 = vsel %vm2611, %v1642, inf
        %v2874 = vsel %vm2612, %v1646, inf
        %v2875 = vsel %vm2613, %v1648, inf
        %v2876 = vsel %vm2614, %v1652, inf
        %v2877 = vsel %vm2615, %v1654, inf
        %v2878 = vsel %vm2616, %v1658, inf
        %v2879 = vsel %vm2617, %v1660, inf
        %v2880 = vsel %vm2618, %v1664, inf
        %v2881 = vsel %vm2619, %v1666, inf
        %v2882 = vsel %vm2620, %v1670, inf
        %v2883 = vsel %vm2621, %v1672, inf
        %v2884 = vsel %vm2622, %v1676, inf
        %v2885 = vsel %vm2623, %v1678, inf
        %v2886 = vsel %vm2624, %v1682, inf
        %v2887 = vsel %vm2625, %v1684, inf
        %v2888 = vsel %vm2626, %v1688, inf
        %v2889 = vsel %vm2627, %v1690, inf
        %v2890 = vsel %vm2628, %v1694, inf
        %v2891 = vsel %vm2629, %v1696, inf
        %v2892 = vsel %vm2630, %v1700, inf
        %v2893 = vsel %vm2631, %v1702, inf
        %v2894 = vsel %vm2632, %v1706, inf
        %v2895 = vsel %vm2633, %v1708, inf
        %v2896 = vsel %vm2634, %v1712, inf
        %v2897 = vsel %vm2635, %v1714, inf
        %v2898 = vsel %vm2636, %v1718, inf
        %v2899 = vsel %vm2637, %v1720, inf
        %v2900 = vsel %vm2638, %v1724, inf
        %v2901 = vsel %vm2639, %v1726, inf
        %v2902 = vsel %vm2384, %v962, -inf
        %v2903 = vsel %vm2385, %v964, -inf
        %v2904 = vsel %vm2386, %v968, -inf
        %v2905 = vsel %vm2387, %v970, -inf
        %v2906 = vsel %vm2388, %v974, -inf
        %v2907 = vsel %vm2389, %v976, -inf
        %v2908 = vsel %vm2390, %v980, -inf
        %v2909 = vsel %vm2391, %v982, -inf
        %v2910 = vsel %vm2392, %v986, -inf
        %v2911 = vsel %vm2393, %v988, -inf
        %v2912 = vsel %vm2394, %v992, -inf
        %v2913 = vsel %vm2395, %v994, -inf
        %v2914 = vsel %vm2396, %v998, -inf
        %v2915 = vsel %vm2397, %v1000, -inf
        %v2916 = vsel %vm2398, %v1004, -inf
        %v2917 = vsel %vm2399, %v1006, -inf
        %v2918 = vsel %vm2400, %v1010, -inf
        %v2919 = vsel %vm2401, %v1012, -inf
        %v2920 = vsel %vm2402, %v1016, -inf
        %v2921 = vsel %vm2403, %v1018, -inf
        %v2922 = vsel %vm2404, %v1022, -inf
        %v2923 = vsel %vm2405, %v1024, -inf
        %v2924 = vsel %vm2406, %v1028, -inf
        %v2925 = vsel %vm2407, %v1030, -inf
        %v2926 = vsel %vm2408, %v1034, -inf
        %v2927 = vsel %vm2409, %v1036, -inf
        %v2928 = vsel %vm2410, %v1040, -inf
        %v2929 = vsel %vm2411, %v1042, -inf
        %v2930 = vsel %vm2412, %v1046, -inf
        %v2931 = vsel %vm2413, %v1048, -inf
        %v2932 = vsel %vm2414, %v1052, -inf
        %v2933 = vsel %vm2415, %v1054, -inf
        %v2934 = vsel %vm2416, %v1058, -inf
        %v2935 = vsel %vm2417, %v1060, -inf
        %v2936 = vsel %vm2418, %v1064, -inf
        %v2937 = vsel %vm2419, %v1066, -inf
        %v2938 = vsel %vm2420, %v1070, -inf
        %v2939 = vsel %vm2421, %v1072, -inf
        %v2940 = vsel %vm2422, %v1076, -inf
        %v2941 = vsel %vm2423, %v1078, -inf
        %v2942 = vsel %vm2424, %v1082, -inf
        %v2943 = vsel %vm2425, %v1084, -inf
        %v2944 = vsel %vm2426, %v1088, -inf
        %v2945 = vsel %vm2427, %v1090, -inf
        %v2946 = vsel %vm2428, %v1094, -inf
        %v2947 = vsel %vm2429, %v1096, -inf
        %v2948 = vsel %vm2430, %v1100, -inf
        %v2949 = vsel %vm2431, %v1102, -inf
        %v2950 = vsel %vm2432, %v1106, -inf
        %v2951 = vsel %vm2433, %v1108, -inf
        %v2952 = vsel %vm2434, %v1112, -inf
        %v2953 = vsel %vm2435, %v1114, -inf
        %v2954 = vsel %vm2436, %v1118, -inf
        %v2955 = vsel %vm2437, %v1120, -inf
        %v2956 = vsel %vm2438, %v1124, -inf
        %v2957 = vsel %vm2439, %v1126, -inf
        %v2958 = vsel %vm2440, %v1130, -inf
        %v2959 = vsel %vm2441, %v1132, -inf
        %v2960 = vsel %vm2442, %v1136, -inf
        %v2961 = vsel %vm2443, %v1138, -inf
        %v2962 = vsel %vm2444, %v1142, -inf
        %v2963 = vsel %vm2445, %v1144, -inf
        %v2964 = vsel %vm2446, %v1148, -inf
        %v2965 = vsel %vm2447, %v1150, -inf
        %v2966 = vsel %vm2448, %v1154, -inf
        %v2967 = vsel %vm2449, %v1156, -inf
        %v2968 = vsel %vm2450, %v1160, -inf
        %v2969 = vsel %vm2451, %v1162, -inf
        %v2970 = vsel %vm2452, %v1166, -inf
        %v2971 = vsel %vm2453, %v1168, -inf
        %v2972 = vsel %vm2454, %v1172, -inf
        %v2973 = vsel %vm2455, %v1174, -inf
        %v2974 = vsel %vm2456, %v1178, -inf
        %v2975 = vsel %vm2457, %v1180, -inf
        %v2976 = vsel %vm2458, %v1184, -inf
        %v2977 = vsel %vm2459, %v1186, -inf
        %v2978 = vsel %vm2460, %v1190, -inf
        %v2979 = vsel %vm2461, %v1192, -inf
        %v2980 = vsel %vm2462, %v1196, -inf
        %v2981 = vsel %vm2463, %v1198, -inf
        %v2982 = vsel %vm2464, %v1202, -inf
        %v2983 = vsel %vm2465, %v1204, -inf
        %v2984 = vsel %vm2466, %v1208, -inf
        %v2985 = vsel %vm2467, %v1210, -inf
        %v2986 = vsel %vm2468, %v1214, -inf
        %v2987 = vsel %vm2469, %v1216, -inf
        %v2988 = vsel %vm2470, %v1220, -inf
        %v2989 = vsel %vm2471, %v1222, -inf
        %v2990 = vsel %vm2472, %v1226, -inf
        %v2991 = vsel %vm2473, %v1228, -inf
        %v2992 = vsel %vm2474, %v1232, -inf
        %v2993 = vsel %vm2475, %v1234, -inf
        %v2994 = vsel %vm2476, %v1238, -inf
        %v2995 = vsel %vm2477, %v1240, -inf
        %v2996 = vsel %vm2478, %v1244, -inf
        %v2997 = vsel %vm2479, %v1246, -inf
        %v2998 = vsel %vm2480, %v1250, -inf
        %v2999 = vsel %vm2481, %v1252, -inf
        %v3000 = vsel %vm2482, %v1256, -inf
        %v3001 = vsel %vm2483, %v1258, -inf
        %v3002 = vsel %vm2484, %v1262, -inf
        %v3003 = vsel %vm2485, %v1264, -inf
        %v3004 = vsel %vm2486, %v1268, -inf
        %v3005 = vsel %vm2487, %v1270, -inf
        %v3006 = vsel %vm2488, %v1274, -inf
        %v3007 = vsel %vm2489, %v1276, -inf
        %v3008 = vsel %vm2490, %v1280, -inf
        %v3009 = vsel %vm2491, %v1282, -inf
        %v3010 = vsel %vm2492, %v1286, -inf
        %v3011 = vsel %vm2493, %v1288, -inf
        %v3012 = vsel %vm2494, %v1292, -inf
        %v3013 = vsel %vm2495, %v1294, -inf
        %v3014 = vsel %vm2496, %v1298, -inf
        %v3015 = vsel %vm2497, %v1300, -inf
        %v3016 = vsel %vm2498, %v1304, -inf
        %v3017 = vsel %vm2499, %v1306, -inf
        %v3018 = vsel %vm2500, %v1310, -inf
        %v3019 = vsel %vm2501, %v1312, -inf
        %v3020 = vsel %vm2502, %v1316, -inf
        %v3021 = vsel %vm2503, %v1318, -inf
        %v3022 = vsel %vm2504, %v1322, -inf
        %v3023 = vsel %vm2505, %v1324, -inf
        %v3024 = vsel %vm2506, %v1328, -inf
        %v3025 = vsel %vm2507, %v1330, -inf
        %v3026 = vsel %vm2508, %v1334, -inf
        %v3027 = vsel %vm2509, %v1336, -inf
        %v3028 = vsel %vm2510, %v1340, -inf
        %v3029 = vsel %vm2511, %v1342, -inf
        %v3030 = vsel %vm2512, %v1346, -inf
        %v3031 = vsel %vm2513, %v1348, -inf
        %v3032 = vsel %vm2514, %v1352, -inf
        %v3033 = vsel %vm2515, %v1354, -inf
        %v3034 = vsel %vm2516, %v1358, -inf
        %v3035 = vsel %vm2517, %v1360, -inf
        %v3036 = vsel %vm2518, %v1364, -inf
        %v3037 = vsel %vm2519, %v1366, -inf
        %v3038 = vsel %vm2520, %v1370, -inf
        %v3039 = vsel %vm2521, %v1372, -inf
        %v3040 = vsel %vm2522, %v1376, -inf
        %v3041 = vsel %vm2523, %v1378, -inf
        %v3042 = vsel %vm2524, %v1382, -inf
        %v3043 = vsel %vm2525, %v1384, -inf
        %v3044 = vsel %vm2526, %v1388, -inf
        %v3045 = vsel %vm2527, %v1390, -inf
        %v3046 = vsel %vm2528, %v1394, -inf
        %v3047 = vsel %vm2529, %v1396, -inf
        %v3048 = vsel %vm2530, %v1400, -inf
        %v3049 = vsel %vm2531, %v1402, -inf
        %v3050 = vsel %vm2532, %v1406, -inf
        %v3051 = vsel %vm2533, %v1408, -inf
        %v3052 = vsel %vm2534, %v1412, -inf
        %v3053 = vsel %vm2535, %v1414, -inf
        %v3054 = vsel %vm2536, %v1418, -inf
        %v3055 = vsel %vm2537, %v1420, -inf
        %v3056 = vsel %vm2538, %v1424, -inf
        %v3057 = vsel %vm2539, %v1426, -inf
        %v3058 = vsel %vm2540, %v1430, -inf
        %v3059 = vsel %vm2541, %v1432, -inf
        %v3060 = vsel %vm2542, %v1436, -inf
        %v3061 = vsel %vm2543, %v1438, -inf
        %v3062 = vsel %vm2544, %v1442, -inf
        %v3063 = vsel %vm2545, %v1444, -inf
        %v3064 = vsel %vm2546, %v1448, -inf
        %v3065 = vsel %vm2547, %v1450, -inf
        %v3066 = vsel %vm2548, %v1454, -inf
        %v3067 = vsel %vm2549, %v1456, -inf
        %v3068 = vsel %vm2550, %v1460, -inf
        %v3069 = vsel %vm2551, %v1462, -inf
        %v3070 = vsel %vm2552, %v1466, -inf
        %v3071 = vsel %vm2553, %v1468, -inf
        %v3072 = vsel %vm2554, %v1472, -inf
        %v3073 = vsel %vm2555, %v1474, -inf
        %v3074 = vsel %vm2556, %v1478, -inf
        %v3075 = vsel %vm2557, %v1480, -inf
        %v3076 = vsel %vm2558, %v1484, -inf
        %v3077 = vsel %vm2559, %v1486, -inf
        %v3078 = vsel %vm2560, %v1490, -inf
        %v3079 = vsel %vm2561, %v1492, -inf
        %v3080 = vsel %vm2562, %v1496, -inf
        %v3081 = vsel %vm2563, %v1498, -inf
        %v3082 = vsel %vm2564, %v1502, -inf
        %v3083 = vsel %vm2565, %v1504, -inf
        %v3084 = vsel %vm2566, %v1508, -inf
        %v3085 = vsel %vm2567, %v1510, -inf
        %v3086 = vsel %vm2568, %v1514, -inf
        %v3087 = vsel %vm2569, %v1516, -inf
        %v3088 = vsel %vm2570, %v1520, -inf
        %v3089 = vsel %vm2571, %v1522, -inf
        %v3090 = vsel %vm2572, %v1526, -inf
        %v3091 = vsel %vm2573, %v1528, -inf
        %v3092 = vsel %vm2574, %v1532, -inf
        %v3093 = vsel %vm2575, %v1534, -inf
        %v3094 = vsel %vm2576, %v1538, -inf
        %v3095 = vsel %vm2577, %v1540, -inf
        %v3096 = vsel %vm2578, %v1544, -inf
        %v3097 = vsel %vm2579, %v1546, -inf
        %v3098 = vsel %vm2580, %v1550, -inf
        %v3099 = vsel %vm2581, %v1552, -inf
        %v3100 = vsel %vm2582, %v1556, -inf
        %v3101 = vsel %vm2583, %v1558, -inf
        %v3102 = vsel %vm2584, %v1562, -inf
        %v3103 = vsel %vm2585, %v1564, -inf
        %v3104 = vsel %vm2586, %v1568, -inf
        %v3105 = vsel %vm2587, %v1570, -inf
        %v3106 = vsel %vm2588, %v1574, -inf
        %v3107 = vsel %vm2589, %v1576, -inf
        %v3108 = vsel %vm2590, %v1580, -inf
        %v3109 = vsel %vm2591, %v1582, -inf
        %v3110 = vsel %vm2592, %v1586, -inf
        %v3111 = vsel %vm2593, %v1588, -inf
        %v3112 = vsel %vm2594, %v1592, -inf
        %v3113 = vsel %vm2595, %v1594, -inf
        %v3114 = vsel %vm2596, %v1598, -inf
        %v3115 = vsel %vm2597, %v1600, -inf
        %v3116 = vsel %vm2598, %v1604, -inf
        %v3117 = vsel %vm2599, %v1606, -inf
        %v3118 = vsel %vm2600, %v1610, -inf
        %v3119 = vsel %vm2601, %v1612, -inf
        %v3120 = vsel %vm2602, %v1616, -inf
        %v3121 = vsel %vm2603, %v1618, -inf
        %v3122 = vsel %vm2604, %v1622, -inf
        %v3123 = vsel %vm2605, %v1624, -inf
        %v3124 = vsel %vm2606, %v1628, -inf
        %v3125 = vsel %vm2607, %v1630, -inf
        %v3126 = vsel %vm2608, %v1634, -inf
        %v3127 = vsel %vm2609, %v1636, -inf
        %v3128 = vsel %vm2610, %v1640, -inf
        %v3129 = vsel %vm2611, %v1642, -inf
        %v3130 = vsel %vm2612, %v1646, -inf
        %v3131 = vsel %vm2613, %v1648, -inf
        %v3132 = vsel %vm2614, %v1652, -inf
        %v3133 = vsel %vm2615, %v1654, -inf
        %v3134 = vsel %vm2616, %v1658, -inf
        %v3135 = vsel %vm2617, %v1660, -inf
        %v3136 = vsel %vm2618, %v1664, -inf
        %v3137 = vsel %vm2619, %v1666, -inf
        %v3138 = vsel %vm2620, %v1670, -inf
        %v3139 = vsel %vm2621, %v1672, -inf
        %v3140 = vsel %vm2622, %v1676, -inf
        %v3141 = vsel %vm2623, %v1678, -inf
        %v3142 = vsel %vm2624, %v1682, -inf
        %v3143 = vsel %vm2625, %v1684, -inf
        %v3144 = vsel %vm2626, %v1688, -inf
        %v3145 = vsel %vm2627, %v1690, -inf
        %v3146 = vsel %vm2628, %v1694, -inf
        %v3147 = vsel %vm2629, %v1696, -inf
        %v3148 = vsel %vm2630, %v1700, -inf
        %v3149 = vsel %vm2631, %v1702, -inf
        %v3150 = vsel %vm2632, %v1706, -inf
        %v3151 = vsel %vm2633, %v1708, -inf
        %v3152 = vsel %vm2634, %v1712, -inf
        %v3153 = vsel %vm2635, %v1714, -inf
        %v3154 = vsel %vm2636, %v1718, -inf
        %v3155 = vsel %vm2637, %v1720, -inf
        %v3156 = vsel %vm2638, %v1724, -inf
        %v3157 = vsel %vm2639, %v1726, -inf
        %v3158 = vld [vmem:[%s219] sm:$0x1]
        %v3159 = vmin.f32 %v2646, %v2650
        %v3160 = vmin.f32 %v2647, %v2651
        %v3161 = vmin.f32 %v2648, %v2652
        %v3162 = vmin.f32 %v2649, %v2653
        %v3163 = vmin.f32 %v3159, %v2654
        %v3164 = vmin.f32 %v3160, %v2655
        %v3165 = vmin.f32 %v3161, %v2656
        %v3166 = vmin.f32 %v3162, %v2657
        %v3167 = vmin.f32 %v3163, %v2658
        %v3168 = vmin.f32 %v3164, %v2659
        %v3169 = vmin.f32 %v3165, %v2660
        %v3170 = vmin.f32 %v3166, %v2661
        %v3171 = vmin.f32 %v3167, %v2662
        %v3172 = vmin.f32 %v3168, %v2663
        %v3173 = vmin.f32 %v3169, %v2664
        %v3174 = vmin.f32 %v3170, %v2665
        %v3175 = vmin.f32 %v3171, %v2666
        %v3176 = vmin.f32 %v3172, %v2667
        %v3177 = vmin.f32 %v3173, %v2668
        %v3178 = vmin.f32 %v3174, %v2669
        %v3179 = vmin.f32 %v3175, %v2670
        %v3180 = vmin.f32 %v3176, %v2671
        %v3181 = vmin.f32 %v3177, %v2672
        %v3182 = vmin.f32 %v3178, %v2673
        %v3183 = vmin.f32 %v3179, %v2674
        %v3184 = vmin.f32 %v3180, %v2675
        %v3185 = vmin.f32 %v3181, %v2676
        %v3186 = vmin.f32 %v3182, %v2677
        %v3187 = vmin.f32 %v3183, %v2678
        %v3188 = vmin.f32 %v3184, %v2679
        %v3189 = vmin.f32 %v3185, %v2680
        %v3190 = vmin.f32 %v3186, %v2681
        %v3191 = vmin.f32 %v3187, %v2682
        %v3192 = vmin.f32 %v3188, %v2683
        %v3193 = vmin.f32 %v3189, %v2684
        %v3194 = vmin.f32 %v3190, %v2685
        %v3195 = vmin.f32 %v3191, %v2686
        %v3196 = vmin.f32 %v3192, %v2687
        %v3197 = vmin.f32 %v3193, %v2688
        %v3198 = vmin.f32 %v3194, %v2689
        %v3199 = vmin.f32 %v3195, %v2690
        %v3200 = vmin.f32 %v3196, %v2691
        %v3201 = vmin.f32 %v3197, %v2692
        %v3202 = vmin.f32 %v3198, %v2693
        %v3203 = vmin.f32 %v3199, %v2694
        %v3204 = vmin.f32 %v3200, %v2695
        %v3205 = vmin.f32 %v3201, %v2696
        %v3206 = vmin.f32 %v3202, %v2697
        %v3207 = vmin.f32 %v3203, %v2698
        %v3208 = vmin.f32 %v3204, %v2699
        %v3209 = vmin.f32 %v3205, %v2700
        %v3210 = vmin.f32 %v3206, %v2701
        %v3211 = vmin.f32 %v3207, %v2702
        %v3212 = vmin.f32 %v3208, %v2703
        %v3213 = vmin.f32 %v3209, %v2704
        %v3214 = vmin.f32 %v3210, %v2705
        %v3215 = vmin.f32 %v3211, %v2706
        %v3216 = vmin.f32 %v3212, %v2707
        %v3217 = vmin.f32 %v3213, %v2708
        %v3218 = vmin.f32 %v3214, %v2709
        %v3219 = vmin.f32 %v3215, %v2710
        %v3220 = vmin.f32 %v3216, %v2711
        %v3221 = vmin.f32 %v3217, %v2712
        %v3222 = vmin.f32 %v3218, %v2713
        %v3223 = vmin.f32 %v3219, %v2714
        %v3224 = vmin.f32 %v3220, %v2715
        %v3225 = vmin.f32 %v3221, %v2716
        %v3226 = vmin.f32 %v3222, %v2717
        %v3227 = vmin.f32 %v3223, %v2718
        %v3228 = vmin.f32 %v3224, %v2719
        %v3229 = vmin.f32 %v3225, %v2720
        %v3230 = vmin.f32 %v3226, %v2721
        %v3231 = vmin.f32 %v3227, %v2722
        %v3232 = vmin.f32 %v3228, %v2723
        %v3233 = vmin.f32 %v3229, %v2724
        %v3234 = vmin.f32 %v3230, %v2725
        %v3235 = vmin.f32 %v3231, %v2726
        %v3236 = vmin.f32 %v3232, %v2727
        %v3237 = vmin.f32 %v3233, %v2728
        %v3238 = vmin.f32 %v3234, %v2729
        %v3239 = vmin.f32 %v3235, %v2730
        %v3240 = vmin.f32 %v3236, %v2731
        %v3241 = vmin.f32 %v3237, %v2732
        %v3242 = vmin.f32 %v3238, %v2733
        %v3243 = vmin.f32 %v3239, %v2734
        %v3244 = vmin.f32 %v3240, %v2735
        %v3245 = vmin.f32 %v3241, %v2736
        %v3246 = vmin.f32 %v3242, %v2737
        %v3247 = vmin.f32 %v3243, %v2738
        %v3248 = vmin.f32 %v3244, %v2739
        %v3249 = vmin.f32 %v3245, %v2740
        %v3250 = vmin.f32 %v3246, %v2741
        %v3251 = vmin.f32 %v3247, %v2742
        %v3252 = vmin.f32 %v3248, %v2743
        %v3253 = vmin.f32 %v3249, %v2744
        %v3254 = vmin.f32 %v3250, %v2745
        %v3255 = vmin.f32 %v3251, %v2746
        %v3256 = vmin.f32 %v3252, %v2747
        %v3257 = vmin.f32 %v3253, %v2748
        %v3258 = vmin.f32 %v3254, %v2749
        %v3259 = vmin.f32 %v3255, %v2750
        %v3260 = vmin.f32 %v3256, %v2751
        %v3261 = vmin.f32 %v3257, %v2752
        %v3262 = vmin.f32 %v3258, %v2753
        %v3263 = vmin.f32 %v3259, %v2754
        %v3264 = vmin.f32 %v3260, %v2755
        %v3265 = vmin.f32 %v3261, %v2756
        %v3266 = vmin.f32 %v3262, %v2757
        %v3267 = vmin.f32 %v3263, %v2758
        %v3268 = vmin.f32 %v3264, %v2759
        %v3269 = vmin.f32 %v3265, %v2760
        %v3270 = vmin.f32 %v3266, %v2761
        %v3271 = vmin.f32 %v3267, %v2762
        %v3272 = vmin.f32 %v3268, %v2763
        %v3273 = vmin.f32 %v3269, %v2764
        %v3274 = vmin.f32 %v3270, %v2765
        %v3275 = vmin.f32 %v3271, %v2766
        %v3276 = vmin.f32 %v3272, %v2767
        %v3277 = vmin.f32 %v3273, %v2768
        %v3278 = vmin.f32 %v3274, %v2769
        %v3279 = vmin.f32 %v3275, %v2770
        %v3280 = vmin.f32 %v3276, %v2771
        %v3281 = vmin.f32 %v3277, %v2772
        %v3282 = vmin.f32 %v3278, %v2773
        %v3283 = vmin.f32 %v3279, %v2774
        %v3284 = vmin.f32 %v3280, %v2775
        %v3285 = vmin.f32 %v3281, %v2776
        %v3286 = vmin.f32 %v3282, %v2777
        %v3287 = vmin.f32 %v3283, %v2778
        %v3288 = vmin.f32 %v3284, %v2779
        %v3289 = vmin.f32 %v3285, %v2780
        %v3290 = vmin.f32 %v3286, %v2781
        %v3291 = vmin.f32 %v3287, %v2782
        %v3292 = vmin.f32 %v3288, %v2783
        %v3293 = vmin.f32 %v3289, %v2784
        %v3294 = vmin.f32 %v3290, %v2785
        %v3295 = vmin.f32 %v3291, %v2786
        %v3296 = vmin.f32 %v3292, %v2787
        %v3297 = vmin.f32 %v3293, %v2788
        %v3298 = vmin.f32 %v3294, %v2789
        %v3299 = vmin.f32 %v3295, %v2790
        %v3300 = vmin.f32 %v3296, %v2791
        %v3301 = vmin.f32 %v3297, %v2792
        %v3302 = vmin.f32 %v3298, %v2793
        %v3303 = vmin.f32 %v3299, %v2794
        %v3304 = vmin.f32 %v3300, %v2795
        %v3305 = vmin.f32 %v3301, %v2796
        %v3306 = vmin.f32 %v3302, %v2797
        %v3307 = vmin.f32 %v3303, %v2798
        %v3308 = vmin.f32 %v3304, %v2799
        %v3309 = vmin.f32 %v3305, %v2800
        %v3310 = vmin.f32 %v3306, %v2801
        %v3311 = vmin.f32 %v3307, %v2802
        %v3312 = vmin.f32 %v3308, %v2803
        %v3313 = vmin.f32 %v3309, %v2804
        %v3314 = vmin.f32 %v3310, %v2805
        %v3315 = vmin.f32 %v3311, %v2806
        %v3316 = vmin.f32 %v3312, %v2807
        %v3317 = vmin.f32 %v3313, %v2808
        %v3318 = vmin.f32 %v3314, %v2809
        %v3319 = vmin.f32 %v3315, %v2810
        %v3320 = vmin.f32 %v3316, %v2811
        %v3321 = vmin.f32 %v3317, %v2812
        %v3322 = vmin.f32 %v3318, %v2813
        %v3323 = vmin.f32 %v3319, %v2814
        %v3324 = vmin.f32 %v3320, %v2815
        %v3325 = vmin.f32 %v3321, %v2816
        %v3326 = vmin.f32 %v3322, %v2817
        %v3327 = vmin.f32 %v3323, %v2818
        %v3328 = vmin.f32 %v3324, %v2819
        %v3329 = vmin.f32 %v3325, %v2820
        %v3330 = vmin.f32 %v3326, %v2821
        %v3331 = vmin.f32 %v3327, %v2822
        %v3332 = vmin.f32 %v3328, %v2823
        %v3333 = vmin.f32 %v3329, %v2824
        %v3334 = vmin.f32 %v3330, %v2825
        %v3335 = vmin.f32 %v3331, %v2826
        %v3336 = vmin.f32 %v3332, %v2827
        %v3337 = vmin.f32 %v3333, %v2828
        %v3338 = vmin.f32 %v3334, %v2829
        %v3339 = vmin.f32 %v3335, %v2830
        %v3340 = vmin.f32 %v3336, %v2831
        %v3341 = vmin.f32 %v3337, %v2832
        %v3342 = vmin.f32 %v3338, %v2833
        %v3343 = vmin.f32 %v3339, %v2834
        %v3344 = vmin.f32 %v3340, %v2835
        %v3345 = vmin.f32 %v3341, %v2836
        %v3346 = vmin.f32 %v3342, %v2837
        %v3347 = vmin.f32 %v3343, %v2838
        %v3348 = vmin.f32 %v3344, %v2839
        %v3349 = vmin.f32 %v3345, %v2840
        %v3350 = vmin.f32 %v3346, %v2841
        %v3351 = vmin.f32 %v3347, %v2842
        %v3352 = vmin.f32 %v3348, %v2843
        %v3353 = vmin.f32 %v3349, %v2844
        %v3354 = vmin.f32 %v3350, %v2845
        %v3355 = vmin.f32 %v3351, %v2846
        %v3356 = vmin.f32 %v3352, %v2847
        %v3357 = vmin.f32 %v3353, %v2848
        %v3358 = vmin.f32 %v3354, %v2849
        %v3359 = vmin.f32 %v3355, %v2850
        %v3360 = vmin.f32 %v3356, %v2851
        %v3361 = vmin.f32 %v3357, %v2852
        %v3362 = vmin.f32 %v3358, %v2853
        %v3363 = vmin.f32 %v3359, %v2854
        %v3364 = vmin.f32 %v3360, %v2855
        %v3365 = vmin.f32 %v3361, %v2856
        %v3366 = vmin.f32 %v3362, %v2857
        %v3367 = vmin.f32 %v3363, %v2858
        %v3368 = vmin.f32 %v3364, %v2859
        %v3369 = vmin.f32 %v3365, %v2860
        %v3370 = vmin.f32 %v3366, %v2861
        %v3371 = vmin.f32 %v3367, %v2862
        %v3372 = vmin.f32 %v3368, %v2863
        %v3373 = vmin.f32 %v3369, %v2864
        %v3374 = vmin.f32 %v3370, %v2865
        %v3375 = vmin.f32 %v3371, %v2866
        %v3376 = vmin.f32 %v3372, %v2867
        %v3377 = vmin.f32 %v3373, %v2868
        %v3378 = vmin.f32 %v3374, %v2869
        %v3379 = vmin.f32 %v3375, %v2870
        %v3380 = vmin.f32 %v3376, %v2871
        %v3381 = vmin.f32 %v3377, %v2872
        %v3382 = vmin.f32 %v3378, %v2873
        %v3383 = vmin.f32 %v3379, %v2874
        %v3384 = vmin.f32 %v3380, %v2875
        %v3385 = vmin.f32 %v3381, %v2876
        %v3386 = vmin.f32 %v3382, %v2877
        %v3387 = vmin.f32 %v3383, %v2878
        %v3388 = vmin.f32 %v3384, %v2879
        %v3389 = vmin.f32 %v3385, %v2880
        %v3390 = vmin.f32 %v3386, %v2881
        %v3391 = vmin.f32 %v3387, %v2882
        %v3392 = vmin.f32 %v3388, %v2883
        %v3393 = vmin.f32 %v3389, %v2884
        %v3394 = vmin.f32 %v3390, %v2885
        %v3395 = vmin.f32 %v3391, %v2886
        %v3396 = vmin.f32 %v3392, %v2887
        %v3397 = vmin.f32 %v3393, %v2888
        %v3398 = vmin.f32 %v3394, %v2889
        %v3399 = vmin.f32 %v3395, %v2890
        %v3400 = vmin.f32 %v3396, %v2891
        %v3401 = vmin.f32 %v3397, %v2892
        %v3402 = vmin.f32 %v3398, %v2893
        %v3403 = vmin.f32 %v3399, %v2894
        %v3404 = vmin.f32 %v3400, %v2895
        %v3405 = vmin.f32 %v3401, %v2896
        %v3406 = vmin.f32 %v3402, %v2897
        %v3407 = vmin.f32 %v3403, %v2898
        %v3408 = vmin.f32 %v3404, %v2899
        %v3409 = vmin.f32 %v3405, %v2900
        %v3410 = vmin.f32 %v3406, %v2901
        %v3411 = vmin.f32 %v3407, %v3408
        %v3412 = vmin.f32 %v3409, %v3410
        %v3413 = vmin.f32 %v3411, %v3412
        %3414 = vmin.xlane.f32.xlu0 %v3413
        %v3415 = vpop.xlane.xlu0 %3414
        %v3416 = vrot.slane %v3415, 4
        %v3417 = vmin.f32 %v3415, %v3416
        %v3418 = vrot.slane %v3417, 2
        %v3419 = vmin.f32 %v3417, %v3418
        %v3420 = vrot.slane %v3419, 1
        %v3421 = vmin.f32 %v3419, %v3420
        %s3422 = vtos %v3421
        %v3423 = vstv %s3422
        %v3424 = vmin.f32 %v3158, %v3423
        %3425 = vst [vmem:[%s219] sm:$0x1] %v3424
        %v3426 = vld [vmem:[%s225] sm:$0x1]
        %v3427 = vmax.f32 %v2902, %v2906
        %v3428 = vmax.f32 %v2903, %v2907
        %v3429 = vmax.f32 %v2904, %v2908
        %v3430 = vmax.f32 %v2905, %v2909
        %v3431 = vmax.f32 %v3427, %v2910
        %v3432 = vmax.f32 %v3428, %v2911
        %v3433 = vmax.f32 %v3429, %v2912
        %v3434 = vmax.f32 %v3430, %v2913
        %v3435 = vmax.f32 %v3431, %v2914
        %v3436 = vmax.f32 %v3432, %v2915
        %v3437 = vmax.f32 %v3433, %v2916
        %v3438 = vmax.f32 %v3434, %v2917
        %v3439 = vmax.f32 %v3435, %v2918
        %v3440 = vmax.f32 %v3436, %v2919
        %v3441 = vmax.f32 %v3437, %v2920
        %v3442 = vmax.f32 %v3438, %v2921
        %v3443 = vmax.f32 %v3439, %v2922
        %v3444 = vmax.f32 %v3440, %v2923
        %v3445 = vmax.f32 %v3441, %v2924
        %v3446 = vmax.f32 %v3442, %v2925
        %v3447 = vmax.f32 %v3443, %v2926
        %v3448 = vmax.f32 %v3444, %v2927
        %v3449 = vmax.f32 %v3445, %v2928
        %v3450 = vmax.f32 %v3446, %v2929
        %v3451 = vmax.f32 %v3447, %v2930
        %v3452 = vmax.f32 %v3448, %v2931
        %v3453 = vmax.f32 %v3449, %v2932
        %v3454 = vmax.f32 %v3450, %v2933
        %v3455 = vmax.f32 %v3451, %v2934
        %v3456 = vmax.f32 %v3452, %v2935
        %v3457 = vmax.f32 %v3453, %v2936
        %v3458 = vmax.f32 %v3454, %v2937
        %v3459 = vmax.f32 %v3455, %v2938
        %v3460 = vmax.f32 %v3456, %v2939
        %v3461 = vmax.f32 %v3457, %v2940
        %v3462 = vmax.f32 %v3458, %v2941
        %v3463 = vmax.f32 %v3459, %v2942
        %v3464 = vmax.f32 %v3460, %v2943
        %v3465 = vmax.f32 %v3461, %v2944
        %v3466 = vmax.f32 %v3462, %v2945
        %v3467 = vmax.f32 %v3463, %v2946
        %v3468 = vmax.f32 %v3464, %v2947
        %v3469 = vmax.f32 %v3465, %v2948
        %v3470 = vmax.f32 %v3466, %v2949
        %v3471 = vmax.f32 %v3467, %v2950
        %v3472 = vmax.f32 %v3468, %v2951
        %v3473 = vmax.f32 %v3469, %v2952
        %v3474 = vmax.f32 %v3470, %v2953
        %v3475 = vmax.f32 %v3471, %v2954
        %v3476 = vmax.f32 %v3472, %v2955
        %v3477 = vmax.f32 %v3473, %v2956
        %v3478 = vmax.f32 %v3474, %v2957
        %v3479 = vmax.f32 %v3475, %v2958
        %v3480 = vmax.f32 %v3476, %v2959
        %v3481 = vmax.f32 %v3477, %v2960
        %v3482 = vmax.f32 %v3478, %v2961
        %v3483 = vmax.f32 %v3479, %v2962
        %v3484 = vmax.f32 %v3480, %v2963
        %v3485 = vmax.f32 %v3481, %v2964
        %v3486 = vmax.f32 %v3482, %v2965
        %v3487 = vmax.f32 %v3483, %v2966
        %v3488 = vmax.f32 %v3484, %v2967
        %v3489 = vmax.f32 %v3485, %v2968
        %v3490 = vmax.f32 %v3486, %v2969
        %v3491 = vmax.f32 %v3487, %v2970
        %v3492 = vmax.f32 %v3488, %v2971
        %v3493 = vmax.f32 %v3489, %v2972
        %v3494 = vmax.f32 %v3490, %v2973
        %v3495 = vmax.f32 %v3491, %v2974
        %v3496 = vmax.f32 %v3492, %v2975
        %v3497 = vmax.f32 %v3493, %v2976
        %v3498 = vmax.f32 %v3494, %v2977
        %v3499 = vmax.f32 %v3495, %v2978
        %v3500 = vmax.f32 %v3496, %v2979
        %v3501 = vmax.f32 %v3497, %v2980
        %v3502 = vmax.f32 %v3498, %v2981
        %v3503 = vmax.f32 %v3499, %v2982
        %v3504 = vmax.f32 %v3500, %v2983
        %v3505 = vmax.f32 %v3501, %v2984
        %v3506 = vmax.f32 %v3502, %v2985
        %v3507 = vmax.f32 %v3503, %v2986
        %v3508 = vmax.f32 %v3504, %v2987
        %v3509 = vmax.f32 %v3505, %v2988
        %v3510 = vmax.f32 %v3506, %v2989
        %v3511 = vmax.f32 %v3507, %v2990
        %v3512 = vmax.f32 %v3508, %v2991
        %v3513 = vmax.f32 %v3509, %v2992
        %v3514 = vmax.f32 %v3510, %v2993
        %v3515 = vmax.f32 %v3511, %v2994
        %v3516 = vmax.f32 %v3512, %v2995
        %v3517 = vmax.f32 %v3513, %v2996
        %v3518 = vmax.f32 %v3514, %v2997
        %v3519 = vmax.f32 %v3515, %v2998
        %v3520 = vmax.f32 %v3516, %v2999
        %v3521 = vmax.f32 %v3517, %v3000
        %v3522 = vmax.f32 %v3518, %v3001
        %v3523 = vmax.f32 %v3519, %v3002
        %v3524 = vmax.f32 %v3520, %v3003
        %v3525 = vmax.f32 %v3521, %v3004
        %v3526 = vmax.f32 %v3522, %v3005
        %v3527 = vmax.f32 %v3523, %v3006
        %v3528 = vmax.f32 %v3524, %v3007
        %v3529 = vmax.f32 %v3525, %v3008
        %v3530 = vmax.f32 %v3526, %v3009
        %v3531 = vmax.f32 %v3527, %v3010
        %v3532 = vmax.f32 %v3528, %v3011
        %v3533 = vmax.f32 %v3529, %v3012
        %v3534 = vmax.f32 %v3530, %v3013
        %v3535 = vmax.f32 %v3531, %v3014
        %v3536 = vmax.f32 %v3532, %v3015
        %v3537 = vmax.f32 %v3533, %v3016
        %v3538 = vmax.f32 %v3534, %v3017
        %v3539 = vmax.f32 %v3535, %v3018
        %v3540 = vmax.f32 %v3536, %v3019
        %v3541 = vmax.f32 %v3537, %v3020
        %v3542 = vmax.f32 %v3538, %v3021
        %v3543 = vmax.f32 %v3539, %v3022
        %v3544 = vmax.f32 %v3540, %v3023
        %v3545 = vmax.f32 %v3541, %v3024
        %v3546 = vmax.f32 %v3542, %v3025
        %v3547 = vmax.f32 %v3543, %v3026
        %v3548 = vmax.f32 %v3544, %v3027
        %v3549 = vmax.f32 %v3545, %v3028
        %v3550 = vmax.f32 %v3546, %v3029
        %v3551 = vmax.f32 %v3547, %v3030
        %v3552 = vmax.f32 %v3548, %v3031
        %v3553 = vmax.f32 %v3549, %v3032
        %v3554 = vmax.f32 %v3550, %v3033
        %v3555 = vmax.f32 %v3551, %v3034
        %v3556 = vmax.f32 %v3552, %v3035
        %v3557 = vmax.f32 %v3553, %v3036
        %v3558 = vmax.f32 %v3554, %v3037
        %v3559 = vmax.f32 %v3555, %v3038
        %v3560 = vmax.f32 %v3556, %v3039
        %v3561 = vmax.f32 %v3557, %v3040
        %v3562 = vmax.f32 %v3558, %v3041
        %v3563 = vmax.f32 %v3559, %v3042
        %v3564 = vmax.f32 %v3560, %v3043
        %v3565 = vmax.f32 %v3561, %v3044
        %v3566 = vmax.f32 %v3562, %v3045
        %v3567 = vmax.f32 %v3563, %v3046
        %v3568 = vmax.f32 %v3564, %v3047
        %v3569 = vmax.f32 %v3565, %v3048
        %v3570 = vmax.f32 %v3566, %v3049
        %v3571 = vmax.f32 %v3567, %v3050
        %v3572 = vmax.f32 %v3568, %v3051
        %v3573 = vmax.f32 %v3569, %v3052
        %v3574 = vmax.f32 %v3570, %v3053
        %v3575 = vmax.f32 %v3571, %v3054
        %v3576 = vmax.f32 %v3572, %v3055
        %v3577 = vmax.f32 %v3573, %v3056
        %v3578 = vmax.f32 %v3574, %v3057
        %v3579 = vmax.f32 %v3575, %v3058
        %v3580 = vmax.f32 %v3576, %v3059
        %v3581 = vmax.f32 %v3577, %v3060
        %v3582 = vmax.f32 %v3578, %v3061
        %v3583 = vmax.f32 %v3579, %v3062
        %v3584 = vmax.f32 %v3580, %v3063
        %v3585 = vmax.f32 %v3581, %v3064
        %v3586 = vmax.f32 %v3582, %v3065
        %v3587 = vmax.f32 %v3583, %v3066
        %v3588 = vmax.f32 %v3584, %v3067
        %v3589 = vmax.f32 %v3585, %v3068
        %v3590 = vmax.f32 %v3586, %v3069
        %v3591 = vmax.f32 %v3587, %v3070
        %v3592 = vmax.f32 %v3588, %v3071
        %v3593 = vmax.f32 %v3589, %v3072
        %v3594 = vmax.f32 %v3590, %v3073
        %v3595 = vmax.f32 %v3591, %v3074
        %v3596 = vmax.f32 %v3592, %v3075
        %v3597 = vmax.f32 %v3593, %v3076
        %v3598 = vmax.f32 %v3594, %v3077
        %v3599 = vmax.f32 %v3595, %v3078
        %v3600 = vmax.f32 %v3596, %v3079
        %v3601 = vmax.f32 %v3597, %v3080
        %v3602 = vmax.f32 %v3598, %v3081
        %v3603 = vmax.f32 %v3599, %v3082
        %v3604 = vmax.f32 %v3600, %v3083
        %v3605 = vmax.f32 %v3601, %v3084
        %v3606 = vmax.f32 %v3602, %v3085
        %v3607 = vmax.f32 %v3603, %v3086
        %v3608 = vmax.f32 %v3604, %v3087
        %v3609 = vmax.f32 %v3605, %v3088
        %v3610 = vmax.f32 %v3606, %v3089
        %v3611 = vmax.f32 %v3607, %v3090
        %v3612 = vmax.f32 %v3608, %v3091
        %v3613 = vmax.f32 %v3609, %v3092
        %v3614 = vmax.f32 %v3610, %v3093
        %v3615 = vmax.f32 %v3611, %v3094
        %v3616 = vmax.f32 %v3612, %v3095
        %v3617 = vmax.f32 %v3613, %v3096
        %v3618 = vmax.f32 %v3614, %v3097
        %v3619 = vmax.f32 %v3615, %v3098
        %v3620 = vmax.f32 %v3616, %v3099
        %v3621 = vmax.f32 %v3617, %v3100
        %v3622 = vmax.f32 %v3618, %v3101
        %v3623 = vmax.f32 %v3619, %v3102
        %v3624 = vmax.f32 %v3620, %v3103
        %v3625 = vmax.f32 %v3621, %v3104
        %v3626 = vmax.f32 %v3622, %v3105
        %v3627 = vmax.f32 %v3623, %v3106
        %v3628 = vmax.f32 %v3624, %v3107
        %v3629 = vmax.f32 %v3625, %v3108
        %v3630 = vmax.f32 %v3626, %v3109
        %v3631 = vmax.f32 %v3627, %v3110
        %v3632 = vmax.f32 %v3628, %v3111
        %v3633 = vmax.f32 %v3629, %v3112
        %v3634 = vmax.f32 %v3630, %v3113
        %v3635 = vmax.f32 %v3631, %v3114
        %v3636 = vmax.f32 %v3632, %v3115
        %v3637 = vmax.f32 %v3633, %v3116
        %v3638 = vmax.f32 %v3634, %v3117
        %v3639 = vmax.f32 %v3635, %v3118
        %v3640 = vmax.f32 %v3636, %v3119
        %v3641 = vmax.f32 %v3637, %v3120
        %v3642 = vmax.f32 %v3638, %v3121
        %v3643 = vmax.f32 %v3639, %v3122
        %v3644 = vmax.f32 %v3640, %v3123
        %v3645 = vmax.f32 %v3641, %v3124
        %v3646 = vmax.f32 %v3642, %v3125
        %v3647 = vmax.f32 %v3643, %v3126
        %v3648 = vmax.f32 %v3644, %v3127
        %v3649 = vmax.f32 %v3645, %v3128
        %v3650 = vmax.f32 %v3646, %v3129
        %v3651 = vmax.f32 %v3647, %v3130
        %v3652 = vmax.f32 %v3648, %v3131
        %v3653 = vmax.f32 %v3649, %v3132
        %v3654 = vmax.f32 %v3650, %v3133
        %v3655 = vmax.f32 %v3651, %v3134
        %v3656 = vmax.f32 %v3652, %v3135
        %v3657 = vmax.f32 %v3653, %v3136
        %v3658 = vmax.f32 %v3654, %v3137
        %v3659 = vmax.f32 %v3655, %v3138
        %v3660 = vmax.f32 %v3656, %v3139
        %v3661 = vmax.f32 %v3657, %v3140
        %v3662 = vmax.f32 %v3658, %v3141
        %v3663 = vmax.f32 %v3659, %v3142
        %v3664 = vmax.f32 %v3660, %v3143
        %v3665 = vmax.f32 %v3661, %v3144
        %v3666 = vmax.f32 %v3662, %v3145
        %v3667 = vmax.f32 %v3663, %v3146
        %v3668 = vmax.f32 %v3664, %v3147
        %v3669 = vmax.f32 %v3665, %v3148
        %v3670 = vmax.f32 %v3666, %v3149
        %v3671 = vmax.f32 %v3667, %v3150
        %v3672 = vmax.f32 %v3668, %v3151
        %v3673 = vmax.f32 %v3669, %v3152
        %v3674 = vmax.f32 %v3670, %v3153
        %v3675 = vmax.f32 %v3671, %v3154
        %v3676 = vmax.f32 %v3672, %v3155
        %v3677 = vmax.f32 %v3673, %v3156
        %v3678 = vmax.f32 %v3674, %v3157
        %v3679 = vmax.f32 %v3675, %v3676
        %v3680 = vmax.f32 %v3677, %v3678
        %v3681 = vmax.f32 %v3679, %v3680
        %3682 = vmax.xlane.f32.xlu0 %v3681
        %v3683 = vpop.xlane.xlu0 %3682
        %v3684 = vrot.slane %v3683, 4
        %v3685 = vmax.f32 %v3683, %v3684
        %v3686 = vrot.slane %v3685, 2
        %v3687 = vmax.f32 %v3685, %v3686
        %v3688 = vrot.slane %v3687, 1
        %v3689 = vmax.f32 %v3687, %v3688
        %s3690 = vtos %v3689
        %v3691 = vstv %s3690
        %v3692 = vmax.f32 %v3426, %v3691
        %3693 = vst [vmem:[%s225] sm:$0x1] %v3692
        %s3694 = sand.u32 %s93, 1
        %s3695 = scalar_lea.sflag [#allocation3], %s3694
        %s3696 = sand.u32 %s93, 1
        %s3697 = scalar_lea.vmem [#allocation2], %s3696
        %s3698 = sand.u32 %s119, 1
        %s3699 = scalar_lea.sflag [#allocation5], %s3698
        %s3700 = sand.u32 %s119, 1
        %s3701 = scalar_lea.vmem [#allocation4], %s3700
        // Predicated region
        $region33: #{tpu_custom_call.1} parent=27 // pred_check
          %p3702 = pneg %p103
        $region34: #{tpu_custom_call.1} parent=27 // pred_check_branch
          %3704 = sbr.rel (%p3702) target = $region36
        $region35: #{tpu_custom_call.1} parent=27 // pred_region
          %s3706 = ssub.s32 16, 16
          %3707 = vsyncadd %s3695, %s3706
          %s3708 = smul.addr %s25, 16
          %s3709 = scalar_lea.hbm %s2, %s3708
          %s3711 = sshll.u32 %s3697, 4
          %s3712 = int_to_ptr.vmem [resolvable:$true] %s3711
          %3714 = dma.vmem_to_hbm [thread:$0]  %s3712, 16, %s3709, %s3695
        $region36: #{tpu_custom_call.1} parent=27 // pred_fallthru
          _
        // Predicated region
        $region37: #{tpu_custom_call.1} parent=27 // pred_check
          %p3715 = pneg %p129
        $region38: #{tpu_custom_call.1} parent=27 // pred_check_branch
          %3717 = sbr.rel (%p3715) target = $region40
        $region39: #{tpu_custom_call.1} parent=27 // pred_region
          %s3719 = ssub.s32 16, 16
          %3720 = vsyncadd %s3699, %s3719
          %s3721 = smul.addr %s25, 16
          %s3722 = scalar_lea.hbm %s3, %s3721
          %s3724 = sshll.u32 %s3701, 4
          %s3725 = int_to_ptr.vmem [resolvable:$true] %s3724
          %3727 = dma.vmem_to_hbm [thread:$0]  %s3725, 16, %s3722, %s3699
        $region40: #{tpu_custom_call.1} parent=27 // pred_fallthru
          _
      $region28: #{tpu_custom_call.1} parent=5 // pred_fallthru
        _
      %p3728 = scmp.le.s32.totalorder 2, %s16
      // Predicated region
      $region41: #{tpu_custom_call.1} parent=5 // pred_check
        %p3729 = pneg %p3728
      $region42: #{tpu_custom_call.1} parent=5 // pred_check_branch
        %3731 = sbr.rel (%p3729) target = $region44
      $region43: #{tpu_custom_call.1} parent=5 // pred_region
        %s3732 = ssub.s32 %s16, 2
        // Predicated region
        $region45: #{tpu_custom_call.1} parent=43 // pred_check
          %p3733 = pneg %p109
        $region46: #{tpu_custom_call.1} parent=43 // pred_check_branch
          %3735 = sbr.rel (%p3733) target = $region48
        $region47: #{tpu_custom_call.1} parent=43 // pred_region
          %s3736 = sand.u32 %s94, 1
          %s3737 = scalar_lea.sflag [#allocation3], %s3736
          %s3738 = sand.u32 %s94, 1
          %s3739 = scalar_lea.vmem [#allocation2], %s3738
          %3740 = dma.done %s3737, 16
        $region48: #{tpu_custom_call.1} parent=43 // pred_fallthru
          _
        // Predicated region
        $region49: #{tpu_custom_call.1} parent=43 // pred_check
          %p3741 = pneg %p135
        $region50: #{tpu_custom_call.1} parent=43 // pred_check_branch
          %3743 = sbr.rel (%p3741) target = $region52
        $region51: #{tpu_custom_call.1} parent=43 // pred_region
          %s3744 = sand.u32 %s120, 1
          %s3745 = scalar_lea.sflag [#allocation5], %s3744
          %s3746 = sand.u32 %s120, 1
          %s3747 = scalar_lea.vmem [#allocation4], %s3746
          %3748 = dma.done %s3745, 16
        $region52: #{tpu_custom_call.1} parent=43 // pred_fallthru
          _
      $region44: #{tpu_custom_call.1} parent=5 // pred_fallthru
        _
    $region6: #{tpu_custom_call.1} parent=1 // loop_footer
      %s20 = sadd.s32 1, %s16
    $region7: #{tpu_custom_call.1} parent=1 // loop_footer_branch
      %15 = sbr.rel target = $region3
    $region8: #{tpu_custom_call.1} parent=1 // loop_exit
      _
    %3749 = vsyncpa [#allocation3], 1
    %s3750 = scalar_lea.sflag [#allocation3], 1
    %3751 = vsyncpa %s3750, 1
    %3752 = vsyncpa [#allocation5], 1
    %s3753 = scalar_lea.sflag [#allocation5], 1
    %3754 = vsyncpa %s3753, 1

</llo_original>
